<compile_context>
chip_gen: v6e
topology: v6e:2x2x1
jax: 0.10.0
libtpu: 0.0.40
codegen_flags: <defaults>
</compile_context>

<pallas_src>
import functools

import numpy as np
import jax
import jax.numpy as jnp
from jax.experimental import pallas as pl
from jax.experimental.pallas import tpu as pltpu


def _round_up(x, m):
    return ((x + m - 1) // m) * m


# -----------------------------------------------------------------------------
# Kernel: surrogate-LAS decode for ALL beams in one shot (single grid step).
#   inputs : tok (Wb,T,1) i32  teacher-forced target tokens per beam
#            W1  (Vw,Hp) bf16  embedding table (vocab lane-padded, zero rows)
#            b1  (1,Hp)  f32   bias + beam-invariant encoder context (prefused)
#            W2  (Hp,Vp) bf16  output projection (lane-padded)
#            b2  (1,Vp)  f32   output bias; padded vocab columns = -1e30
#   outputs: hyp_idx (Wb,T)   i32  per-step argmax token
#            prob    (Wb,128) f32  per-beam product of max softmax probs up to
#                                  & incl. first EOS, broadcast across lanes
# -----------------------------------------------------------------------------
def _las_fused_kernel(tok_ref, w1_ref, b1_ref, w2_ref, b2_ref,
                      hyp_idx_ref, prob_ref, *, eos, valid_len):
    Wb, T, _ = tok_ref.shape
    Vw, Hp = w1_ref.shape
    Vp = w2_ref.shape[1]

    # --- in-kernel embedding: one-hot(token) @ W1 (replaces host jnp.take) ----
    tok = tok_ref[...]                                          # (Wb, T, 1) i32
    iota_v = jax.lax.broadcasted_iota(jnp.int32, (Wb, T, Vw), 2)
    onehot = jnp.where(iota_v == tok, 1.0, 0.0).astype(jnp.bfloat16)
    emb = jnp.dot(onehot.reshape(Wb * T, Vw), w1_ref[...],
                  preferred_element_type=jnp.float32)           # (Wb*T, Hp) f32

    # --- decoder surrogate (teacher forcing = 1); b1 already holds enc ctx ----
    h = jnp.maximum(emb + b1_ref[...], 0.0)                     # (Wb*T, Hp) f32
    logits = (jnp.dot(h.astype(jnp.bfloat16), w2_ref[...],
                      preferred_element_type=jnp.float32)
              + b2_ref[...])                                    # (Wb*T, Vp) f32
    # (vocab padding already masked: padded b2 columns are -1e30)

    lg = logits.reshape(Wb, T, Vp)                              # (Wb, T, Vp)
    m = jnp.max(lg, axis=-1, keepdims=True)                     # (Wb, T, 1)
    denom = jnp.sum(jnp.exp(lg - m), axis=-1)                   # (Wb, T)

    # hypothesis = argmax(logits); max softmax prob == 1/denom (not needed as
    # an output — only the masked product below is consumed on host).
    iota_l = jax.lax.broadcasted_iota(jnp.int32, (Wb, T, Vp), 2)
    idx = jnp.min(jnp.where(lg == m, iota_l, Vp), axis=-1)      # (Wb, T) i32
    hyp_idx_ref[...] = idx

    # probability = prod over steps up to & including the first EOS (within the
    # valid target length) of the per-step max prob, in exact-f32 log space.
    t_row = jax.lax.broadcasted_iota(jnp.int32, (Wb, T), 1)
    first_eos = jnp.min(jnp.where(idx == eos, t_row, T),
                        axis=-1, keepdims=True)                 # (Wb, 1)
    keep = (t_row <= first_eos) & (t_row < valid_len)           # (Wb, T)
    logp = jnp.sum(jnp.where(keep, -jnp.log(denom), 0.0),
                   axis=-1, keepdims=True)                      # (Wb, 1)
    prob_ref[...] = jnp.broadcast_to(jnp.exp(logp), prob_ref.shape)


def las_hypothesis_fused(tok, w1, b1_eff, w2, b2, *, eos, valid_len):
    Wb, T, _ = tok.shape
    Vw, Hp = w1.shape
    Vp = w2.shape[1]
    Lp = 128  # lane-dense probability row
    kernel = functools.partial(_las_fused_kernel, eos=eos, valid_len=valid_len)
    return pl.pallas_call(
        kernel,
        grid=(1,),
        in_specs=[
            pl.BlockSpec((Wb, T, 1), lambda i: (0, 0, 0)),   # tokens  i32
            pl.BlockSpec((Vw, Hp), lambda i: (0, 0)),        # W1      bf16
            pl.BlockSpec((1, Hp), lambda i: (0, 0)),         # b1_eff  f32
            pl.BlockSpec((Hp, Vp), lambda i: (0, 0)),        # W2      bf16
            pl.BlockSpec((1, Vp), lambda i: (0, 0)),         # b2      f32
        ],
        out_specs=(
            pl.BlockSpec((Wb, T), lambda i: (0, 0)),
            pl.BlockSpec((Wb, Lp), lambda i: (0, 0)),
        ),
        out_shape=(
            jax.ShapeDtypeStruct((Wb, T), jnp.int32),
            jax.ShapeDtypeStruct((Wb, Lp), jnp.float32),
        ),
    )(tok, w1, b1_eff, w2, b2)


@functools.partial(jax.jit, static_argnames=("eos", "valid_len"))
def _device_forward(feats, tok, We, b1, W1, W2, b2, *, eos, valid_len):
    # Beam-invariant encoder surrogate hoisted out of the kernel:
    # mean-pool over time, project, fold into the decoder bias (one tiny XLA
    # op fused into the same dispatch as the pallas_call).
    fm = jnp.mean(feats, axis=0, keepdims=True)                 # (1, F)
    b1_eff = b1 + jnp.dot(fm, We)                               # (1, Hp) f32
    return las_hypothesis_fused(tok, W1, b1_eff, W2, b2,
                                eos=eos, valid_len=valid_len)


# -----------------------------------------------------------------------------
# Host-side glue (beam-hypothesis strings, CER, MWER scalar combination)
# -----------------------------------------------------------------------------
def _edit_distance(a, b):
    dp = list(range(len(b) + 1))
    for i in range(1, len(a) + 1):
        prev = dp[0]
        dp[0] = i
        for j in range(1, len(b) + 1):
            cur = dp[j]
            dp[j] = min(dp[j] + 1, dp[j - 1] + 1,
                        prev + (0 if a[i - 1] == b[j - 1] else 1))
            prev = cur
    return dp[-1]


def compute_cer_tokens(preds, labels):
    # TODO(synk): the original compute_cer maps indices to hangul chars via a
    # label file and composes syllables (moasseugi); here CER is a token-level
    # edit distance with the same truncate-at-53 semantics.
    lab, prd = [], []
    for a in labels:
        if a == 53:
            break
        lab.append(int(a))
    for b in preds:
        if b == 53:
            break
        prd.append(int(b))
    return _edit_distance(prd, lab), len(lab)


def mwer_loss_host(p, cers):
    # ~10 scalar ops: cheaper as plain numpy than a second pallas_call.
    beam_width = len(p)
    s = float(np.sum(p))
    mean_cer = float(np.sum(cers)) / beam_width
    # second loop of the reference: `probability` is NOT reset -> carries the
    # last beam's value and keeps compounding across l (bug-compatible).
    running = float(p[beam_width - 1])
    loss = 0.0
    for l in range(beam_width):
        running *= float(p[l])
        loss += (running / s) * (float(cers[l]) - mean_cer)
    return loss


class MCERModelPallas:
    def __init__(self, params, *, eos, vocab, hidden, max_len, pad_len, beam_key):
        assert pad_len % 128 == 0, "pad_len (decoder T) must be lane-aligned"
        self.eos = eos
        self.vocab = vocab
        self.max_len = max_len          # 55, as in torch.zeros(1, 55)
        self.pad_len = pad_len          # lane-aligned decode length
        self.beam_key = beam_key
        # lane-pad hidden / vocab to 128 for unmasked MXU tiles & dense stores
        self.hpad = _round_up(hidden, 128)
        self.vpad = _round_up(vocab, 128)
        F = params["We"].shape[0]
        H = hidden
        z = jnp.zeros
        # We stays f32 (only used by the tiny XLA projection outside the kernel)
        self.We = z((F, self.hpad), jnp.float32).at[:, :H].set(params["We"])
        self.W1 = z((self.vpad, self.hpad), jnp.float32).at[:vocab, :H].set(
            params["W1"]).astype(jnp.bfloat16)
        self.b1 = z((1, self.hpad), jnp.float32).at[:, :H].set(params["b1"])
        self.W2 = z((self.hpad, self.vpad), jnp.float32).at[:H, :vocab].set(
            params["W2"]).astype(jnp.bfloat16)
        # vocab-padding mask pre-baked into b2 (finite f32 sentinel; never cast
        # to bf16 — -1e30 would overflow to -inf and could NaN the exp path)
        self.b2 = jnp.full((1, self.vpad), -1e30, jnp.float32).at[:, :vocab].set(
            params["b2"])

    def _beam_search(self, inputs, input_lengths, beam_width):
        # TODO(synk): surrogate for rnn_t.MCER_beam_search (external submodule);
        # generates deterministic synthetic hypotheses beam_result[j].k
        # (k[0] is the blank/start token, matching `beam_result[j].k[1:]`).
        beams = []
        key = self.beam_key
        for j in range(beam_width):
            key, sub = jax.random.split(key)
            length = 4 + j
            toks = np.asarray(jax.random.randint(sub, (length,), 1, self.eos))
            beams.append([0] + [int(t) for t in toks])
        return beams

    def __call__(self, inputs, input_lengths, targets, teacher_forcing_ratio,
                 beam_width, return_decode_dict):
        del teacher_forcing_ratio, return_decode_dict  # (always 1 / False here)

        # 1) beam hypotheses (surrogate rnn_t beam search)
        beam_k = self._beam_search(inputs, input_lengths, beam_width)

        # 2) build inference_target rows (zeros(1,55) semantics), pad to T=128;
        #    shaped (Wb, T, 1) so the kernel can broadcast-compare against a
        #    vocab-lane iota with no in-kernel relayout.
        inf = np.zeros((beam_width, self.pad_len, 1), dtype=np.int32)
        for j, k in enumerate(beam_k):
            seq = list(k[1:]) + [self.eos]
            inf[j, :len(seq), 0] = seq
        tok = jnp.asarray(inf)

        # 3) single jitted device call: encoder projection fold + fused Pallas
        #    kernel (all beams in one grid step, embedding rebuilt in-kernel)
        feats = jnp.asarray(inputs)[0]                          # (time, feat)
        hyp_idx, beam_prob = _device_forward(
            feats, tok, self.We, self.b1, self.W1, self.W2, self.b2,
            eos=self.eos, valid_len=self.max_len)

        # 4) one host<->device fetch for both outputs
        hyp_idx_np, beam_prob_np = jax.device_get((hyp_idx, beam_prob))
        hyp_idx_np = hyp_idx_np[:, :self.max_len]
        beam_prob_np = beam_prob_np[:, 0]

        # 5) host: greedy result per beam (truncate at eos) -> CER vs targets
        labels = np.asarray(targets).squeeze().tolist()
        cers = []
        for j in range(beam_width):
            result = []
            for q in hyp_idx_np[j]:
                result.append(int(q))
                if int(q) == self.eos:
                    break
            cer, _cer_len = compute_cer_tokens(result, labels)
            cers.append(float(cer))

        # 6) MWER loss combination (host scalar math, same arithmetic as before)
        loss = mwer_loss_host(beam_prob_np, cers)
        return jnp.asarray(loss, dtype=jnp.float32)


# -----------------------------------------------------------------------------
if __name__ == "__main__":
    VOCAB, EOS, HID = 56, 53, 32
    MAX_LEN, PAD_LEN = 55, 128
    SEQ, FEAT = 8, 32
    BEAM = 3

    key = jax.random.PRNGKey(0)
    (k_inp, k_we, k_w1, k_b1, k_w2, k_b2, k_tgt, k_beam) = jax.random.split(key, 8)

    inputs = jax.random.normal(k_inp, (1, SEQ, FEAT), dtype=jnp.float32)
    input_lengths = jnp.array([SEQ], dtype=jnp.int32)
    targets = jnp.concatenate(
        [jax.random.randint(k_tgt, (1, 10), 1, EOS),
         jnp.full((1, 1), EOS, dtype=jnp.int32)], axis=1)

    # deterministic surrogate-LAS parameters (bias toward EOS so hypotheses
    # terminate, as a trained decoder would)
    b2 = 0.01 * jax.random.normal(k_b2, (1, VOCAB), dtype=jnp.float32)
    b2 = b2.at[0, EOS].add(4.0)
    params = dict(
        We=0.1 * jax.random.normal(k_we, (FEAT, HID), dtype=jnp.float32),
        W1=1.0 * jax.random.normal(k_w1, (VOCAB, HID), dtype=jnp.float32),
        b1=0.01 * jax.random.normal(k_b1, (1, HID), dtype=jnp.float32),
        W2=1.0 * jax.random.normal(k_w2, (HID, VOCAB), dtype=jnp.float32),
        b2=b2,
    )

    model = MCERModelPallas(params, eos=EOS, vocab=VOCAB, hidden=HID,
                            max_len=MAX_LEN, pad_len=PAD_LEN, beam_key=k_beam)
    loss_MWER = model(inputs, input_lengths, targets,
                      teacher_forcing_ratio=1.0, beam_width=BEAM,
                      return_decode_dict=False)
    jax.block_until_ready(loss_MWER)
    print("KERNEL_OK")
</pallas_src>

<mosaic_0001>
module attributes {stable_mosaic.version = 11 : i64} {
  func.func @_las_fused_kernel(%arg0: i32, %arg1: memref<3x128x1xi32, #tpu.memory_space<vmem>>, %arg2: memref<128x128xbf16, #tpu.memory_space<vmem>>, %arg3: memref<1x128xf32, #tpu.memory_space<vmem>>, %arg4: memref<128x128xbf16, #tpu.memory_space<vmem>>, %arg5: memref<1x128xf32, #tpu.memory_space<vmem>>, %arg6: memref<3x128xi32, #tpu.memory_space<vmem>>, %arg7: memref<3x128xf32, #tpu.memory_space<vmem>>) attributes {dimension_semantics = [#tpu.dimension_semantics<arbitrary>], iteration_bounds = array<i64: 1>, scalar_prefetch = 0 : i64, scratch_operands = 0 : i64, tpu.core_type = #tpu.core_type<tc>, window_params = [{pipeline_mode = #tpu.pipeline_mode<synchronous>, transform_indices = @transform_0, window_bounds = array<i64: 3, 128, 1>}, {pipeline_mode = #tpu.pipeline_mode<synchronous>, transform_indices = @transform_1, window_bounds = array<i64: 128, 128>}, {pipeline_mode = #tpu.pipeline_mode<synchronous>, transform_indices = @transform_2, window_bounds = array<i64: 1, 128>}, {pipeline_mode = #tpu.pipeline_mode<synchronous>, transform_indices = @transform_3, window_bounds = array<i64: 128, 128>}, {pipeline_mode = #tpu.pipeline_mode<synchronous>, transform_indices = @transform_4, window_bounds = array<i64: 1, 128>}, {pipeline_mode = #tpu.pipeline_mode<synchronous>, transform_indices = @transform_5, window_bounds = array<i64: 3, 128>}, {pipeline_mode = #tpu.pipeline_mode<synchronous>, transform_indices = @transform_6, window_bounds = array<i64: 3, 128>}]} {
    %c0 = arith.constant 0 : index
    %c0_0 = arith.constant 0 : index
    %c0_1 = arith.constant 0 : index
    %0 = vector.load %arg1[%c0, %c0_0, %c0_1] : memref<3x128x1xi32, #tpu.memory_space<vmem>>, vector<3x128x1xi32>
    %1 = tpu.iota {dimensions = array<i32: 2>} : vector<3x128x128xi32>
    %2 = vector.broadcast %0 : vector<3x128x1xi32> to vector<3x128x128xi32>
    %3 = arith.cmpi eq, %1, %2 : vector<3x128x128xi32>
    %cst = arith.constant 1.000000e+00 : f32
    %cst_2 = arith.constant 0.000000e+00 : f32
    %4 = vector.broadcast %cst : f32 to vector<3x128x128xf32>
    %5 = vector.broadcast %cst_2 : f32 to vector<3x128x128xf32>
    %6 = arith.select %3, %4, %5 : vector<3x128x128xi1>, vector<3x128x128xf32>
    %7 = arith.truncf %6 : vector<3x128x128xf32> to vector<3x128x128xbf16>
    %8 = vector.shape_cast %7 : vector<3x128x128xbf16> to vector<384x128xbf16>
    %c0_3 = arith.constant 0 : index
    %c0_4 = arith.constant 0 : index
    %9 = vector.load %arg2[%c0_3, %c0_4] : memref<128x128xbf16, #tpu.memory_space<vmem>>, vector<128x128xbf16>
    %cst_5 = arith.constant dense<0.000000e+00> : vector<384x128xf32>
    %10 = tpu.matmul %8, %9, %cst_5 {dimension_numbers = #tpu.dot_dimension_numbers<[1], [0], [0], [1], [0, 0, 1, 1], [], []>} : vector<384x128xbf16>, vector<128x128xbf16>, vector<384x128xf32> -> vector<384x128xf32>
    %c0_6 = arith.constant 0 : index
    %c0_7 = arith.constant 0 : index
    %11 = vector.load %arg3[%c0_6, %c0_7] : memref<1x128xf32, #tpu.memory_space<vmem>>, vector<1x128xf32>
    %12 = vector.broadcast %11 : vector<1x128xf32> to vector<384x128xf32>
    %13 = arith.addf %10, %12 : vector<384x128xf32>
    %cst_8 = arith.constant 0.000000e+00 : f32
    %14 = vector.broadcast %cst_8 : f32 to vector<384x128xf32>
    %15 = arith.maximumf %13, %14 : vector<384x128xf32>
    %16 = arith.truncf %15 : vector<384x128xf32> to vector<384x128xbf16>
    %c0_9 = arith.constant 0 : index
    %c0_10 = arith.constant 0 : index
    %17 = vector.load %arg4[%c0_9, %c0_10] : memref<128x128xbf16, #tpu.memory_space<vmem>>, vector<128x128xbf16>
    %cst_11 = arith.constant dense<0.000000e+00> : vector<384x128xf32>
    %18 = tpu.matmul %16, %17, %cst_11 {dimension_numbers = #tpu.dot_dimension_numbers<[1], [0], [0], [1], [0, 0, 1, 1], [], []>} : vector<384x128xbf16>, vector<128x128xbf16>, vector<384x128xf32> -> vector<384x128xf32>
    %c0_12 = arith.constant 0 : index
    %c0_13 = arith.constant 0 : index
    %19 = vector.load %arg5[%c0_12, %c0_13] : memref<1x128xf32, #tpu.memory_space<vmem>>, vector<1x128xf32>
    %20 = vector.broadcast %19 : vector<1x128xf32> to vector<384x128xf32>
    %21 = arith.addf %18, %20 : vector<384x128xf32>
    %22 = vector.shape_cast %21 : vector<384x128xf32> to vector<3x128x128xf32>
    %cst_14 = arith.constant dense<0xFF800000> : vector<3x128xf32>
    %23 = vector.multi_reduction <maximumf>, %22, %cst_14 [2] : vector<3x128x128xf32> to vector<3x128xf32>
    %24 = vector.shape_cast %23 : vector<3x128xf32> to vector<3x128x1xf32>
    %25 = vector.broadcast %24 : vector<3x128x1xf32> to vector<3x128x128xf32>
    %26 = arith.subf %22, %25 : vector<3x128x128xf32>
    %27 = math.exp %26 : vector<3x128x128xf32>
    %cst_15 = arith.constant dense<0.000000e+00> : vector<3x128xf32>
    %28 = vector.multi_reduction <add>, %27, %cst_15 [2] : vector<3x128x128xf32> to vector<3x128xf32>
    %29 = tpu.iota {dimensions = array<i32: 2>} : vector<3x128x128xi32>
    %30 = vector.broadcast %24 : vector<3x128x1xf32> to vector<3x128x128xf32>
    %31 = arith.cmpf oeq, %22, %30 : vector<3x128x128xf32>
    %c128_i32 = arith.constant 128 : i32
    %32 = vector.broadcast %c128_i32 : i32 to vector<3x128x128xi32>
    %33 = arith.select %31, %29, %32 : vector<3x128x128xi1>, vector<3x128x128xi32>
    %cst_16 = arith.constant dense<2147483647> : vector<3x128xi32>
    %34 = vector.multi_reduction <minsi>, %33, %cst_16 [2] : vector<3x128x128xi32> to vector<3x128xi32>
    %c0_17 = arith.constant 0 : index
    %c0_18 = arith.constant 0 : index
    %35 = vector.load %arg6[%c0_17, %c0_18] : memref<3x128xi32, #tpu.memory_space<vmem>>, vector<3x128xi32>
    tpu.vector_store %arg6[%c0_17, %c0_18], %34 {strides = array<i32>} : memref<3x128xi32, #tpu.memory_space<vmem>>, vector<3x128xi32>,
    %36 = tpu.iota {dimensions = array<i32: 1>} : vector<3x128xi32>
    %c53_i32 = arith.constant 53 : i32
    %37 = vector.broadcast %c53_i32 : i32 to vector<3x128xi32>
    %38 = arith.cmpi eq, %34, %37 : vector<3x128xi32>
    %c128_i32_19 = arith.constant 128 : i32
    %39 = vector.broadcast %c128_i32_19 : i32 to vector<3x128xi32>
    %40 = arith.select %38, %36, %39 : vector<3x128xi1>, vector<3x128xi32>
    %cst_20 = arith.constant dense<2147483647> : vector<3xi32>
    %41 = vector.multi_reduction <minsi>, %40, %cst_20 [1] : vector<3x128xi32> to vector<3xi32>
    %42 = vector.shape_cast %41 : vector<3xi32> to vector<3x1xi32>
    %43 = vector.broadcast %42 : vector<3x1xi32> to vector<3x128xi32>
    %44 = arith.cmpi sle, %36, %43 : vector<3x128xi32>
    %c55_i32 = arith.constant 55 : i32
    %45 = vector.broadcast %c55_i32 : i32 to vector<3x128xi32>
    %46 = arith.cmpi slt, %36, %45 : vector<3x128xi32>
    %47 = arith.andi %44, %46 : vector<3x128xi1>
    %48 = math.log %28 : vector<3x128xf32>
    %cst_21 = arith.constant 0.000000e+00 : f32
    %49 = vector.broadcast %cst_21 : f32 to vector<3x128xf32>
    %50 = arith.subf %49, %48 : vector<3x128xf32>
    %cst_22 = arith.constant 0.000000e+00 : f32
    %51 = vector.broadcast %cst_22 : f32 to vector<3x128xf32>
    %52 = arith.select %47, %50, %51 : vector<3x128xi1>, vector<3x128xf32>
    %cst_23 = arith.constant dense<0.000000e+00> : vector<3xf32>
    %53 = vector.multi_reduction <add>, %52, %cst_23 [1] : vector<3x128xf32> to vector<3xf32>
    %54 = vector.shape_cast %53 : vector<3xf32> to vector<3x1xf32>
    %55 = math.exp %54 : vector<3x1xf32>
    %56 = vector.shape_cast %55 : vector<3x1xf32> to vector<3x1xf32>
    %57 = vector.broadcast %56 : vector<3x1xf32> to vector<3x128xf32>
    %c0_24 = arith.constant 0 : index
    %c0_25 = arith.constant 0 : index
    %58 = vector.load %arg7[%c0_24, %c0_25] : memref<3x128xf32, #tpu.memory_space<vmem>>, vector<3x128xf32>
    tpu.vector_store %arg7[%c0_24, %c0_25], %57 {strides = array<i32>} : memref<3x128xf32, #tpu.memory_space<vmem>>, vector<3x128xf32>,
    return
  }
  func.func @transform_0(%arg0: i32) -> (i32, i32, i32) {
    %c0_i32 = arith.constant 0 : i32
    %c0_i32_0 = arith.constant 0 : i32
    %c0_i32_1 = arith.constant 0 : i32
    %c0_i32_2 = arith.constant 0 : i32
    return %c0_i32, %c0_i32_0, %c0_i32_1 : i32, i32, i32
  }
  func.func @transform_1(%arg0: i32) -> (i32, i32) {
    %c0_i32 = arith.constant 0 : i32
    %c0_i32_0 = arith.constant 0 : i32
    %c0_i32_1 = arith.constant 0 : i32
    return %c0_i32, %c0_i32_0 : i32, i32
  }
  func.func @transform_2(%arg0: i32) -> (i32, i32) {
    %c0_i32 = arith.constant 0 : i32
    %c0_i32_0 = arith.constant 0 : i32
    %c0_i32_1 = arith.constant 0 : i32
    return %c0_i32, %c0_i32_0 : i32, i32
  }
  func.func @transform_3(%arg0: i32) -> (i32, i32) {
    %c0_i32 = arith.constant 0 : i32
    %c0_i32_0 = arith.constant 0 : i32
    %c0_i32_1 = arith.constant 0 : i32
    return %c0_i32, %c0_i32_0 : i32, i32
  }
  func.func @transform_4(%arg0: i32) -> (i32, i32) {
    %c0_i32 = arith.constant 0 : i32
    %c0_i32_0 = arith.constant 0 : i32
    %c0_i32_1 = arith.constant 0 : i32
    return %c0_i32, %c0_i32_0 : i32, i32
  }
  func.func @transform_5(%arg0: i32) -> (i32, i32) {
    %c0_i32 = arith.constant 0 : i32
    %c0_i32_0 = arith.constant 0 : i32
    %c0_i32_1 = arith.constant 0 : i32
    return %c0_i32, %c0_i32_0 : i32, i32
  }
  func.func @transform_6(%arg0: i32) -> (i32, i32) {
    %c0_i32 = arith.constant 0 : i32
    %c0_i32_0 = arith.constant 0 : i32
    %c0_i32_1 = arith.constant 0 : i32
    return %c0_i32, %c0_i32_0 : i32, i32
  }
}

</mosaic_0001>

<llo_original>
// kernel: _device_forward.1
$region0: #{_device_forward.1}
  #allocation0 [shape = 'u32[]', space=smem, size = 0x4, offset = 0x4, fixed_abs, tag = 'smem constant byte address 0x4 - core index']
  #allocation1 [shape = 'u32[144,128]{1,0:T(1,128)}', space=vmem, size = 0x12000, scoped, tag = 'internal scratch']
  %s0 = inlined_call_operand.vmem [shape: s32[3,128,1], index: 0, kind: input, shape index: {}]
  %s1 = inlined_call_operand.vmem [shape: bf16[128,128], index: 1, kind: input, shape index: {}]
  %s2 = inlined_call_operand.vmem [shape: f32[1,128], index: 2, kind: input, shape index: {}]
  %s3 = inlined_call_operand.vmem [shape: bf16[128,128], index: 3, kind: input, shape index: {}]
  %s4 = inlined_call_operand.vmem [shape: f32[1,128], index: 4, kind: input, shape index: {}]
  %s5 = inlined_call_operand.hbm [shape: s32[3,128], index: 5, kind: output, shape index: {0}]
  %s6 = inlined_call_operand.hbm [shape: f32[3,128], index: 6, kind: output, shape index: {1}]
  %7 = xla_tuple %s5, %s6
  %s8 = sld [smem:[#allocation0]]
  $region38: #{_device_forward.1} parent=0
    _
  %s10 = ssub.s32 1, %s8
  %s11 = scalar_select 0, %s10, %s8
  $region1: #{_device_forward.1} parent=0
    #allocation2 [shape = 'u8[2048]{0}', space=vmem, size = 0x800, scoped, tag = 'output window, operand 0, single buffered']
    #allocation3 [shape = 's32[1]{0}', space=sflag, size = 0x4, scoped, tag = 'scoped memory for _device_forward.1']
    #allocation4 [shape = 'u8[2048]{0}', space=vmem, size = 0x800, scoped, tag = 'output window, operand 1, single buffered']
    #allocation5 [shape = 's32[1]{0}', space=sflag, size = 0x4, scoped, tag = 'scoped memory for _device_forward.1']
    %12 = vsyncpa [#allocation3], 0
    %13 = vsyncpa [#allocation5], 0
    // Predicated region
    $region2: #{_device_forward.1} parent=1 // pred_check
      _
    $region3: #{_device_forward.1} parent=1 // pred_check_branch
      %15 = sbr.rel (0) target = $region5
    $region4: #{_device_forward.1} parent=1 // pred_region
      _
    $region5: #{_device_forward.1} parent=1 // pred_fallthru
      _
    // Predicated region
    $region6: #{_device_forward.1} parent=1 // pred_check
      _
    $region7: #{_device_forward.1} parent=1 // pred_check_branch
      %17 = sbr.rel (0) target = $region9
    $region8: #{_device_forward.1} parent=1 // pred_region
      _
    $region9: #{_device_forward.1} parent=1 // pred_fallthru
      _
    // Predicated region
    $region10: #{_device_forward.1} parent=1 // pred_check
      _
    $region11: #{_device_forward.1} parent=1 // pred_check_branch
      %19 = sbr.rel (0) target = $region13
    $region12: #{_device_forward.1} parent=1 // pred_region
      _
    $region13: #{_device_forward.1} parent=1 // pred_fallthru
      _
    // Predicated region
    $region14: #{_device_forward.1} parent=1 // pred_check
      _
    $region15: #{_device_forward.1} parent=1 // pred_check_branch
      %21 = sbr.rel (0) target = $region17
    $region16: #{_device_forward.1} parent=1 // pred_region
      _
    $region17: #{_device_forward.1} parent=1 // pred_fallthru
      _
    // Predicated region
    $region18: #{_device_forward.1} parent=1 // pred_check
      _
    $region19: #{_device_forward.1} parent=1 // pred_check_branch
      %23 = sbr.rel (0) target = $region21
    $region20: #{_device_forward.1} parent=1 // pred_region
      _
    $region21: #{_device_forward.1} parent=1 // pred_fallthru
      _
    %v25 = vld [vmem:[%s0] sm:$0xff]
    %v26 = vld [vmem:[%s0 + $0x8] sm:$0xff]
    %v27 = vld [vmem:[%s0 + $0x10] sm:$0xff]
    %v28 = vld [vmem:[%s0 + $0x18] sm:$0xff]
    %v29 = vld [vmem:[%s0 + $0x20] sm:$0xff]
    %v30 = vld [vmem:[%s0 + $0x28] sm:$0xff]
    %v31 = vld [vmem:[%s0 + $0x30] sm:$0xff]
    %v32 = vld [vmem:[%s0 + $0x38] sm:$0xff]
    %v33 = vld [vmem:[%s0 + $0x40] sm:$0xff]
    %v34 = vld [vmem:[%s0 + $0x48] sm:$0xff]
    %v35 = vld [vmem:[%s0 + $0x50] sm:$0xff]
    %v36 = vld [vmem:[%s0 + $0x58] sm:$0xff]
    %v37 = vld [vmem:[%s0 + $0x60] sm:$0xff]
    %v38 = vld [vmem:[%s0 + $0x68] sm:$0xff]
    %v39 = vld [vmem:[%s0 + $0x70] sm:$0xff]
    %v40 = vld [vmem:[%s0 + $0x78] sm:$0xff]
    %v41 = vld [vmem:[%s0 + $0x80] sm:$0xff]
    %v42 = vld [vmem:[%s0 + $0x88] sm:$0xff]
    %v43 = vld [vmem:[%s0 + $0x90] sm:$0xff]
    %v44 = vld [vmem:[%s0 + $0x98] sm:$0xff]
    %v45 = vld [vmem:[%s0 + $0xa0] sm:$0xff]
    %v46 = vld [vmem:[%s0 + $0xa8] sm:$0xff]
    %v47 = vld [vmem:[%s0 + $0xb0] sm:$0xff]
    %v48 = vld [vmem:[%s0 + $0xb8] sm:$0xff]
    %v49 = vld [vmem:[%s0 + $0xc0] sm:$0xff]
    %v50 = vld [vmem:[%s0 + $0xc8] sm:$0xff]
    %v51 = vld [vmem:[%s0 + $0xd0] sm:$0xff]
    %v52 = vld [vmem:[%s0 + $0xd8] sm:$0xff]
    %v53 = vld [vmem:[%s0 + $0xe0] sm:$0xff]
    %v54 = vld [vmem:[%s0 + $0xe8] sm:$0xff]
    %v55 = vld [vmem:[%s0 + $0xf0] sm:$0xff]
    %v56 = vld [vmem:[%s0 + $0xf8] sm:$0xff]
    %v57 = vld [vmem:[%s0 + $0x100] sm:$0xff]
    %v58 = vld [vmem:[%s0 + $0x108] sm:$0xff]
    %v59 = vld [vmem:[%s0 + $0x110] sm:$0xff]
    %v60 = vld [vmem:[%s0 + $0x118] sm:$0xff]
    %v61 = vld [vmem:[%s0 + $0x120] sm:$0xff]
    %v62 = vld [vmem:[%s0 + $0x128] sm:$0xff]
    %v63 = vld [vmem:[%s0 + $0x130] sm:$0xff]
    %v64 = vld [vmem:[%s0 + $0x138] sm:$0xff]
    %v65 = vld [vmem:[%s0 + $0x140] sm:$0xff]
    %v66 = vld [vmem:[%s0 + $0x148] sm:$0xff]
    %v67 = vld [vmem:[%s0 + $0x150] sm:$0xff]
    %v68 = vld [vmem:[%s0 + $0x158] sm:$0xff]
    %v69 = vld [vmem:[%s0 + $0x160] sm:$0xff]
    %v70 = vld [vmem:[%s0 + $0x168] sm:$0xff]
    %v71 = vld [vmem:[%s0 + $0x170] sm:$0xff]
    %v72 = vld [vmem:[%s0 + $0x178] sm:$0xff]
    %v73 = vlaneseq
    %v74 = vand.u32 %v73, 127
    %75 = vset.pattern.permute.xlu0 0
    %76 = vperm.xlu0 %75, %v25
    %v77 = vpop.permute.xlu0 %76
    %78 = vset.pattern.permute.xlu0 0
    %79 = vperm.xlu0 %78, %v26
    %v80 = vpop.permute.xlu0 %79
    %81 = vset.pattern.permute.xlu0 0
    %82 = vperm.xlu0 %81, %v27
    %v83 = vpop.permute.xlu0 %82
    %84 = vset.pattern.permute.xlu0 0
    %85 = vperm.xlu0 %84, %v28
    %v86 = vpop.permute.xlu0 %85
    %87 = vset.pattern.permute.xlu0 0
    %88 = vperm.xlu0 %87, %v29
    %v89 = vpop.permute.xlu0 %88
    %90 = vset.pattern.permute.xlu0 0
    %91 = vperm.xlu0 %90, %v30
    %v92 = vpop.permute.xlu0 %91
    %93 = vset.pattern.permute.xlu0 0
    %94 = vperm.xlu0 %93, %v31
    %v95 = vpop.permute.xlu0 %94
    %96 = vset.pattern.permute.xlu0 0
    %97 = vperm.xlu0 %96, %v32
    %v98 = vpop.permute.xlu0 %97
    %99 = vset.pattern.permute.xlu0 0
    %100 = vperm.xlu0 %99, %v33
    %v101 = vpop.permute.xlu0 %100
    %102 = vset.pattern.permute.xlu0 0
    %103 = vperm.xlu0 %102, %v34
    %v104 = vpop.permute.xlu0 %103
    %105 = vset.pattern.permute.xlu0 0
    %106 = vperm.xlu0 %105, %v35
    %v107 = vpop.permute.xlu0 %106
    %108 = vset.pattern.permute.xlu0 0
    %109 = vperm.xlu0 %108, %v36
    %v110 = vpop.permute.xlu0 %109
    %111 = vset.pattern.permute.xlu0 0
    %112 = vperm.xlu0 %111, %v37
    %v113 = vpop.permute.xlu0 %112
    %114 = vset.pattern.permute.xlu0 0
    %115 = vperm.xlu0 %114, %v38
    %v116 = vpop.permute.xlu0 %115
    %117 = vset.pattern.permute.xlu0 0
    %118 = vperm.xlu0 %117, %v39
    %v119 = vpop.permute.xlu0 %118
    %120 = vset.pattern.permute.xlu0 0
    %121 = vperm.xlu0 %120, %v40
    %v122 = vpop.permute.xlu0 %121
    %123 = vset.pattern.permute.xlu0 0
    %124 = vperm.xlu0 %123, %v41
    %v125 = vpop.permute.xlu0 %124
    %126 = vset.pattern.permute.xlu0 0
    %127 = vperm.xlu0 %126, %v42
    %v128 = vpop.permute.xlu0 %127
    %129 = vset.pattern.permute.xlu0 0
    %130 = vperm.xlu0 %129, %v43
    %v131 = vpop.permute.xlu0 %130
    %132 = vset.pattern.permute.xlu0 0
    %133 = vperm.xlu0 %132, %v44
    %v134 = vpop.permute.xlu0 %133
    %135 = vset.pattern.permute.xlu0 0
    %136 = vperm.xlu0 %135, %v45
    %v137 = vpop.permute.xlu0 %136
    %138 = vset.pattern.permute.xlu0 0
    %139 = vperm.xlu0 %138, %v46
    %v140 = vpop.permute.xlu0 %139
    %141 = vset.pattern.permute.xlu0 0
    %142 = vperm.xlu0 %141, %v47
    %v143 = vpop.permute.xlu0 %142
    %144 = vset.pattern.permute.xlu0 0
    %145 = vperm.xlu0 %144, %v48
    %v146 = vpop.permute.xlu0 %145
    %147 = vset.pattern.permute.xlu0 0
    %148 = vperm.xlu0 %147, %v49
    %v149 = vpop.permute.xlu0 %148
    %150 = vset.pattern.permute.xlu0 0
    %151 = vperm.xlu0 %150, %v50
    %v152 = vpop.permute.xlu0 %151
    %153 = vset.pattern.permute.xlu0 0
    %154 = vperm.xlu0 %153, %v51
    %v155 = vpop.permute.xlu0 %154
    %156 = vset.pattern.permute.xlu0 0
    %157 = vperm.xlu0 %156, %v52
    %v158 = vpop.permute.xlu0 %157
    %159 = vset.pattern.permute.xlu0 0
    %160 = vperm.xlu0 %159, %v53
    %v161 = vpop.permute.xlu0 %160
    %162 = vset.pattern.permute.xlu0 0
    %163 = vperm.xlu0 %162, %v54
    %v164 = vpop.permute.xlu0 %163
    %165 = vset.pattern.permute.xlu0 0
    %166 = vperm.xlu0 %165, %v55
    %v167 = vpop.permute.xlu0 %166
    %168 = vset.pattern.permute.xlu0 0
    %169 = vperm.xlu0 %168, %v56
    %v170 = vpop.permute.xlu0 %169
    %171 = vset.pattern.permute.xlu0 0
    %172 = vperm.xlu0 %171, %v57
    %v173 = vpop.permute.xlu0 %172
    %174 = vset.pattern.permute.xlu0 0
    %175 = vperm.xlu0 %174, %v58
    %v176 = vpop.permute.xlu0 %175
    %177 = vset.pattern.permute.xlu0 0
    %178 = vperm.xlu0 %177, %v59
    %v179 = vpop.permute.xlu0 %178
    %180 = vset.pattern.permute.xlu0 0
    %181 = vperm.xlu0 %180, %v60
    %v182 = vpop.permute.xlu0 %181
    %183 = vset.pattern.permute.xlu0 0
    %184 = vperm.xlu0 %183, %v61
    %v185 = vpop.permute.xlu0 %184
    %186 = vset.pattern.permute.xlu0 0
    %187 = vperm.xlu0 %186, %v62
    %v188 = vpop.permute.xlu0 %187
    %189 = vset.pattern.permute.xlu0 0
    %190 = vperm.xlu0 %189, %v63
    %v191 = vpop.permute.xlu0 %190
    %192 = vset.pattern.permute.xlu0 0
    %193 = vperm.xlu0 %192, %v64
    %v194 = vpop.permute.xlu0 %193
    %195 = vset.pattern.permute.xlu0 0
    %196 = vperm.xlu0 %195, %v65
    %v197 = vpop.permute.xlu0 %196
    %198 = vset.pattern.permute.xlu0 0
    %199 = vperm.xlu0 %198, %v66
    %v200 = vpop.permute.xlu0 %199
    %201 = vset.pattern.permute.xlu0 0
    %202 = vperm.xlu0 %201, %v67
    %v203 = vpop.permute.xlu0 %202
    %204 = vset.pattern.permute.xlu0 0
    %205 = vperm.xlu0 %204, %v68
    %v206 = vpop.permute.xlu0 %205
    %207 = vset.pattern.permute.xlu0 0
    %208 = vperm.xlu0 %207, %v69
    %v209 = vpop.permute.xlu0 %208
    %210 = vset.pattern.permute.xlu0 0
    %211 = vperm.xlu0 %210, %v70
    %v212 = vpop.permute.xlu0 %211
    %213 = vset.pattern.permute.xlu0 0
    %214 = vperm.xlu0 %213, %v71
    %v215 = vpop.permute.xlu0 %214
    %216 = vset.pattern.permute.xlu0 0
    %217 = vperm.xlu0 %216, %v72
    %v218 = vpop.permute.xlu0 %217
    %vm219 = vcmp.eq.s32.totalorder %v74, %v77
    %vm220 = vcmp.eq.s32.totalorder %v74, %v80
    %vm221 = vcmp.eq.s32.totalorder %v74, %v83
    %vm222 = vcmp.eq.s32.totalorder %v74, %v86
    %vm223 = vcmp.eq.s32.totalorder %v74, %v89
    %vm224 = vcmp.eq.s32.totalorder %v74, %v92
    %vm225 = vcmp.eq.s32.totalorder %v74, %v95
    %vm226 = vcmp.eq.s32.totalorder %v74, %v98
    %vm227 = vcmp.eq.s32.totalorder %v74, %v101
    %vm228 = vcmp.eq.s32.totalorder %v74, %v104
    %vm229 = vcmp.eq.s32.totalorder %v74, %v107
    %vm230 = vcmp.eq.s32.totalorder %v74, %v110
    %vm231 = vcmp.eq.s32.totalorder %v74, %v113
    %vm232 = vcmp.eq.s32.totalorder %v74, %v116
    %vm233 = vcmp.eq.s32.totalorder %v74, %v119
    %vm234 = vcmp.eq.s32.totalorder %v74, %v122
    %vm235 = vcmp.eq.s32.totalorder %v74, %v125
    %vm236 = vcmp.eq.s32.totalorder %v74, %v128
    %vm237 = vcmp.eq.s32.totalorder %v74, %v131
    %vm238 = vcmp.eq.s32.totalorder %v74, %v134
    %vm239 = vcmp.eq.s32.totalorder %v74, %v137
    %vm240 = vcmp.eq.s32.totalorder %v74, %v140
    %vm241 = vcmp.eq.s32.totalorder %v74, %v143
    %vm242 = vcmp.eq.s32.totalorder %v74, %v146
    %vm243 = vcmp.eq.s32.totalorder %v74, %v149
    %vm244 = vcmp.eq.s32.totalorder %v74, %v152
    %vm245 = vcmp.eq.s32.totalorder %v74, %v155
    %vm246 = vcmp.eq.s32.totalorder %v74, %v158
    %vm247 = vcmp.eq.s32.totalorder %v74, %v161
    %vm248 = vcmp.eq.s32.totalorder %v74, %v164
    %vm249 = vcmp.eq.s32.totalorder %v74, %v167
    %vm250 = vcmp.eq.s32.totalorder %v74, %v170
    %vm251 = vcmp.eq.s32.totalorder %v74, %v173
    %vm252 = vcmp.eq.s32.totalorder %v74, %v176
    %vm253 = vcmp.eq.s32.totalorder %v74, %v179
    %vm254 = vcmp.eq.s32.totalorder %v74, %v182
    %vm255 = vcmp.eq.s32.totalorder %v74, %v185
    %vm256 = vcmp.eq.s32.totalorder %v74, %v188
    %vm257 = vcmp.eq.s32.totalorder %v74, %v191
    %vm258 = vcmp.eq.s32.totalorder %v74, %v194
    %vm259 = vcmp.eq.s32.totalorder %v74, %v197
    %vm260 = vcmp.eq.s32.totalorder %v74, %v200
    %vm261 = vcmp.eq.s32.totalorder %v74, %v203
    %vm262 = vcmp.eq.s32.totalorder %v74, %v206
    %vm263 = vcmp.eq.s32.totalorder %v74, %v209
    %vm264 = vcmp.eq.s32.totalorder %v74, %v212
    %vm265 = vcmp.eq.s32.totalorder %v74, %v215
    %vm266 = vcmp.eq.s32.totalorder %v74, %v218
    %v267 = vsel %vm219, 1.0, 0.0
    %v268 = vsel %vm220, 1.0, 0.0
    %v269 = vsel %vm221, 1.0, 0.0
    %v270 = vsel %vm222, 1.0, 0.0
    %v271 = vsel %vm223, 1.0, 0.0
    %v272 = vsel %vm224, 1.0, 0.0
    %v273 = vsel %vm225, 1.0, 0.0
    %v274 = vsel %vm226, 1.0, 0.0
    %v275 = vsel %vm227, 1.0, 0.0
    %v276 = vsel %vm228, 1.0, 0.0
    %v277 = vsel %vm229, 1.0, 0.0
    %v278 = vsel %vm230, 1.0, 0.0
    %v279 = vsel %vm231, 1.0, 0.0
    %v280 = vsel %vm232, 1.0, 0.0
    %v281 = vsel %vm233, 1.0, 0.0
    %v282 = vsel %vm234, 1.0, 0.0
    %v283 = vsel %vm235, 1.0, 0.0
    %v284 = vsel %vm236, 1.0, 0.0
    %v285 = vsel %vm237, 1.0, 0.0
    %v286 = vsel %vm238, 1.0, 0.0
    %v287 = vsel %vm239, 1.0, 0.0
    %v288 = vsel %vm240, 1.0, 0.0
    %v289 = vsel %vm241, 1.0, 0.0
    %v290 = vsel %vm242, 1.0, 0.0
    %v291 = vsel %vm243, 1.0, 0.0
    %v292 = vsel %vm244, 1.0, 0.0
    %v293 = vsel %vm245, 1.0, 0.0
    %v294 = vsel %vm246, 1.0, 0.0
    %v295 = vsel %vm247, 1.0, 0.0
    %v296 = vsel %vm248, 1.0, 0.0
    %v297 = vsel %vm249, 1.0, 0.0
    %v298 = vsel %vm250, 1.0, 0.0
    %v299 = vsel %vm251, 1.0, 0.0
    %v300 = vsel %vm252, 1.0, 0.0
    %v301 = vsel %vm253, 1.0, 0.0
    %v302 = vsel %vm254, 1.0, 0.0
    %v303 = vsel %vm255, 1.0, 0.0
    %v304 = vsel %vm256, 1.0, 0.0
    %v305 = vsel %vm257, 1.0, 0.0
    %v306 = vsel %vm258, 1.0, 0.0
    %v307 = vsel %vm259, 1.0, 0.0
    %v308 = vsel %vm260, 1.0, 0.0
    %v309 = vsel %vm261, 1.0, 0.0
    %v310 = vsel %vm262, 1.0, 0.0
    %v311 = vsel %vm263, 1.0, 0.0
    %v312 = vsel %vm264, 1.0, 0.0
    %v313 = vsel %vm265, 1.0, 0.0
    %v314 = vsel %vm266, 1.0, 0.0
    %v315 = vpack.c.bf16 %v268, %v267
    %v316 = vpack.c.bf16 %v270, %v269
    %v317 = vpack.c.bf16 %v272, %v271
    %v318 = vpack.c.bf16 %v274, %v273
    %v319 = vpack.c.bf16 %v276, %v275
    %v320 = vpack.c.bf16 %v278, %v277
    %v321 = vpack.c.bf16 %v280, %v279
    %v322 = vpack.c.bf16 %v282, %v281
    %v323 = vpack.c.bf16 %v284, %v283
    %v324 = vpack.c.bf16 %v286, %v285
    %v325 = vpack.c.bf16 %v288, %v287
    %v326 = vpack.c.bf16 %v290, %v289
    %v327 = vpack.c.bf16 %v292, %v291
    %v328 = vpack.c.bf16 %v294, %v293
    %v329 = vpack.c.bf16 %v296, %v295
    %v330 = vpack.c.bf16 %v298, %v297
    %v331 = vpack.c.bf16 %v300, %v299
    %v332 = vpack.c.bf16 %v302, %v301
    %v333 = vpack.c.bf16 %v304, %v303
    %v334 = vpack.c.bf16 %v306, %v305
    %v335 = vpack.c.bf16 %v308, %v307
    %v336 = vpack.c.bf16 %v310, %v309
    %v337 = vpack.c.bf16 %v312, %v311
    %v338 = vpack.c.bf16 %v314, %v313
    %v339 = vld [vmem:[%s1] sm:$0xf]
    %v340 = vld [vmem:[%s1 + $0x4] sm:$0xf]
    %v341 = vld [vmem:[%s1 + $0x8] sm:$0xf]
    %v342 = vld [vmem:[%s1 + $0xc] sm:$0xf]
    %v343 = vld [vmem:[%s1 + $0x10] sm:$0xf]
    %v344 = vld [vmem:[%s1 + $0x14] sm:$0xf]
    %v345 = vld [vmem:[%s1 + $0x18] sm:$0xf]
    %v346 = vld [vmem:[%s1 + $0x1c] sm:$0xf]
    %v347 = vld [vmem:[%s1 + $0x20] sm:$0xf]
    %v348 = vld [vmem:[%s1 + $0x24] sm:$0xf]
    %v349 = vld [vmem:[%s1 + $0x28] sm:$0xf]
    %v350 = vld [vmem:[%s1 + $0x2c] sm:$0xf]
    %v351 = vld [vmem:[%s1 + $0x30] sm:$0xf]
    %v352 = vld [vmem:[%s1 + $0x34] sm:$0xf]
    %v353 = vld [vmem:[%s1 + $0x38] sm:$0xf]
    %v354 = vld [vmem:[%s1 + $0x3c] sm:$0xf]
    %v355 = vld [vmem:[%s2] sm:$0x1]
    %v357 = vlaneseq
    %v358 = vshrl.u32 %v357, 7
    %v359 = vsub.s32 0, %v358
    %v360 = vrot.slane %v355, %v359
    %v378 = vunpack.c.l.b16 %v339
    %v379 = vunpack.c.l.b16 %v340
    %v380 = vunpack.c.l.b16 %v341
    %v381 = vunpack.c.l.b16 %v342
    %v382 = vunpack.c.l.b16 %v343
    %v383 = vunpack.c.l.b16 %v344
    %v384 = vunpack.c.l.b16 %v345
    %v385 = vunpack.c.l.b16 %v346
    %v386 = vunpack.c.l.b16 %v347
    %v387 = vunpack.c.l.b16 %v348
    %v388 = vunpack.c.l.b16 %v349
    %v389 = vunpack.c.l.b16 %v350
    %v390 = vunpack.c.l.b16 %v351
    %v391 = vunpack.c.l.b16 %v352
    %v392 = vunpack.c.l.b16 %v353
    %v393 = vunpack.c.l.b16 %v354
    %v394 = vpack.c.b16 %v379, %v378
    %v395 = vpack.c.b16 %v381, %v380
    %v396 = vpack.c.b16 %v383, %v382
    %v397 = vpack.c.b16 %v385, %v384
    %v398 = vpack.c.b16 %v387, %v386
    %v399 = vpack.c.b16 %v389, %v388
    %v400 = vpack.c.b16 %v391, %v390
    %v401 = vpack.c.b16 %v393, %v392
    %410 = vmatprep.subr.bf16.mxu0 0
    %411 = vmatpush1.bf16.msra.mxu0 %v401
    %412 = vmatprep.subr.bf16.mxu0 0
    %413 = vmatpush1.bf16.msra.mxu0 %v400
    %414 = vmatprep.subr.bf16.mxu0 0
    %415 = vmatpush1.bf16.msra.mxu0 %v399
    %416 = vmatprep.subr.bf16.mxu0 0
    %417 = vmatpush1.bf16.msra.mxu0 %v398
    %418 = vmatprep.subr.bf16.mxu0 0
    %419 = vmatpush1.bf16.msra.mxu0 %v397
    %420 = vmatprep.subr.bf16.mxu0 0
    %421 = vmatpush1.bf16.msra.mxu0 %v396
    %422 = vmatprep.subr.bf16.mxu0 0
    %423 = vmatpush1.bf16.msra.mxu0 %v395
    %424 = vmatprep.subr.bf16.mxu0 0
    %425 = vmatpush1.bf16.msra.mxu0 %v394
    %426 = vmatprep.subr.bf16.mxu0 0
    %427 = vmatpush2.bf16.msra.mxu0 0
    %428 = vmatprep.subr.bf16.mxu0 0
    %429 = vmatpush2.bf16.msra.mxu0 0
    %430 = vmatprep.subr.bf16.mxu0 0
    %431 = vmatpush2.bf16.msra.mxu0 0
    %432 = vmatprep.subr.bf16.mxu0 0
    %433 = vmatpush2.bf16.msra.mxu0 0
    %434 = vmatprep.subr.bf16.mxu0 0
    %435 = vmatpush2.bf16.msra.mxu0 0
    %436 = vmatprep.subr.bf16.mxu0 0
    %437 = vmatpush2.bf16.msra.mxu0 0
    %438 = vmatprep.subr.bf16.mxu0 0
    %439 = vmatpush2.bf16.msra.mxu0 0
    %440 = vmatprep.subr.bf16.mxu0 0
    %441 = vmatpush2.bf16.msra.mxu0 0
    %442 = vmatprep.mubr.bf16.mxu0 0
    %443 = vmatmul.mubr.bf16.gmra.mxu0 %v315
    %v444 = vpop.f32.mrf.mxu0
    %v445 = vadd.f32 %v360, %v444
    %v446 = vpop.f32.mrf.mxu0
    %v447 = vpop.f32.mrf.mxu0
    %v448 = vadd.f32 %v360, %v447
    %v449 = vpop.f32.mrf.mxu0
    %450 = vmatprep.mubr.bf16.mxu0 0
    %451 = vmatmul.mubr.bf16.gmra.mxu0 %v316
    %v452 = vpop.f32.mrf.mxu0
    %v453 = vadd.f32 %v360, %v452
    %v454 = vpop.f32.mrf.mxu0
    %v455 = vpop.f32.mrf.mxu0
    %v456 = vadd.f32 %v360, %v455
    %v457 = vpop.f32.mrf.mxu0
    %458 = vmatprep.mubr.bf16.mxu0 0
    %459 = vmatmul.mubr.bf16.gmra.mxu0 %v317
    %v460 = vpop.f32.mrf.mxu0
    %v461 = vadd.f32 %v360, %v460
    %v462 = vpop.f32.mrf.mxu0
    %v463 = vpop.f32.mrf.mxu0
    %v464 = vadd.f32 %v360, %v463
    %v465 = vpop.f32.mrf.mxu0
    %466 = vmatprep.mubr.bf16.mxu0 0
    %467 = vmatmul.mubr.bf16.gmra.mxu0 %v318
    %v468 = vpop.f32.mrf.mxu0
    %v469 = vadd.f32 %v360, %v468
    %v470 = vpop.f32.mrf.mxu0
    %v471 = vpop.f32.mrf.mxu0
    %v472 = vadd.f32 %v360, %v471
    %v473 = vpop.f32.mrf.mxu0
    %474 = vmatprep.mubr.bf16.mxu0 0
    %475 = vmatmul.mubr.bf16.gmra.mxu0 %v319
    %v476 = vpop.f32.mrf.mxu0
    %v477 = vadd.f32 %v360, %v476
    %v478 = vpop.f32.mrf.mxu0
    %v479 = vpop.f32.mrf.mxu0
    %v480 = vadd.f32 %v360, %v479
    %v481 = vpop.f32.mrf.mxu0
    %482 = vmatprep.mubr.bf16.mxu0 0
    %483 = vmatmul.mubr.bf16.gmra.mxu0 %v320
    %v484 = vpop.f32.mrf.mxu0
    %v485 = vadd.f32 %v360, %v484
    %v486 = vpop.f32.mrf.mxu0
    %v487 = vpop.f32.mrf.mxu0
    %v488 = vadd.f32 %v360, %v487
    %v489 = vpop.f32.mrf.mxu0
    %490 = vmatprep.mubr.bf16.mxu0 0
    %491 = vmatmul.mubr.bf16.gmra.mxu0 %v321
    %v492 = vpop.f32.mrf.mxu0
    %v493 = vadd.f32 %v360, %v492
    %v494 = vpop.f32.mrf.mxu0
    %v495 = vpop.f32.mrf.mxu0
    %v496 = vadd.f32 %v360, %v495
    %v497 = vpop.f32.mrf.mxu0
    %498 = vmatprep.mubr.bf16.mxu0 0
    %499 = vmatmul.mubr.bf16.gmra.mxu0 %v322
    %v500 = vpop.f32.mrf.mxu0
    %v501 = vadd.f32 %v360, %v500
    %v502 = vpop.f32.mrf.mxu0
    %v503 = vpop.f32.mrf.mxu0
    %v504 = vadd.f32 %v360, %v503
    %v505 = vpop.f32.mrf.mxu0
    %506 = vmatprep.mubr.bf16.mxu0 0
    %507 = vmatmul.mubr.bf16.gmra.mxu0 %v323
    %v508 = vpop.f32.mrf.mxu0
    %v509 = vadd.f32 %v360, %v508
    %v510 = vpop.f32.mrf.mxu0
    %v511 = vpop.f32.mrf.mxu0
    %v512 = vadd.f32 %v360, %v511
    %v513 = vpop.f32.mrf.mxu0
    %514 = vmatprep.mubr.bf16.mxu0 0
    %515 = vmatmul.mubr.bf16.gmra.mxu0 %v324
    %v516 = vpop.f32.mrf.mxu0
    %v517 = vadd.f32 %v360, %v516
    %v518 = vpop.f32.mrf.mxu0
    %v519 = vpop.f32.mrf.mxu0
    %v520 = vadd.f32 %v360, %v519
    %v521 = vpop.f32.mrf.mxu0
    %522 = vmatprep.mubr.bf16.mxu0 0
    %523 = vmatmul.mubr.bf16.gmra.mxu0 %v325
    %v524 = vpop.f32.mrf.mxu0
    %v525 = vadd.f32 %v360, %v524
    %v526 = vpop.f32.mrf.mxu0
    %v527 = vpop.f32.mrf.mxu0
    %v528 = vadd.f32 %v360, %v527
    %v529 = vpop.f32.mrf.mxu0
    %530 = vmatprep.mubr.bf16.mxu0 0
    %531 = vmatmul.mubr.bf16.gmra.mxu0 %v326
    %v532 = vpop.f32.mrf.mxu0
    %v533 = vadd.f32 %v360, %v532
    %v534 = vpop.f32.mrf.mxu0
    %v535 = vpop.f32.mrf.mxu0
    %v536 = vadd.f32 %v360, %v535
    %v537 = vpop.f32.mrf.mxu0
    %538 = vmatprep.mubr.bf16.mxu0 0
    %539 = vmatmul.mubr.bf16.gmra.mxu0 %v327
    %v540 = vpop.f32.mrf.mxu0
    %v541 = vadd.f32 %v360, %v540
    %v542 = vpop.f32.mrf.mxu0
    %v543 = vpop.f32.mrf.mxu0
    %v544 = vadd.f32 %v360, %v543
    %v545 = vpop.f32.mrf.mxu0
    %546 = vmatprep.mubr.bf16.mxu0 0
    %547 = vmatmul.mubr.bf16.gmra.mxu0 %v328
    %v548 = vpop.f32.mrf.mxu0
    %v549 = vadd.f32 %v360, %v548
    %v550 = vpop.f32.mrf.mxu0
    %v551 = vpop.f32.mrf.mxu0
    %v552 = vadd.f32 %v360, %v551
    %v553 = vpop.f32.mrf.mxu0
    %554 = vmatprep.mubr.bf16.mxu0 0
    %555 = vmatmul.mubr.bf16.gmra.mxu0 %v329
    %v556 = vpop.f32.mrf.mxu0
    %v557 = vadd.f32 %v360, %v556
    %v558 = vpop.f32.mrf.mxu0
    %v559 = vpop.f32.mrf.mxu0
    %v560 = vadd.f32 %v360, %v559
    %v561 = vpop.f32.mrf.mxu0
    %562 = vmatprep.mubr.bf16.mxu0 0
    %563 = vmatmul.mubr.bf16.gmra.mxu0 %v330
    %v564 = vpop.f32.mrf.mxu0
    %v565 = vadd.f32 %v360, %v564
    %v566 = vpop.f32.mrf.mxu0
    %v567 = vpop.f32.mrf.mxu0
    %v568 = vadd.f32 %v360, %v567
    %v569 = vpop.f32.mrf.mxu0
    %570 = vmatprep.mubr.bf16.mxu0 0
    %571 = vmatmul.mubr.bf16.gmra.mxu0 %v331
    %v572 = vpop.f32.mrf.mxu0
    %v573 = vadd.f32 %v360, %v572
    %v574 = vpop.f32.mrf.mxu0
    %v575 = vpop.f32.mrf.mxu0
    %v576 = vadd.f32 %v360, %v575
    %v577 = vpop.f32.mrf.mxu0
    %578 = vmatprep.mubr.bf16.mxu0 0
    %579 = vmatmul.mubr.bf16.gmra.mxu0 %v332
    %v580 = vpop.f32.mrf.mxu0
    %v581 = vadd.f32 %v360, %v580
    %v582 = vpop.f32.mrf.mxu0
    %v583 = vpop.f32.mrf.mxu0
    %v584 = vadd.f32 %v360, %v583
    %v585 = vpop.f32.mrf.mxu0
    %586 = vmatprep.mubr.bf16.mxu0 0
    %587 = vmatmul.mubr.bf16.gmra.mxu0 %v333
    %v588 = vpop.f32.mrf.mxu0
    %v589 = vadd.f32 %v360, %v588
    %v590 = vpop.f32.mrf.mxu0
    %v591 = vpop.f32.mrf.mxu0
    %v592 = vadd.f32 %v360, %v591
    %v593 = vpop.f32.mrf.mxu0
    %594 = vmatprep.mubr.bf16.mxu0 0
    %595 = vmatmul.mubr.bf16.gmra.mxu0 %v334
    %v596 = vpop.f32.mrf.mxu0
    %v597 = vadd.f32 %v360, %v596
    %v598 = vpop.f32.mrf.mxu0
    %v599 = vpop.f32.mrf.mxu0
    %v600 = vadd.f32 %v360, %v599
    %v601 = vpop.f32.mrf.mxu0
    %602 = vmatprep.mubr.bf16.mxu0 0
    %603 = vmatmul.mubr.bf16.gmra.mxu0 %v335
    %v604 = vpop.f32.mrf.mxu0
    %v605 = vadd.f32 %v360, %v604
    %v606 = vpop.f32.mrf.mxu0
    %v607 = vpop.f32.mrf.mxu0
    %v608 = vadd.f32 %v360, %v607
    %v609 = vpop.f32.mrf.mxu0
    %610 = vmatprep.mubr.bf16.mxu0 0
    %611 = vmatmul.mubr.bf16.gmra.mxu0 %v336
    %v612 = vpop.f32.mrf.mxu0
    %v613 = vadd.f32 %v360, %v612
    %v614 = vpop.f32.mrf.mxu0
    %v615 = vpop.f32.mrf.mxu0
    %v616 = vadd.f32 %v360, %v615
    %v617 = vpop.f32.mrf.mxu0
    %618 = vmatprep.mubr.bf16.mxu0 0
    %619 = vmatmul.mubr.bf16.gmra.mxu0 %v337
    %v620 = vpop.f32.mrf.mxu0
    %v621 = vadd.f32 %v360, %v620
    %v622 = vpop.f32.mrf.mxu0
    %v623 = vpop.f32.mrf.mxu0
    %v624 = vadd.f32 %v360, %v623
    %v625 = vpop.f32.mrf.mxu0
    %626 = vmatprep.mubr.bf16.mxu0 0
    %627 = vmatmul.mubr.bf16.gmra.mxu0 %v338
    %v628 = vpop.f32.mrf.mxu0
    %v629 = vadd.f32 %v360, %v628
    %v630 = vpop.f32.mrf.mxu0
    %v631 = vpop.f32.mrf.mxu0
    %v632 = vadd.f32 %v360, %v631
    %v633 = vpop.f32.mrf.mxu0
    %634 = vdwg.mxu0
    %v635 = vmax.f32 %v445, 0.0
    %v636 = vmax.f32 %v448, 0.0
    %v637 = vmax.f32 %v453, 0.0
    %v638 = vmax.f32 %v456, 0.0
    %v639 = vmax.f32 %v461, 0.0
    %v640 = vmax.f32 %v464, 0.0
    %v641 = vmax.f32 %v469, 0.0
    %v642 = vmax.f32 %v472, 0.0
    %v643 = vmax.f32 %v477, 0.0
    %v644 = vmax.f32 %v480, 0.0
    %v645 = vmax.f32 %v485, 0.0
    %v646 = vmax.f32 %v488, 0.0
    %v647 = vmax.f32 %v493, 0.0
    %v648 = vmax.f32 %v496, 0.0
    %v649 = vmax.f32 %v501, 0.0
    %v650 = vmax.f32 %v504, 0.0
    %v651 = vmax.f32 %v509, 0.0
    %v652 = vmax.f32 %v512, 0.0
    %v653 = vmax.f32 %v517, 0.0
    %v654 = vmax.f32 %v520, 0.0
    %v655 = vmax.f32 %v525, 0.0
    %v656 = vmax.f32 %v528, 0.0
    %v657 = vmax.f32 %v533, 0.0
    %v658 = vmax.f32 %v536, 0.0
    %v659 = vmax.f32 %v541, 0.0
    %v660 = vmax.f32 %v544, 0.0
    %v661 = vmax.f32 %v549, 0.0
    %v662 = vmax.f32 %v552, 0.0
    %v663 = vmax.f32 %v557, 0.0
    %v664 = vmax.f32 %v560, 0.0
    %v665 = vmax.f32 %v565, 0.0
    %v666 = vmax.f32 %v568, 0.0
    %v667 = vmax.f32 %v573, 0.0
    %v668 = vmax.f32 %v576, 0.0
    %v669 = vmax.f32 %v581, 0.0
    %v670 = vmax.f32 %v584, 0.0
    %v671 = vmax.f32 %v589, 0.0
    %v672 = vmax.f32 %v592, 0.0
    %v673 = vmax.f32 %v597, 0.0
    %v674 = vmax.f32 %v600, 0.0
    %v675 = vmax.f32 %v605, 0.0
    %v676 = vmax.f32 %v608, 0.0
    %v677 = vmax.f32 %v613, 0.0
    %v678 = vmax.f32 %v616, 0.0
    %v679 = vmax.f32 %v621, 0.0
    %v680 = vmax.f32 %v624, 0.0
    %v681 = vmax.f32 %v629, 0.0
    %v682 = vmax.f32 %v632, 0.0
    %v683 = vpack.c.bf16 %v636, %v635
    %v684 = vpack.c.bf16 %v638, %v637
    %v685 = vpack.c.bf16 %v640, %v639
    %v686 = vpack.c.bf16 %v642, %v641
    %v687 = vpack.c.bf16 %v644, %v643
    %v688 = vpack.c.bf16 %v646, %v645
    %v689 = vpack.c.bf16 %v648, %v647
    %v690 = vpack.c.bf16 %v650, %v649
    %v691 = vpack.c.bf16 %v652, %v651
    %v692 = vpack.c.bf16 %v654, %v653
    %v693 = vpack.c.bf16 %v656, %v655
    %v694 = vpack.c.bf16 %v658, %v657
    %v695 = vpack.c.bf16 %v660, %v659
    %v696 = vpack.c.bf16 %v662, %v661
    %v697 = vpack.c.bf16 %v664, %v663
    %v698 = vpack.c.bf16 %v666, %v665
    %v699 = vpack.c.bf16 %v668, %v667
    %v700 = vpack.c.bf16 %v670, %v669
    %v701 = vpack.c.bf16 %v672, %v671
    %v702 = vpack.c.bf16 %v674, %v673
    %v703 = vpack.c.bf16 %v676, %v675
    %v704 = vpack.c.bf16 %v678, %v677
    %v705 = vpack.c.bf16 %v680, %v679
    %v706 = vpack.c.bf16 %v682, %v681
    %v707 = vld [vmem:[%s3] sm:$0xf]
    %v708 = vld [vmem:[%s3 + $0x4] sm:$0xf]
    %v709 = vld [vmem:[%s3 + $0x8] sm:$0xf]
    %v710 = vld [vmem:[%s3 + $0xc] sm:$0xf]
    %v711 = vld [vmem:[%s3 + $0x10] sm:$0xf]
    %v712 = vld [vmem:[%s3 + $0x14] sm:$0xf]
    %v713 = vld [vmem:[%s3 + $0x18] sm:$0xf]
    %v714 = vld [vmem:[%s3 + $0x1c] sm:$0xf]
    %v715 = vld [vmem:[%s3 + $0x20] sm:$0xf]
    %v716 = vld [vmem:[%s3 + $0x24] sm:$0xf]
    %v717 = vld [vmem:[%s3 + $0x28] sm:$0xf]
    %v718 = vld [vmem:[%s3 + $0x2c] sm:$0xf]
    %v719 = vld [vmem:[%s3 + $0x30] sm:$0xf]
    %v720 = vld [vmem:[%s3 + $0x34] sm:$0xf]
    %v721 = vld [vmem:[%s3 + $0x38] sm:$0xf]
    %v722 = vld [vmem:[%s3 + $0x3c] sm:$0xf]
    %v723 = vld [vmem:[%s4] sm:$0x1]
    %v725 = vlaneseq
    %v726 = vshrl.u32 %v725, 7
    %v727 = vsub.s32 0, %v726
    %v728 = vrot.slane %v723, %v727
    %v746 = vunpack.c.l.b16 %v707
    %v747 = vunpack.c.l.b16 %v708
    %v748 = vunpack.c.l.b16 %v709
    %v749 = vunpack.c.l.b16 %v710
    %v750 = vunpack.c.l.b16 %v711
    %v751 = vunpack.c.l.b16 %v712
    %v752 = vunpack.c.l.b16 %v713
    %v753 = vunpack.c.l.b16 %v714
    %v754 = vunpack.c.l.b16 %v715
    %v755 = vunpack.c.l.b16 %v716
    %v756 = vunpack.c.l.b16 %v717
    %v757 = vunpack.c.l.b16 %v718
    %v758 = vunpack.c.l.b16 %v719
    %v759 = vunpack.c.l.b16 %v720
    %v760 = vunpack.c.l.b16 %v721
    %v761 = vunpack.c.l.b16 %v722
    %v762 = vpack.c.b16 %v747, %v746
    %v763 = vpack.c.b16 %v749, %v748
    %v764 = vpack.c.b16 %v751, %v750
    %v765 = vpack.c.b16 %v753, %v752
    %v766 = vpack.c.b16 %v755, %v754
    %v767 = vpack.c.b16 %v757, %v756
    %v768 = vpack.c.b16 %v759, %v758
    %v769 = vpack.c.b16 %v761, %v760
    %778 = vmatprep.subr.bf16.mxu0 0
    %779 = vmatpush1.bf16.msra.mxu0 %v769
    %780 = vmatprep.subr.bf16.mxu0 0
    %781 = vmatpush1.bf16.msra.mxu0 %v768
    %782 = vmatprep.subr.bf16.mxu0 0
    %783 = vmatpush1.bf16.msra.mxu0 %v767
    %784 = vmatprep.subr.bf16.mxu0 0
    %785 = vmatpush1.bf16.msra.mxu0 %v766
    %786 = vmatprep.subr.bf16.mxu0 0
    %787 = vmatpush1.bf16.msra.mxu0 %v765
    %788 = vmatprep.subr.bf16.mxu0 0
    %789 = vmatpush1.bf16.msra.mxu0 %v764
    %790 = vmatprep.subr.bf16.mxu0 0
    %791 = vmatpush1.bf16.msra.mxu0 %v763
    %792 = vmatprep.subr.bf16.mxu0 0
    %793 = vmatpush1.bf16.msra.mxu0 %v762
    %794 = vmatprep.subr.bf16.mxu0 0
    %795 = vmatpush2.bf16.msra.mxu0 0
    %796 = vmatprep.subr.bf16.mxu0 0
    %797 = vmatpush2.bf16.msra.mxu0 0
    %798 = vmatprep.subr.bf16.mxu0 0
    %799 = vmatpush2.bf16.msra.mxu0 0
    %800 = vmatprep.subr.bf16.mxu0 0
    %801 = vmatpush2.bf16.msra.mxu0 0
    %802 = vmatprep.subr.bf16.mxu0 0
    %803 = vmatpush2.bf16.msra.mxu0 0
    %804 = vmatprep.subr.bf16.mxu0 0
    %805 = vmatpush2.bf16.msra.mxu0 0
    %806 = vmatprep.subr.bf16.mxu0 0
    %807 = vmatpush2.bf16.msra.mxu0 0
    %808 = vmatprep.subr.bf16.mxu0 0
    %809 = vmatpush2.bf16.msra.mxu0 0
    %810 = vmatprep.mubr.bf16.mxu0 0
    %811 = vmatmul.mubr.bf16.gmra.mxu0 %v683
    %v812 = vpop.f32.mrf.mxu0
    %v813 = vadd.f32 %v728, %v812
    %v814 = vpop.f32.mrf.mxu0
    %v815 = vpop.f32.mrf.mxu0
    %v816 = vadd.f32 %v728, %v815
    %v817 = vpop.f32.mrf.mxu0
    %818 = vmatprep.mubr.bf16.mxu0 0
    %819 = vmatmul.mubr.bf16.gmra.mxu0 %v684
    %v820 = vpop.f32.mrf.mxu0
    %v821 = vadd.f32 %v728, %v820
    %v822 = vpop.f32.mrf.mxu0
    %v823 = vpop.f32.mrf.mxu0
    %v824 = vadd.f32 %v728, %v823
    %v825 = vpop.f32.mrf.mxu0
    %826 = vmatprep.mubr.bf16.mxu0 0
    %827 = vmatmul.mubr.bf16.gmra.mxu0 %v685
    %v828 = vpop.f32.mrf.mxu0
    %v829 = vadd.f32 %v728, %v828
    %v830 = vpop.f32.mrf.mxu0
    %v831 = vpop.f32.mrf.mxu0
    %v832 = vadd.f32 %v728, %v831
    %v833 = vpop.f32.mrf.mxu0
    %834 = vmatprep.mubr.bf16.mxu0 0
    %835 = vmatmul.mubr.bf16.gmra.mxu0 %v686
    %v836 = vpop.f32.mrf.mxu0
    %v837 = vadd.f32 %v728, %v836
    %v838 = vpop.f32.mrf.mxu0
    %v839 = vpop.f32.mrf.mxu0
    %v840 = vadd.f32 %v728, %v839
    %v841 = vpop.f32.mrf.mxu0
    %842 = vmatprep.mubr.bf16.mxu0 0
    %843 = vmatmul.mubr.bf16.gmra.mxu0 %v687
    %v844 = vpop.f32.mrf.mxu0
    %v845 = vadd.f32 %v728, %v844
    %v846 = vpop.f32.mrf.mxu0
    %v847 = vpop.f32.mrf.mxu0
    %v848 = vadd.f32 %v728, %v847
    %v849 = vpop.f32.mrf.mxu0
    %850 = vmatprep.mubr.bf16.mxu0 0
    %851 = vmatmul.mubr.bf16.gmra.mxu0 %v688
    %v852 = vpop.f32.mrf.mxu0
    %v853 = vadd.f32 %v728, %v852
    %v854 = vpop.f32.mrf.mxu0
    %v855 = vpop.f32.mrf.mxu0
    %v856 = vadd.f32 %v728, %v855
    %v857 = vpop.f32.mrf.mxu0
    %858 = vmatprep.mubr.bf16.mxu0 0
    %859 = vmatmul.mubr.bf16.gmra.mxu0 %v689
    %v860 = vpop.f32.mrf.mxu0
    %v861 = vadd.f32 %v728, %v860
    %v862 = vpop.f32.mrf.mxu0
    %v863 = vpop.f32.mrf.mxu0
    %v864 = vadd.f32 %v728, %v863
    %v865 = vpop.f32.mrf.mxu0
    %866 = vmatprep.mubr.bf16.mxu0 0
    %867 = vmatmul.mubr.bf16.gmra.mxu0 %v690
    %v868 = vpop.f32.mrf.mxu0
    %v869 = vadd.f32 %v728, %v868
    %v870 = vpop.f32.mrf.mxu0
    %v871 = vpop.f32.mrf.mxu0
    %v872 = vadd.f32 %v728, %v871
    %v873 = vpop.f32.mrf.mxu0
    %874 = vmatprep.mubr.bf16.mxu0 0
    %875 = vmatmul.mubr.bf16.gmra.mxu0 %v691
    %v876 = vpop.f32.mrf.mxu0
    %v877 = vadd.f32 %v728, %v876
    %v878 = vpop.f32.mrf.mxu0
    %v879 = vpop.f32.mrf.mxu0
    %v880 = vadd.f32 %v728, %v879
    %v881 = vpop.f32.mrf.mxu0
    %882 = vmatprep.mubr.bf16.mxu0 0
    %883 = vmatmul.mubr.bf16.gmra.mxu0 %v692
    %v884 = vpop.f32.mrf.mxu0
    %v885 = vadd.f32 %v728, %v884
    %v886 = vpop.f32.mrf.mxu0
    %v887 = vpop.f32.mrf.mxu0
    %v888 = vadd.f32 %v728, %v887
    %v889 = vpop.f32.mrf.mxu0
    %890 = vmatprep.mubr.bf16.mxu0 0
    %891 = vmatmul.mubr.bf16.gmra.mxu0 %v693
    %v892 = vpop.f32.mrf.mxu0
    %v893 = vadd.f32 %v728, %v892
    %v894 = vpop.f32.mrf.mxu0
    %v895 = vpop.f32.mrf.mxu0
    %v896 = vadd.f32 %v728, %v895
    %v897 = vpop.f32.mrf.mxu0
    %898 = vmatprep.mubr.bf16.mxu0 0
    %899 = vmatmul.mubr.bf16.gmra.mxu0 %v694
    %v900 = vpop.f32.mrf.mxu0
    %v901 = vadd.f32 %v728, %v900
    %v902 = vpop.f32.mrf.mxu0
    %v903 = vpop.f32.mrf.mxu0
    %v904 = vadd.f32 %v728, %v903
    %v905 = vpop.f32.mrf.mxu0
    %906 = vmatprep.mubr.bf16.mxu0 0
    %907 = vmatmul.mubr.bf16.gmra.mxu0 %v695
    %v908 = vpop.f32.mrf.mxu0
    %v909 = vadd.f32 %v728, %v908
    %v910 = vpop.f32.mrf.mxu0
    %v911 = vpop.f32.mrf.mxu0
    %v912 = vadd.f32 %v728, %v911
    %v913 = vpop.f32.mrf.mxu0
    %914 = vmatprep.mubr.bf16.mxu0 0
    %915 = vmatmul.mubr.bf16.gmra.mxu0 %v696
    %v916 = vpop.f32.mrf.mxu0
    %v917 = vadd.f32 %v728, %v916
    %v918 = vpop.f32.mrf.mxu0
    %v919 = vpop.f32.mrf.mxu0
    %v920 = vadd.f32 %v728, %v919
    %v921 = vpop.f32.mrf.mxu0
    %922 = vmatprep.mubr.bf16.mxu0 0
    %923 = vmatmul.mubr.bf16.gmra.mxu0 %v697
    %v924 = vpop.f32.mrf.mxu0
    %v925 = vadd.f32 %v728, %v924
    %v926 = vpop.f32.mrf.mxu0
    %v927 = vpop.f32.mrf.mxu0
    %v928 = vadd.f32 %v728, %v927
    %v929 = vpop.f32.mrf.mxu0
    %930 = vmatprep.mubr.bf16.mxu0 0
    %931 = vmatmul.mubr.bf16.gmra.mxu0 %v698
    %v932 = vpop.f32.mrf.mxu0
    %v933 = vadd.f32 %v728, %v932
    %v934 = vpop.f32.mrf.mxu0
    %v935 = vpop.f32.mrf.mxu0
    %v936 = vadd.f32 %v728, %v935
    %v937 = vpop.f32.mrf.mxu0
    %938 = vmatprep.mubr.bf16.mxu0 0
    %939 = vmatmul.mubr.bf16.gmra.mxu0 %v699
    %v940 = vpop.f32.mrf.mxu0
    %v941 = vadd.f32 %v728, %v940
    %v942 = vpop.f32.mrf.mxu0
    %v943 = vpop.f32.mrf.mxu0
    %v944 = vadd.f32 %v728, %v943
    %v945 = vpop.f32.mrf.mxu0
    %946 = vmatprep.mubr.bf16.mxu0 0
    %947 = vmatmul.mubr.bf16.gmra.mxu0 %v700
    %v948 = vpop.f32.mrf.mxu0
    %v949 = vadd.f32 %v728, %v948
    %v950 = vpop.f32.mrf.mxu0
    %v951 = vpop.f32.mrf.mxu0
    %v952 = vadd.f32 %v728, %v951
    %v953 = vpop.f32.mrf.mxu0
    %954 = vmatprep.mubr.bf16.mxu0 0
    %955 = vmatmul.mubr.bf16.gmra.mxu0 %v701
    %v956 = vpop.f32.mrf.mxu0
    %v957 = vadd.f32 %v728, %v956
    %v958 = vpop.f32.mrf.mxu0
    %v959 = vpop.f32.mrf.mxu0
    %v960 = vadd.f32 %v728, %v959
    %v961 = vpop.f32.mrf.mxu0
    %962 = vmatprep.mubr.bf16.mxu0 0
    %963 = vmatmul.mubr.bf16.gmra.mxu0 %v702
    %v964 = vpop.f32.mrf.mxu0
    %v965 = vadd.f32 %v728, %v964
    %v966 = vpop.f32.mrf.mxu0
    %v967 = vpop.f32.mrf.mxu0
    %v968 = vadd.f32 %v728, %v967
    %v969 = vpop.f32.mrf.mxu0
    %970 = vmatprep.mubr.bf16.mxu0 0
    %971 = vmatmul.mubr.bf16.gmra.mxu0 %v703
    %v972 = vpop.f32.mrf.mxu0
    %v973 = vadd.f32 %v728, %v972
    %v974 = vpop.f32.mrf.mxu0
    %v975 = vpop.f32.mrf.mxu0
    %v976 = vadd.f32 %v728, %v975
    %v977 = vpop.f32.mrf.mxu0
    %978 = vmatprep.mubr.bf16.mxu0 0
    %979 = vmatmul.mubr.bf16.gmra.mxu0 %v704
    %v980 = vpop.f32.mrf.mxu0
    %v981 = vadd.f32 %v728, %v980
    %v982 = vpop.f32.mrf.mxu0
    %v983 = vpop.f32.mrf.mxu0
    %v984 = vadd.f32 %v728, %v983
    %v985 = vpop.f32.mrf.mxu0
    %986 = vmatprep.mubr.bf16.mxu0 0
    %987 = vmatmul.mubr.bf16.gmra.mxu0 %v705
    %v988 = vpop.f32.mrf.mxu0
    %v989 = vadd.f32 %v728, %v988
    %v990 = vpop.f32.mrf.mxu0
    %v991 = vpop.f32.mrf.mxu0
    %v992 = vadd.f32 %v728, %v991
    %v993 = vpop.f32.mrf.mxu0
    %994 = vmatprep.mubr.bf16.mxu0 0
    %995 = vmatmul.mubr.bf16.gmra.mxu0 %v706
    %v996 = vpop.f32.mrf.mxu0
    %v997 = vadd.f32 %v728, %v996
    %v998 = vpop.f32.mrf.mxu0
    %v999 = vpop.f32.mrf.mxu0
    %v1000 = vadd.f32 %v728, %v999
    %v1001 = vpop.f32.mrf.mxu0
    %1002 = vdwg.mxu0
    %1003 = vmax.xlane.f32.xlu0 %v813
    %v1004 = vpop.xlane.xlu0 %1003
    %1005 = vmax.xlane.f32.xlu0 %v816
    %v1006 = vpop.xlane.xlu0 %1005
    %1007 = vmax.xlane.f32.xlu0 %v821
    %v1008 = vpop.xlane.xlu0 %1007
    %1009 = vmax.xlane.f32.xlu0 %v824
    %v1010 = vpop.xlane.xlu0 %1009
    %1011 = vmax.xlane.f32.xlu0 %v829
    %v1012 = vpop.xlane.xlu0 %1011
    %1013 = vmax.xlane.f32.xlu0 %v832
    %v1014 = vpop.xlane.xlu0 %1013
    %1015 = vmax.xlane.f32.xlu0 %v837
    %v1016 = vpop.xlane.xlu0 %1015
    %1017 = vmax.xlane.f32.xlu0 %v840
    %v1018 = vpop.xlane.xlu0 %1017
    %1019 = vmax.xlane.f32.xlu0 %v845
    %v1020 = vpop.xlane.xlu0 %1019
    %1021 = vmax.xlane.f32.xlu0 %v848
    %v1022 = vpop.xlane.xlu0 %1021
    %1023 = vmax.xlane.f32.xlu0 %v853
    %v1024 = vpop.xlane.xlu0 %1023
    %1025 = vmax.xlane.f32.xlu0 %v856
    %v1026 = vpop.xlane.xlu0 %1025
    %1027 = vmax.xlane.f32.xlu0 %v861
    %v1028 = vpop.xlane.xlu0 %1027
    %1029 = vmax.xlane.f32.xlu0 %v864
    %v1030 = vpop.xlane.xlu0 %1029
    %1031 = vmax.xlane.f32.xlu0 %v869
    %v1032 = vpop.xlane.xlu0 %1031
    %1033 = vmax.xlane.f32.xlu0 %v872
    %v1034 = vpop.xlane.xlu0 %1033
    %1035 = vmax.xlane.f32.xlu0 %v877
    %v1036 = vpop.xlane.xlu0 %1035
    %1037 = vmax.xlane.f32.xlu0 %v880
    %v1038 = vpop.xlane.xlu0 %1037
    %1039 = vmax.xlane.f32.xlu0 %v885
    %v1040 = vpop.xlane.xlu0 %1039
    %1041 = vmax.xlane.f32.xlu0 %v888
    %v1042 = vpop.xlane.xlu0 %1041
    %1043 = vmax.xlane.f32.xlu0 %v893
    %v1044 = vpop.xlane.xlu0 %1043
    %1045 = vmax.xlane.f32.xlu0 %v896
    %v1046 = vpop.xlane.xlu0 %1045
    %1047 = vmax.xlane.f32.xlu0 %v901
    %v1048 = vpop.xlane.xlu0 %1047
    %1049 = vmax.xlane.f32.xlu0 %v904
    %v1050 = vpop.xlane.xlu0 %1049
    %1051 = vmax.xlane.f32.xlu0 %v909
    %v1052 = vpop.xlane.xlu0 %1051
    %1053 = vmax.xlane.f32.xlu0 %v912
    %v1054 = vpop.xlane.xlu0 %1053
    %1055 = vmax.xlane.f32.xlu0 %v917
    %v1056 = vpop.xlane.xlu0 %1055
    %1057 = vmax.xlane.f32.xlu0 %v920
    %v1058 = vpop.xlane.xlu0 %1057
    %1059 = vmax.xlane.f32.xlu0 %v925
    %v1060 = vpop.xlane.xlu0 %1059
    %1061 = vmax.xlane.f32.xlu0 %v928
    %v1062 = vpop.xlane.xlu0 %1061
    %1063 = vmax.xlane.f32.xlu0 %v933
    %v1064 = vpop.xlane.xlu0 %1063
    %1065 = vmax.xlane.f32.xlu0 %v936
    %v1066 = vpop.xlane.xlu0 %1065
    %1067 = vmax.xlane.f32.xlu0 %v941
    %v1068 = vpop.xlane.xlu0 %1067
    %1069 = vmax.xlane.f32.xlu0 %v944
    %v1070 = vpop.xlane.xlu0 %1069
    %1071 = vmax.xlane.f32.xlu0 %v949
    %v1072 = vpop.xlane.xlu0 %1071
    %1073 = vmax.xlane.f32.xlu0 %v952
    %v1074 = vpop.xlane.xlu0 %1073
    %1075 = vmax.xlane.f32.xlu0 %v957
    %v1076 = vpop.xlane.xlu0 %1075
    %1077 = vmax.xlane.f32.xlu0 %v960
    %v1078 = vpop.xlane.xlu0 %1077
    %1079 = vmax.xlane.f32.xlu0 %v965
    %v1080 = vpop.xlane.xlu0 %1079
    %1081 = vmax.xlane.f32.xlu0 %v968
    %v1082 = vpop.xlane.xlu0 %1081
    %1083 = vmax.xlane.f32.xlu0 %v973
    %v1084 = vpop.xlane.xlu0 %1083
    %1085 = vmax.xlane.f32.xlu0 %v976
    %v1086 = vpop.xlane.xlu0 %1085
    %1087 = vmax.xlane.f32.xlu0 %v981
    %v1088 = vpop.xlane.xlu0 %1087
    %1089 = vmax.xlane.f32.xlu0 %v984
    %v1090 = vpop.xlane.xlu0 %1089
    %1091 = vmax.xlane.f32.xlu0 %v989
    %v1092 = vpop.xlane.xlu0 %1091
    %1093 = vmax.xlane.f32.xlu0 %v992
    %v1094 = vpop.xlane.xlu0 %1093
    %1095 = vmax.xlane.f32.xlu0 %v997
    %v1096 = vpop.xlane.xlu0 %1095
    %1097 = vmax.xlane.f32.xlu0 %v1000
    %v1098 = vpop.xlane.xlu0 %1097
    %v1099 = vsub.f32 %v813, %v1004
    %v1100 = vsub.f32 %v816, %v1006
    %v1101 = vsub.f32 %v821, %v1008
    %v1102 = vsub.f32 %v824, %v1010
    %v1103 = vsub.f32 %v829, %v1012
    %v1104 = vsub.f32 %v832, %v1014
    %v1105 = vsub.f32 %v837, %v1016
    %v1106 = vsub.f32 %v840, %v1018
    %v1107 = vsub.f32 %v845, %v1020
    %v1108 = vsub.f32 %v848, %v1022
    %v1109 = vsub.f32 %v853, %v1024
    %v1110 = vsub.f32 %v856, %v1026
    %v1111 = vsub.f32 %v861, %v1028
    %v1112 = vsub.f32 %v864, %v1030
    %v1113 = vsub.f32 %v869, %v1032
    %v1114 = vsub.f32 %v872, %v1034
    %v1115 = vsub.f32 %v877, %v1036
    %v1116 = vsub.f32 %v880, %v1038
    %v1117 = vsub.f32 %v885, %v1040
    %v1118 = vsub.f32 %v888, %v1042
    %v1119 = vsub.f32 %v893, %v1044
    %v1120 = vsub.f32 %v896, %v1046
    %v1121 = vsub.f32 %v901, %v1048
    %v1122 = vsub.f32 %v904, %v1050
    %v1123 = vsub.f32 %v909, %v1052
    %v1124 = vsub.f32 %v912, %v1054
    %v1125 = vsub.f32 %v917, %v1056
    %v1126 = vsub.f32 %v920, %v1058
    %v1127 = vsub.f32 %v925, %v1060
    %v1128 = vsub.f32 %v928, %v1062
    %v1129 = vsub.f32 %v933, %v1064
    %v1130 = vsub.f32 %v936, %v1066
    %v1131 = vsub.f32 %v941, %v1068
    %v1132 = vsub.f32 %v944, %v1070
    %v1133 = vsub.f32 %v949, %v1072
    %v1134 = vsub.f32 %v952, %v1074
    %v1135 = vsub.f32 %v957, %v1076
    %v1136 = vsub.f32 %v960, %v1078
    %v1137 = vsub.f32 %v965, %v1080
    %v1138 = vsub.f32 %v968, %v1082
    %v1139 = vsub.f32 %v973, %v1084
    %v1140 = vsub.f32 %v976, %v1086
    %v1141 = vsub.f32 %v981, %v1088
    %v1142 = vsub.f32 %v984, %v1090
    %v1143 = vsub.f32 %v989, %v1092
    %v1144 = vsub.f32 %v992, %v1094
    %v1145 = vsub.f32 %v997, %v1096
    %v1146 = vsub.f32 %v1000, %v1098
    %v1147 = vmul.f32 %v1099, 1.442695
    %v1148 = vpow.pop %v1147
    %v1149 = vmul.f32 %v1100, 1.442695
    %v1150 = vpow.pop %v1149
    %v1151 = vmul.f32 %v1101, 1.442695
    %v1152 = vpow.pop %v1151
    %v1153 = vmul.f32 %v1102, 1.442695
    %v1154 = vpow.pop %v1153
    %v1155 = vmul.f32 %v1103, 1.442695
    %v1156 = vpow.pop %v1155
    %v1157 = vmul.f32 %v1104, 1.442695
    %v1158 = vpow.pop %v1157
    %v1159 = vmul.f32 %v1105, 1.442695
    %v1160 = vpow.pop %v1159
    %v1161 = vmul.f32 %v1106, 1.442695
    %v1162 = vpow.pop %v1161
    %v1163 = vmul.f32 %v1107, 1.442695
    %v1164 = vpow.pop %v1163
    %v1165 = vmul.f32 %v1108, 1.442695
    %v1166 = vpow.pop %v1165
    %v1167 = vmul.f32 %v1109, 1.442695
    %v1168 = vpow.pop %v1167
    %v1169 = vmul.f32 %v1110, 1.442695
    %v1170 = vpow.pop %v1169
    %v1171 = vmul.f32 %v1111, 1.442695
    %v1172 = vpow.pop %v1171
    %v1173 = vmul.f32 %v1112, 1.442695
    %v1174 = vpow.pop %v1173
    %v1175 = vmul.f32 %v1113, 1.442695
    %v1176 = vpow.pop %v1175
    %v1177 = vmul.f32 %v1114, 1.442695
    %v1178 = vpow.pop %v1177
    %v1179 = vmul.f32 %v1115, 1.442695
    %v1180 = vpow.pop %v1179
    %v1181 = vmul.f32 %v1116, 1.442695
    %v1182 = vpow.pop %v1181
    %v1183 = vmul.f32 %v1117, 1.442695
    %v1184 = vpow.pop %v1183
    %v1185 = vmul.f32 %v1118, 1.442695
    %v1186 = vpow.pop %v1185
    %v1187 = vmul.f32 %v1119, 1.442695
    %v1188 = vpow.pop %v1187
    %v1189 = vmul.f32 %v1120, 1.442695
    %v1190 = vpow.pop %v1189
    %v1191 = vmul.f32 %v1121, 1.442695
    %v1192 = vpow.pop %v1191
    %v1193 = vmul.f32 %v1122, 1.442695
    %v1194 = vpow.pop %v1193
    %v1195 = vmul.f32 %v1123, 1.442695
    %v1196 = vpow.pop %v1195
    %v1197 = vmul.f32 %v1124, 1.442695
    %v1198 = vpow.pop %v1197
    %v1199 = vmul.f32 %v1125, 1.442695
    %v1200 = vpow.pop %v1199
    %v1201 = vmul.f32 %v1126, 1.442695
    %v1202 = vpow.pop %v1201
    %v1203 = vmul.f32 %v1127, 1.442695
    %v1204 = vpow.pop %v1203
    %v1205 = vmul.f32 %v1128, 1.442695
    %v1206 = vpow.pop %v1205
    %v1207 = vmul.f32 %v1129, 1.442695
    %v1208 = vpow.pop %v1207
    %v1209 = vmul.f32 %v1130, 1.442695
    %v1210 = vpow.pop %v1209
    %v1211 = vmul.f32 %v1131, 1.442695
    %v1212 = vpow.pop %v1211
    %v1213 = vmul.f32 %v1132, 1.442695
    %v1214 = vpow.pop %v1213
    %v1215 = vmul.f32 %v1133, 1.442695
    %v1216 = vpow.pop %v1215
    %v1217 = vmul.f32 %v1134, 1.442695
    %v1218 = vpow.pop %v1217
    %v1219 = vmul.f32 %v1135, 1.442695
    %v1220 = vpow.pop %v1219
    %v1221 = vmul.f32 %v1136, 1.442695
    %v1222 = vpow.pop %v1221
    %v1223 = vmul.f32 %v1137, 1.442695
    %v1224 = vpow.pop %v1223
    %v1225 = vmul.f32 %v1138, 1.442695
    %v1226 = vpow.pop %v1225
    %v1227 = vmul.f32 %v1139, 1.442695
    %v1228 = vpow.pop %v1227
    %v1229 = vmul.f32 %v1140, 1.442695
    %v1230 = vpow.pop %v1229
    %v1231 = vmul.f32 %v1141, 1.442695
    %v1232 = vpow.pop %v1231
    %v1233 = vmul.f32 %v1142, 1.442695
    %v1234 = vpow.pop %v1233
    %v1235 = vmul.f32 %v1143, 1.442695
    %v1236 = vpow.pop %v1235
    %v1237 = vmul.f32 %v1144, 1.442695
    %v1238 = vpow.pop %v1237
    %v1239 = vmul.f32 %v1145, 1.442695
    %v1240 = vpow.pop %v1239
    %v1241 = vmul.f32 %v1146, 1.442695
    %v1242 = vpow.pop %v1241
    %1243 = vadd.xlane.f32.xlu0 %v1148
    %v1244 = vpop.xlane.xlu0 %1243
    %1245 = vadd.xlane.f32.xlu0 %v1150
    %v1246 = vpop.xlane.xlu0 %1245
    %1247 = vadd.xlane.f32.xlu0 %v1152
    %v1248 = vpop.xlane.xlu0 %1247
    %1249 = vadd.xlane.f32.xlu0 %v1154
    %v1250 = vpop.xlane.xlu0 %1249
    %1251 = vadd.xlane.f32.xlu0 %v1156
    %v1252 = vpop.xlane.xlu0 %1251
    %1253 = vadd.xlane.f32.xlu0 %v1158
    %v1254 = vpop.xlane.xlu0 %1253
    %1255 = vadd.xlane.f32.xlu0 %v1160
    %v1256 = vpop.xlane.xlu0 %1255
    %1257 = vadd.xlane.f32.xlu0 %v1162
    %v1258 = vpop.xlane.xlu0 %1257
    %1259 = vadd.xlane.f32.xlu0 %v1164
    %v1260 = vpop.xlane.xlu0 %1259
    %1261 = vadd.xlane.f32.xlu0 %v1166
    %v1262 = vpop.xlane.xlu0 %1261
    %1263 = vadd.xlane.f32.xlu0 %v1168
    %v1264 = vpop.xlane.xlu0 %1263
    %1265 = vadd.xlane.f32.xlu0 %v1170
    %v1266 = vpop.xlane.xlu0 %1265
    %1267 = vadd.xlane.f32.xlu0 %v1172
    %v1268 = vpop.xlane.xlu0 %1267
    %1269 = vadd.xlane.f32.xlu0 %v1174
    %v1270 = vpop.xlane.xlu0 %1269
    %1271 = vadd.xlane.f32.xlu0 %v1176
    %v1272 = vpop.xlane.xlu0 %1271
    %1273 = vadd.xlane.f32.xlu0 %v1178
    %v1274 = vpop.xlane.xlu0 %1273
    %1275 = vadd.xlane.f32.xlu0 %v1180
    %v1276 = vpop.xlane.xlu0 %1275
    %1277 = vadd.xlane.f32.xlu0 %v1182
    %v1278 = vpop.xlane.xlu0 %1277
    %1279 = vadd.xlane.f32.xlu0 %v1184
    %v1280 = vpop.xlane.xlu0 %1279
    %1281 = vadd.xlane.f32.xlu0 %v1186
    %v1282 = vpop.xlane.xlu0 %1281
    %1283 = vadd.xlane.f32.xlu0 %v1188
    %v1284 = vpop.xlane.xlu0 %1283
    %1285 = vadd.xlane.f32.xlu0 %v1190
    %v1286 = vpop.xlane.xlu0 %1285
    %1287 = vadd.xlane.f32.xlu0 %v1192
    %v1288 = vpop.xlane.xlu0 %1287
    %1289 = vadd.xlane.f32.xlu0 %v1194
    %v1290 = vpop.xlane.xlu0 %1289
    %1291 = vadd.xlane.f32.xlu0 %v1196
    %v1292 = vpop.xlane.xlu0 %1291
    %1293 = vadd.xlane.f32.xlu0 %v1198
    %v1294 = vpop.xlane.xlu0 %1293
    %1295 = vadd.xlane.f32.xlu0 %v1200
    %v1296 = vpop.xlane.xlu0 %1295
    %1297 = vadd.xlane.f32.xlu0 %v1202
    %v1298 = vpop.xlane.xlu0 %1297
    %1299 = vadd.xlane.f32.xlu0 %v1204
    %v1300 = vpop.xlane.xlu0 %1299
    %1301 = vadd.xlane.f32.xlu0 %v1206
    %v1302 = vpop.xlane.xlu0 %1301
    %1303 = vadd.xlane.f32.xlu0 %v1208
    %v1304 = vpop.xlane.xlu0 %1303
    %1305 = vadd.xlane.f32.xlu0 %v1210
    %v1306 = vpop.xlane.xlu0 %1305
    %1307 = vadd.xlane.f32.xlu0 %v1212
    %v1308 = vpop.xlane.xlu0 %1307
    %1309 = vadd.xlane.f32.xlu0 %v1214
    %v1310 = vpop.xlane.xlu0 %1309
    %1311 = vadd.xlane.f32.xlu0 %v1216
    %v1312 = vpop.xlane.xlu0 %1311
    %1313 = vadd.xlane.f32.xlu0 %v1218
    %v1314 = vpop.xlane.xlu0 %1313
    %1315 = vadd.xlane.f32.xlu0 %v1220
    %v1316 = vpop.xlane.xlu0 %1315
    %1317 = vadd.xlane.f32.xlu0 %v1222
    %v1318 = vpop.xlane.xlu0 %1317
    %1319 = vadd.xlane.f32.xlu0 %v1224
    %v1320 = vpop.xlane.xlu0 %1319
    %1321 = vadd.xlane.f32.xlu0 %v1226
    %v1322 = vpop.xlane.xlu0 %1321
    %1323 = vadd.xlane.f32.xlu0 %v1228
    %v1324 = vpop.xlane.xlu0 %1323
    %1325 = vadd.xlane.f32.xlu0 %v1230
    %v1326 = vpop.xlane.xlu0 %1325
    %1327 = vadd.xlane.f32.xlu0 %v1232
    %v1328 = vpop.xlane.xlu0 %1327
    %1329 = vadd.xlane.f32.xlu0 %v1234
    %v1330 = vpop.xlane.xlu0 %1329
    %1331 = vadd.xlane.f32.xlu0 %v1236
    %v1332 = vpop.xlane.xlu0 %1331
    %1333 = vadd.xlane.f32.xlu0 %v1238
    %v1334 = vpop.xlane.xlu0 %1333
    %1335 = vadd.xlane.f32.xlu0 %v1240
    %v1336 = vpop.xlane.xlu0 %1335
    %1337 = vadd.xlane.f32.xlu0 %v1242
    %v1338 = vpop.xlane.xlu0 %1337
    %vm1339 = vcmp.eq.f32.partialorder %v813, %v1004
    %vm1340 = vcmp.eq.f32.partialorder %v816, %v1006
    %vm1341 = vcmp.eq.f32.partialorder %v821, %v1008
    %vm1342 = vcmp.eq.f32.partialorder %v824, %v1010
    %vm1343 = vcmp.eq.f32.partialorder %v829, %v1012
    %vm1344 = vcmp.eq.f32.partialorder %v832, %v1014
    %vm1345 = vcmp.eq.f32.partialorder %v837, %v1016
    %vm1346 = vcmp.eq.f32.partialorder %v840, %v1018
    %vm1347 = vcmp.eq.f32.partialorder %v845, %v1020
    %vm1348 = vcmp.eq.f32.partialorder %v848, %v1022
    %vm1349 = vcmp.eq.f32.partialorder %v853, %v1024
    %vm1350 = vcmp.eq.f32.partialorder %v856, %v1026
    %vm1351 = vcmp.eq.f32.partialorder %v861, %v1028
    %vm1352 = vcmp.eq.f32.partialorder %v864, %v1030
    %vm1353 = vcmp.eq.f32.partialorder %v869, %v1032
    %vm1354 = vcmp.eq.f32.partialorder %v872, %v1034
    %vm1355 = vcmp.eq.f32.partialorder %v877, %v1036
    %vm1356 = vcmp.eq.f32.partialorder %v880, %v1038
    %vm1357 = vcmp.eq.f32.partialorder %v885, %v1040
    %vm1358 = vcmp.eq.f32.partialorder %v888, %v1042
    %vm1359 = vcmp.eq.f32.partialorder %v893, %v1044
    %vm1360 = vcmp.eq.f32.partialorder %v896, %v1046
    %vm1361 = vcmp.eq.f32.partialorder %v901, %v1048
    %vm1362 = vcmp.eq.f32.partialorder %v904, %v1050
    %vm1363 = vcmp.eq.f32.partialorder %v909, %v1052
    %vm1364 = vcmp.eq.f32.partialorder %v912, %v1054
    %vm1365 = vcmp.eq.f32.partialorder %v917, %v1056
    %vm1366 = vcmp.eq.f32.partialorder %v920, %v1058
    %vm1367 = vcmp.eq.f32.partialorder %v925, %v1060
    %vm1368 = vcmp.eq.f32.partialorder %v928, %v1062
    %vm1369 = vcmp.eq.f32.partialorder %v933, %v1064
    %vm1370 = vcmp.eq.f32.partialorder %v936, %v1066
    %vm1371 = vcmp.eq.f32.partialorder %v941, %v1068
    %vm1372 = vcmp.eq.f32.partialorder %v944, %v1070
    %vm1373 = vcmp.eq.f32.partialorder %v949, %v1072
    %vm1374 = vcmp.eq.f32.partialorder %v952, %v1074
    %vm1375 = vcmp.eq.f32.partialorder %v957, %v1076
    %vm1376 = vcmp.eq.f32.partialorder %v960, %v1078
    %vm1377 = vcmp.eq.f32.partialorder %v965, %v1080
    %vm1378 = vcmp.eq.f32.partialorder %v968, %v1082
    %vm1379 = vcmp.eq.f32.partialorder %v973, %v1084
    %vm1380 = vcmp.eq.f32.partialorder %v976, %v1086
    %vm1381 = vcmp.eq.f32.partialorder %v981, %v1088
    %vm1382 = vcmp.eq.f32.partialorder %v984, %v1090
    %vm1383 = vcmp.eq.f32.partialorder %v989, %v1092
    %vm1384 = vcmp.eq.f32.partialorder %v992, %v1094
    %vm1385 = vcmp.eq.f32.partialorder %v997, %v1096
    %vm1386 = vcmp.eq.f32.partialorder %v1000, %v1098
    %v1387 = vsel %vm1339, %v74, 128
    %v1388 = vsel %vm1340, %v74, 128
    %v1389 = vsel %vm1341, %v74, 128
    %v1390 = vsel %vm1342, %v74, 128
    %v1391 = vsel %vm1343, %v74, 128
    %v1392 = vsel %vm1344, %v74, 128
    %v1393 = vsel %vm1345, %v74, 128
    %v1394 = vsel %vm1346, %v74, 128
    %v1395 = vsel %vm1347, %v74, 128
    %v1396 = vsel %vm1348, %v74, 128
    %v1397 = vsel %vm1349, %v74, 128
    %v1398 = vsel %vm1350, %v74, 128
    %v1399 = vsel %vm1351, %v74, 128
    %v1400 = vsel %vm1352, %v74, 128
    %v1401 = vsel %vm1353, %v74, 128
    %v1402 = vsel %vm1354, %v74, 128
    %v1403 = vsel %vm1355, %v74, 128
    %v1404 = vsel %vm1356, %v74, 128
    %v1405 = vsel %vm1357, %v74, 128
    %v1406 = vsel %vm1358, %v74, 128
    %v1407 = vsel %vm1359, %v74, 128
    %v1408 = vsel %vm1360, %v74, 128
    %v1409 = vsel %vm1361, %v74, 128
    %v1410 = vsel %vm1362, %v74, 128
    %v1411 = vsel %vm1363, %v74, 128
    %v1412 = vsel %vm1364, %v74, 128
    %v1413 = vsel %vm1365, %v74, 128
    %v1414 = vsel %vm1366, %v74, 128
    %v1415 = vsel %vm1367, %v74, 128
    %v1416 = vsel %vm1368, %v74, 128
    %v1417 = vsel %vm1369, %v74, 128
    %v1418 = vsel %vm1370, %v74, 128
    %v1419 = vsel %vm1371, %v74, 128
    %v1420 = vsel %vm1372, %v74, 128
    %v1421 = vsel %vm1373, %v74, 128
    %v1422 = vsel %vm1374, %v74, 128
    %v1423 = vsel %vm1375, %v74, 128
    %v1424 = vsel %vm1376, %v74, 128
    %v1425 = vsel %vm1377, %v74, 128
    %v1426 = vsel %vm1378, %v74, 128
    %v1427 = vsel %vm1379, %v74, 128
    %v1428 = vsel %vm1380, %v74, 128
    %v1429 = vsel %vm1381, %v74, 128
    %v1430 = vsel %vm1382, %v74, 128
    %v1431 = vsel %vm1383, %v74, 128
    %v1432 = vsel %vm1384, %v74, 128
    %v1433 = vsel %vm1385, %v74, 128
    %v1434 = vsel %vm1386, %v74, 128
    %v1435 = vand.u32 %v1387, 65535
    %v1436 = vshra.s32 %v1387, 16
    %v1437 = vcvt.s32.f32 %v1435
    %v1438 = vcvt.s32.f32 %v1436
    %1439 = vmin.xlane.f32.xlu0 %v1438
    %v1440 = vpop.xlane.xlu0 %1439
    %vm1441 = vcmp.eq.f32.partialorder %v1438, %v1440
    %v1442 = vsel %vm1441, %v1437, inf
    %1443 = vmin.xlane.f32.xlu0 %v1442
    %v1444 = vpop.xlane.xlu0 %1443
    %v1445 = vcvt.f32.s32 %v1444
    %v1446 = vcvt.f32.s32 %v1440
    %v1447 = vshll.u32 %v1446, 16
    %v1448 = vadd.s32 %v1447, %v1445
    %v1449 = vand.u32 %v1388, 65535
    %v1450 = vshra.s32 %v1388, 16
    %v1451 = vcvt.s32.f32 %v1449
    %v1452 = vcvt.s32.f32 %v1450
    %1453 = vmin.xlane.f32.xlu0 %v1452
    %v1454 = vpop.xlane.xlu0 %1453
    %vm1455 = vcmp.eq.f32.partialorder %v1452, %v1454
    %v1456 = vsel %vm1455, %v1451, inf
    %1457 = vmin.xlane.f32.xlu0 %v1456
    %v1458 = vpop.xlane.xlu0 %1457
    %v1459 = vcvt.f32.s32 %v1458
    %v1460 = vcvt.f32.s32 %v1454
    %v1461 = vshll.u32 %v1460, 16
    %v1462 = vadd.s32 %v1461, %v1459
    %v1463 = vand.u32 %v1389, 65535
    %v1464 = vshra.s32 %v1389, 16
    %v1465 = vcvt.s32.f32 %v1463
    %v1466 = vcvt.s32.f32 %v1464
    %1467 = vmin.xlane.f32.xlu0 %v1466
    %v1468 = vpop.xlane.xlu0 %1467
    %vm1469 = vcmp.eq.f32.partialorder %v1466, %v1468
    %v1470 = vsel %vm1469, %v1465, inf
    %1471 = vmin.xlane.f32.xlu0 %v1470
    %v1472 = vpop.xlane.xlu0 %1471
    %v1473 = vcvt.f32.s32 %v1472
    %v1474 = vcvt.f32.s32 %v1468
    %v1475 = vshll.u32 %v1474, 16
    %v1476 = vadd.s32 %v1475, %v1473
    %v1477 = vand.u32 %v1390, 65535
    %v1478 = vshra.s32 %v1390, 16
    %v1479 = vcvt.s32.f32 %v1477
    %v1480 = vcvt.s32.f32 %v1478
    %1481 = vmin.xlane.f32.xlu0 %v1480
    %v1482 = vpop.xlane.xlu0 %1481
    %vm1483 = vcmp.eq.f32.partialorder %v1480, %v1482
    %v1484 = vsel %vm1483, %v1479, inf
    %1485 = vmin.xlane.f32.xlu0 %v1484
    %v1486 = vpop.xlane.xlu0 %1485
    %v1487 = vcvt.f32.s32 %v1486
    %v1488 = vcvt.f32.s32 %v1482
    %v1489 = vshll.u32 %v1488, 16
    %v1490 = vadd.s32 %v1489, %v1487
    %v1491 = vand.u32 %v1391, 65535
    %v1492 = vshra.s32 %v1391, 16
    %v1493 = vcvt.s32.f32 %v1491
    %v1494 = vcvt.s32.f32 %v1492
    %1495 = vmin.xlane.f32.xlu0 %v1494
    %v1496 = vpop.xlane.xlu0 %1495
    %vm1497 = vcmp.eq.f32.partialorder %v1494, %v1496
    %v1498 = vsel %vm1497, %v1493, inf
    %1499 = vmin.xlane.f32.xlu0 %v1498
    %v1500 = vpop.xlane.xlu0 %1499
    %v1501 = vcvt.f32.s32 %v1500
    %v1502 = vcvt.f32.s32 %v1496
    %v1503 = vshll.u32 %v1502, 16
    %v1504 = vadd.s32 %v1503, %v1501
    %v1505 = vand.u32 %v1392, 65535
    %v1506 = vshra.s32 %v1392, 16
    %v1507 = vcvt.s32.f32 %v1505
    %v1508 = vcvt.s32.f32 %v1506
    %1509 = vmin.xlane.f32.xlu0 %v1508
    %v1510 = vpop.xlane.xlu0 %1509
    %vm1511 = vcmp.eq.f32.partialorder %v1508, %v1510
    %v1512 = vsel %vm1511, %v1507, inf
    %1513 = vmin.xlane.f32.xlu0 %v1512
    %v1514 = vpop.xlane.xlu0 %1513
    %v1515 = vcvt.f32.s32 %v1514
    %v1516 = vcvt.f32.s32 %v1510
    %v1517 = vshll.u32 %v1516, 16
    %v1518 = vadd.s32 %v1517, %v1515
    %v1519 = vand.u32 %v1393, 65535
    %v1520 = vshra.s32 %v1393, 16
    %v1521 = vcvt.s32.f32 %v1519
    %v1522 = vcvt.s32.f32 %v1520
    %1523 = vmin.xlane.f32.xlu0 %v1522
    %v1524 = vpop.xlane.xlu0 %1523
    %vm1525 = vcmp.eq.f32.partialorder %v1522, %v1524
    %v1526 = vsel %vm1525, %v1521, inf
    %1527 = vmin.xlane.f32.xlu0 %v1526
    %v1528 = vpop.xlane.xlu0 %1527
    %v1529 = vcvt.f32.s32 %v1528
    %v1530 = vcvt.f32.s32 %v1524
    %v1531 = vshll.u32 %v1530, 16
    %v1532 = vadd.s32 %v1531, %v1529
    %v1533 = vand.u32 %v1394, 65535
    %v1534 = vshra.s32 %v1394, 16
    %v1535 = vcvt.s32.f32 %v1533
    %v1536 = vcvt.s32.f32 %v1534
    %1537 = vmin.xlane.f32.xlu0 %v1536
    %v1538 = vpop.xlane.xlu0 %1537
    %vm1539 = vcmp.eq.f32.partialorder %v1536, %v1538
    %v1540 = vsel %vm1539, %v1535, inf
    %1541 = vmin.xlane.f32.xlu0 %v1540
    %v1542 = vpop.xlane.xlu0 %1541
    %v1543 = vcvt.f32.s32 %v1542
    %v1544 = vcvt.f32.s32 %v1538
    %v1545 = vshll.u32 %v1544, 16
    %v1546 = vadd.s32 %v1545, %v1543
    %v1547 = vand.u32 %v1395, 65535
    %v1548 = vshra.s32 %v1395, 16
    %v1549 = vcvt.s32.f32 %v1547
    %v1550 = vcvt.s32.f32 %v1548
    %1551 = vmin.xlane.f32.xlu0 %v1550
    %v1552 = vpop.xlane.xlu0 %1551
    %vm1553 = vcmp.eq.f32.partialorder %v1550, %v1552
    %v1554 = vsel %vm1553, %v1549, inf
    %1555 = vmin.xlane.f32.xlu0 %v1554
    %v1556 = vpop.xlane.xlu0 %1555
    %v1557 = vcvt.f32.s32 %v1556
    %v1558 = vcvt.f32.s32 %v1552
    %v1559 = vshll.u32 %v1558, 16
    %v1560 = vadd.s32 %v1559, %v1557
    %v1561 = vand.u32 %v1396, 65535
    %v1562 = vshra.s32 %v1396, 16
    %v1563 = vcvt.s32.f32 %v1561
    %v1564 = vcvt.s32.f32 %v1562
    %1565 = vmin.xlane.f32.xlu0 %v1564
    %v1566 = vpop.xlane.xlu0 %1565
    %vm1567 = vcmp.eq.f32.partialorder %v1564, %v1566
    %v1568 = vsel %vm1567, %v1563, inf
    %1569 = vmin.xlane.f32.xlu0 %v1568
    %v1570 = vpop.xlane.xlu0 %1569
    %v1571 = vcvt.f32.s32 %v1570
    %v1572 = vcvt.f32.s32 %v1566
    %v1573 = vshll.u32 %v1572, 16
    %v1574 = vadd.s32 %v1573, %v1571
    %v1575 = vand.u32 %v1397, 65535
    %v1576 = vshra.s32 %v1397, 16
    %v1577 = vcvt.s32.f32 %v1575
    %v1578 = vcvt.s32.f32 %v1576
    %1579 = vmin.xlane.f32.xlu0 %v1578
    %v1580 = vpop.xlane.xlu0 %1579
    %vm1581 = vcmp.eq.f32.partialorder %v1578, %v1580
    %v1582 = vsel %vm1581, %v1577, inf
    %1583 = vmin.xlane.f32.xlu0 %v1582
    %v1584 = vpop.xlane.xlu0 %1583
    %v1585 = vcvt.f32.s32 %v1584
    %v1586 = vcvt.f32.s32 %v1580
    %v1587 = vshll.u32 %v1586, 16
    %v1588 = vadd.s32 %v1587, %v1585
    %v1589 = vand.u32 %v1398, 65535
    %v1590 = vshra.s32 %v1398, 16
    %v1591 = vcvt.s32.f32 %v1589
    %v1592 = vcvt.s32.f32 %v1590
    %1593 = vmin.xlane.f32.xlu0 %v1592
    %v1594 = vpop.xlane.xlu0 %1593
    %vm1595 = vcmp.eq.f32.partialorder %v1592, %v1594
    %v1596 = vsel %vm1595, %v1591, inf
    %1597 = vmin.xlane.f32.xlu0 %v1596
    %v1598 = vpop.xlane.xlu0 %1597
    %v1599 = vcvt.f32.s32 %v1598
    %v1600 = vcvt.f32.s32 %v1594
    %v1601 = vshll.u32 %v1600, 16
    %v1602 = vadd.s32 %v1601, %v1599
    %v1603 = vand.u32 %v1399, 65535
    %v1604 = vshra.s32 %v1399, 16
    %v1605 = vcvt.s32.f32 %v1603
    %v1606 = vcvt.s32.f32 %v1604
    %1607 = vmin.xlane.f32.xlu0 %v1606
    %v1608 = vpop.xlane.xlu0 %1607
    %vm1609 = vcmp.eq.f32.partialorder %v1606, %v1608
    %v1610 = vsel %vm1609, %v1605, inf
    %1611 = vmin.xlane.f32.xlu0 %v1610
    %v1612 = vpop.xlane.xlu0 %1611
    %v1613 = vcvt.f32.s32 %v1612
    %v1614 = vcvt.f32.s32 %v1608
    %v1615 = vshll.u32 %v1614, 16
    %v1616 = vadd.s32 %v1615, %v1613
    %v1617 = vand.u32 %v1400, 65535
    %v1618 = vshra.s32 %v1400, 16
    %v1619 = vcvt.s32.f32 %v1617
    %v1620 = vcvt.s32.f32 %v1618
    %1621 = vmin.xlane.f32.xlu0 %v1620
    %v1622 = vpop.xlane.xlu0 %1621
    %vm1623 = vcmp.eq.f32.partialorder %v1620, %v1622
    %v1624 = vsel %vm1623, %v1619, inf
    %1625 = vmin.xlane.f32.xlu0 %v1624
    %v1626 = vpop.xlane.xlu0 %1625
    %v1627 = vcvt.f32.s32 %v1626
    %v1628 = vcvt.f32.s32 %v1622
    %v1629 = vshll.u32 %v1628, 16
    %v1630 = vadd.s32 %v1629, %v1627
    %v1631 = vand.u32 %v1401, 65535
    %v1632 = vshra.s32 %v1401, 16
    %v1633 = vcvt.s32.f32 %v1631
    %v1634 = vcvt.s32.f32 %v1632
    %1635 = vmin.xlane.f32.xlu0 %v1634
    %v1636 = vpop.xlane.xlu0 %1635
    %vm1637 = vcmp.eq.f32.partialorder %v1634, %v1636
    %v1638 = vsel %vm1637, %v1633, inf
    %1639 = vmin.xlane.f32.xlu0 %v1638
    %v1640 = vpop.xlane.xlu0 %1639
    %v1641 = vcvt.f32.s32 %v1640
    %v1642 = vcvt.f32.s32 %v1636
    %v1643 = vshll.u32 %v1642, 16
    %v1644 = vadd.s32 %v1643, %v1641
    %v1645 = vand.u32 %v1402, 65535
    %v1646 = vshra.s32 %v1402, 16
    %v1647 = vcvt.s32.f32 %v1645
    %v1648 = vcvt.s32.f32 %v1646
    %1649 = vmin.xlane.f32.xlu0 %v1648
    %v1650 = vpop.xlane.xlu0 %1649
    %vm1651 = vcmp.eq.f32.partialorder %v1648, %v1650
    %v1652 = vsel %vm1651, %v1647, inf
    %1653 = vmin.xlane.f32.xlu0 %v1652
    %v1654 = vpop.xlane.xlu0 %1653
    %v1655 = vcvt.f32.s32 %v1654
    %v1656 = vcvt.f32.s32 %v1650
    %v1657 = vshll.u32 %v1656, 16
    %v1658 = vadd.s32 %v1657, %v1655
    %v1659 = vand.u32 %v1403, 65535
    %v1660 = vshra.s32 %v1403, 16
    %v1661 = vcvt.s32.f32 %v1659
    %v1662 = vcvt.s32.f32 %v1660
    %1663 = vmin.xlane.f32.xlu0 %v1662
    %v1664 = vpop.xlane.xlu0 %1663
    %vm1665 = vcmp.eq.f32.partialorder %v1662, %v1664
    %v1666 = vsel %vm1665, %v1661, inf
    %1667 = vmin.xlane.f32.xlu0 %v1666
    %v1668 = vpop.xlane.xlu0 %1667
    %v1669 = vcvt.f32.s32 %v1668
    %v1670 = vcvt.f32.s32 %v1664
    %v1671 = vshll.u32 %v1670, 16
    %v1672 = vadd.s32 %v1671, %v1669
    %v1673 = vand.u32 %v1404, 65535
    %v1674 = vshra.s32 %v1404, 16
    %v1675 = vcvt.s32.f32 %v1673
    %v1676 = vcvt.s32.f32 %v1674
    %1677 = vmin.xlane.f32.xlu0 %v1676
    %v1678 = vpop.xlane.xlu0 %1677
    %vm1679 = vcmp.eq.f32.partialorder %v1676, %v1678
    %v1680 = vsel %vm1679, %v1675, inf
    %1681 = vmin.xlane.f32.xlu0 %v1680
    %v1682 = vpop.xlane.xlu0 %1681
    %v1683 = vcvt.f32.s32 %v1682
    %v1684 = vcvt.f32.s32 %v1678
    %v1685 = vshll.u32 %v1684, 16
    %v1686 = vadd.s32 %v1685, %v1683
    %v1687 = vand.u32 %v1405, 65535
    %v1688 = vshra.s32 %v1405, 16
    %v1689 = vcvt.s32.f32 %v1687
    %v1690 = vcvt.s32.f32 %v1688
    %1691 = vmin.xlane.f32.xlu0 %v1690
    %v1692 = vpop.xlane.xlu0 %1691
    %vm1693 = vcmp.eq.f32.partialorder %v1690, %v1692
    %v1694 = vsel %vm1693, %v1689, inf
    %1695 = vmin.xlane.f32.xlu0 %v1694
    %v1696 = vpop.xlane.xlu0 %1695
    %v1697 = vcvt.f32.s32 %v1696
    %v1698 = vcvt.f32.s32 %v1692
    %v1699 = vshll.u32 %v1698, 16
    %v1700 = vadd.s32 %v1699, %v1697
    %v1701 = vand.u32 %v1406, 65535
    %v1702 = vshra.s32 %v1406, 16
    %v1703 = vcvt.s32.f32 %v1701
    %v1704 = vcvt.s32.f32 %v1702
    %1705 = vmin.xlane.f32.xlu0 %v1704
    %v1706 = vpop.xlane.xlu0 %1705
    %vm1707 = vcmp.eq.f32.partialorder %v1704, %v1706
    %v1708 = vsel %vm1707, %v1703, inf
    %1709 = vmin.xlane.f32.xlu0 %v1708
    %v1710 = vpop.xlane.xlu0 %1709
    %v1711 = vcvt.f32.s32 %v1710
    %v1712 = vcvt.f32.s32 %v1706
    %v1713 = vshll.u32 %v1712, 16
    %v1714 = vadd.s32 %v1713, %v1711
    %v1715 = vand.u32 %v1407, 65535
    %v1716 = vshra.s32 %v1407, 16
    %v1717 = vcvt.s32.f32 %v1715
    %v1718 = vcvt.s32.f32 %v1716
    %1719 = vmin.xlane.f32.xlu0 %v1718
    %v1720 = vpop.xlane.xlu0 %1719
    %vm1721 = vcmp.eq.f32.partialorder %v1718, %v1720
    %v1722 = vsel %vm1721, %v1717, inf
    %1723 = vmin.xlane.f32.xlu0 %v1722
    %v1724 = vpop.xlane.xlu0 %1723
    %v1725 = vcvt.f32.s32 %v1724
    %v1726 = vcvt.f32.s32 %v1720
    %v1727 = vshll.u32 %v1726, 16
    %v1728 = vadd.s32 %v1727, %v1725
    %v1729 = vand.u32 %v1408, 65535
    %v1730 = vshra.s32 %v1408, 16
    %v1731 = vcvt.s32.f32 %v1729
    %v1732 = vcvt.s32.f32 %v1730
    %1733 = vmin.xlane.f32.xlu0 %v1732
    %v1734 = vpop.xlane.xlu0 %1733
    %vm1735 = vcmp.eq.f32.partialorder %v1732, %v1734
    %v1736 = vsel %vm1735, %v1731, inf
    %1737 = vmin.xlane.f32.xlu0 %v1736
    %v1738 = vpop.xlane.xlu0 %1737
    %v1739 = vcvt.f32.s32 %v1738
    %v1740 = vcvt.f32.s32 %v1734
    %v1741 = vshll.u32 %v1740, 16
    %v1742 = vadd.s32 %v1741, %v1739
    %v1743 = vand.u32 %v1409, 65535
    %v1744 = vshra.s32 %v1409, 16
    %v1745 = vcvt.s32.f32 %v1743
    %v1746 = vcvt.s32.f32 %v1744
    %1747 = vmin.xlane.f32.xlu0 %v1746
    %v1748 = vpop.xlane.xlu0 %1747
    %vm1749 = vcmp.eq.f32.partialorder %v1746, %v1748
    %v1750 = vsel %vm1749, %v1745, inf
    %1751 = vmin.xlane.f32.xlu0 %v1750
    %v1752 = vpop.xlane.xlu0 %1751
    %v1753 = vcvt.f32.s32 %v1752
    %v1754 = vcvt.f32.s32 %v1748
    %v1755 = vshll.u32 %v1754, 16
    %v1756 = vadd.s32 %v1755, %v1753
    %v1757 = vand.u32 %v1410, 65535
    %v1758 = vshra.s32 %v1410, 16
    %v1759 = vcvt.s32.f32 %v1757
    %v1760 = vcvt.s32.f32 %v1758
    %1761 = vmin.xlane.f32.xlu0 %v1760
    %v1762 = vpop.xlane.xlu0 %1761
    %vm1763 = vcmp.eq.f32.partialorder %v1760, %v1762
    %v1764 = vsel %vm1763, %v1759, inf
    %1765 = vmin.xlane.f32.xlu0 %v1764
    %v1766 = vpop.xlane.xlu0 %1765
    %v1767 = vcvt.f32.s32 %v1766
    %v1768 = vcvt.f32.s32 %v1762
    %v1769 = vshll.u32 %v1768, 16
    %v1770 = vadd.s32 %v1769, %v1767
    %v1771 = vand.u32 %v1411, 65535
    %v1772 = vshra.s32 %v1411, 16
    %v1773 = vcvt.s32.f32 %v1771
    %v1774 = vcvt.s32.f32 %v1772
    %1775 = vmin.xlane.f32.xlu0 %v1774
    %v1776 = vpop.xlane.xlu0 %1775
    %vm1777 = vcmp.eq.f32.partialorder %v1774, %v1776
    %v1778 = vsel %vm1777, %v1773, inf
    %1779 = vmin.xlane.f32.xlu0 %v1778
    %v1780 = vpop.xlane.xlu0 %1779
    %v1781 = vcvt.f32.s32 %v1780
    %v1782 = vcvt.f32.s32 %v1776
    %v1783 = vshll.u32 %v1782, 16
    %v1784 = vadd.s32 %v1783, %v1781
    %v1785 = vand.u32 %v1412, 65535
    %v1786 = vshra.s32 %v1412, 16
    %v1787 = vcvt.s32.f32 %v1785
    %v1788 = vcvt.s32.f32 %v1786
    %1789 = vmin.xlane.f32.xlu0 %v1788
    %v1790 = vpop.xlane.xlu0 %1789
    %vm1791 = vcmp.eq.f32.partialorder %v1788, %v1790
    %v1792 = vsel %vm1791, %v1787, inf
    %1793 = vmin.xlane.f32.xlu0 %v1792
    %v1794 = vpop.xlane.xlu0 %1793
    %v1795 = vcvt.f32.s32 %v1794
    %v1796 = vcvt.f32.s32 %v1790
    %v1797 = vshll.u32 %v1796, 16
    %v1798 = vadd.s32 %v1797, %v1795
    %v1799 = vand.u32 %v1413, 65535
    %v1800 = vshra.s32 %v1413, 16
    %v1801 = vcvt.s32.f32 %v1799
    %v1802 = vcvt.s32.f32 %v1800
    %1803 = vmin.xlane.f32.xlu0 %v1802
    %v1804 = vpop.xlane.xlu0 %1803
    %vm1805 = vcmp.eq.f32.partialorder %v1802, %v1804
    %v1806 = vsel %vm1805, %v1801, inf
    %1807 = vmin.xlane.f32.xlu0 %v1806
    %v1808 = vpop.xlane.xlu0 %1807
    %v1809 = vcvt.f32.s32 %v1808
    %v1810 = vcvt.f32.s32 %v1804
    %v1811 = vshll.u32 %v1810, 16
    %v1812 = vadd.s32 %v1811, %v1809
    %v1813 = vand.u32 %v1414, 65535
    %v1814 = vshra.s32 %v1414, 16
    %v1815 = vcvt.s32.f32 %v1813
    %v1816 = vcvt.s32.f32 %v1814
    %1817 = vmin.xlane.f32.xlu0 %v1816
    %v1818 = vpop.xlane.xlu0 %1817
    %vm1819 = vcmp.eq.f32.partialorder %v1816, %v1818
    %v1820 = vsel %vm1819, %v1815, inf
    %1821 = vmin.xlane.f32.xlu0 %v1820
    %v1822 = vpop.xlane.xlu0 %1821
    %v1823 = vcvt.f32.s32 %v1822
    %v1824 = vcvt.f32.s32 %v1818
    %v1825 = vshll.u32 %v1824, 16
    %v1826 = vadd.s32 %v1825, %v1823
    %v1827 = vand.u32 %v1415, 65535
    %v1828 = vshra.s32 %v1415, 16
    %v1829 = vcvt.s32.f32 %v1827
    %v1830 = vcvt.s32.f32 %v1828
    %1831 = vmin.xlane.f32.xlu0 %v1830
    %v1832 = vpop.xlane.xlu0 %1831
    %vm1833 = vcmp.eq.f32.partialorder %v1830, %v1832
    %v1834 = vsel %vm1833, %v1829, inf
    %1835 = vmin.xlane.f32.xlu0 %v1834
    %v1836 = vpop.xlane.xlu0 %1835
    %v1837 = vcvt.f32.s32 %v1836
    %v1838 = vcvt.f32.s32 %v1832
    %v1839 = vshll.u32 %v1838, 16
    %v1840 = vadd.s32 %v1839, %v1837
    %v1841 = vand.u32 %v1416, 65535
    %v1842 = vshra.s32 %v1416, 16
    %v1843 = vcvt.s32.f32 %v1841
    %v1844 = vcvt.s32.f32 %v1842
    %1845 = vmin.xlane.f32.xlu0 %v1844
    %v1846 = vpop.xlane.xlu0 %1845
    %vm1847 = vcmp.eq.f32.partialorder %v1844, %v1846
    %v1848 = vsel %vm1847, %v1843, inf
    %1849 = vmin.xlane.f32.xlu0 %v1848
    %v1850 = vpop.xlane.xlu0 %1849
    %v1851 = vcvt.f32.s32 %v1850
    %v1852 = vcvt.f32.s32 %v1846
    %v1853 = vshll.u32 %v1852, 16
    %v1854 = vadd.s32 %v1853, %v1851
    %v1855 = vand.u32 %v1417, 65535
    %v1856 = vshra.s32 %v1417, 16
    %v1857 = vcvt.s32.f32 %v1855
    %v1858 = vcvt.s32.f32 %v1856
    %1859 = vmin.xlane.f32.xlu0 %v1858
    %v1860 = vpop.xlane.xlu0 %1859
    %vm1861 = vcmp.eq.f32.partialorder %v1858, %v1860
    %v1862 = vsel %vm1861, %v1857, inf
    %1863 = vmin.xlane.f32.xlu0 %v1862
    %v1864 = vpop.xlane.xlu0 %1863
    %v1865 = vcvt.f32.s32 %v1864
    %v1866 = vcvt.f32.s32 %v1860
    %v1867 = vshll.u32 %v1866, 16
    %v1868 = vadd.s32 %v1867, %v1865
    %v1869 = vand.u32 %v1418, 65535
    %v1870 = vshra.s32 %v1418, 16
    %v1871 = vcvt.s32.f32 %v1869
    %v1872 = vcvt.s32.f32 %v1870
    %1873 = vmin.xlane.f32.xlu0 %v1872
    %v1874 = vpop.xlane.xlu0 %1873
    %vm1875 = vcmp.eq.f32.partialorder %v1872, %v1874
    %v1876 = vsel %vm1875, %v1871, inf
    %1877 = vmin.xlane.f32.xlu0 %v1876
    %v1878 = vpop.xlane.xlu0 %1877
    %v1879 = vcvt.f32.s32 %v1878
    %v1880 = vcvt.f32.s32 %v1874
    %v1881 = vshll.u32 %v1880, 16
    %v1882 = vadd.s32 %v1881, %v1879
    %v1883 = vand.u32 %v1419, 65535
    %v1884 = vshra.s32 %v1419, 16
    %v1885 = vcvt.s32.f32 %v1883
    %v1886 = vcvt.s32.f32 %v1884
    %1887 = vmin.xlane.f32.xlu0 %v1886
    %v1888 = vpop.xlane.xlu0 %1887
    %vm1889 = vcmp.eq.f32.partialorder %v1886, %v1888
    %v1890 = vsel %vm1889, %v1885, inf
    %1891 = vmin.xlane.f32.xlu0 %v1890
    %v1892 = vpop.xlane.xlu0 %1891
    %v1893 = vcvt.f32.s32 %v1892
    %v1894 = vcvt.f32.s32 %v1888
    %v1895 = vshll.u32 %v1894, 16
    %v1896 = vadd.s32 %v1895, %v1893
    %v1897 = vand.u32 %v1420, 65535
    %v1898 = vshra.s32 %v1420, 16
    %v1899 = vcvt.s32.f32 %v1897
    %v1900 = vcvt.s32.f32 %v1898
    %1901 = vmin.xlane.f32.xlu0 %v1900
    %v1902 = vpop.xlane.xlu0 %1901
    %vm1903 = vcmp.eq.f32.partialorder %v1900, %v1902
    %v1904 = vsel %vm1903, %v1899, inf
    %1905 = vmin.xlane.f32.xlu0 %v1904
    %v1906 = vpop.xlane.xlu0 %1905
    %v1907 = vcvt.f32.s32 %v1906
    %v1908 = vcvt.f32.s32 %v1902
    %v1909 = vshll.u32 %v1908, 16
    %v1910 = vadd.s32 %v1909, %v1907
    %v1911 = vand.u32 %v1421, 65535
    %v1912 = vshra.s32 %v1421, 16
    %v1913 = vcvt.s32.f32 %v1911
    %v1914 = vcvt.s32.f32 %v1912
    %1915 = vmin.xlane.f32.xlu0 %v1914
    %v1916 = vpop.xlane.xlu0 %1915
    %vm1917 = vcmp.eq.f32.partialorder %v1914, %v1916
    %v1918 = vsel %vm1917, %v1913, inf
    %1919 = vmin.xlane.f32.xlu0 %v1918
    %v1920 = vpop.xlane.xlu0 %1919
    %v1921 = vcvt.f32.s32 %v1920
    %v1922 = vcvt.f32.s32 %v1916
    %v1923 = vshll.u32 %v1922, 16
    %v1924 = vadd.s32 %v1923, %v1921
    %v1925 = vand.u32 %v1422, 65535
    %v1926 = vshra.s32 %v1422, 16
    %v1927 = vcvt.s32.f32 %v1925
    %v1928 = vcvt.s32.f32 %v1926
    %1929 = vmin.xlane.f32.xlu0 %v1928
    %v1930 = vpop.xlane.xlu0 %1929
    %vm1931 = vcmp.eq.f32.partialorder %v1928, %v1930
    %v1932 = vsel %vm1931, %v1927, inf
    %1933 = vmin.xlane.f32.xlu0 %v1932
    %v1934 = vpop.xlane.xlu0 %1933
    %v1935 = vcvt.f32.s32 %v1934
    %v1936 = vcvt.f32.s32 %v1930
    %v1937 = vshll.u32 %v1936, 16
    %v1938 = vadd.s32 %v1937, %v1935
    %v1939 = vand.u32 %v1423, 65535
    %v1940 = vshra.s32 %v1423, 16
    %v1941 = vcvt.s32.f32 %v1939
    %v1942 = vcvt.s32.f32 %v1940
    %1943 = vmin.xlane.f32.xlu0 %v1942
    %v1944 = vpop.xlane.xlu0 %1943
    %vm1945 = vcmp.eq.f32.partialorder %v1942, %v1944
    %v1946 = vsel %vm1945, %v1941, inf
    %1947 = vmin.xlane.f32.xlu0 %v1946
    %v1948 = vpop.xlane.xlu0 %1947
    %v1949 = vcvt.f32.s32 %v1948
    %v1950 = vcvt.f32.s32 %v1944
    %v1951 = vshll.u32 %v1950, 16
    %v1952 = vadd.s32 %v1951, %v1949
    %v1953 = vand.u32 %v1424, 65535
    %v1954 = vshra.s32 %v1424, 16
    %v1955 = vcvt.s32.f32 %v1953
    %v1956 = vcvt.s32.f32 %v1954
    %1957 = vmin.xlane.f32.xlu0 %v1956
    %v1958 = vpop.xlane.xlu0 %1957
    %vm1959 = vcmp.eq.f32.partialorder %v1956, %v1958
    %v1960 = vsel %vm1959, %v1955, inf
    %1961 = vmin.xlane.f32.xlu0 %v1960
    %v1962 = vpop.xlane.xlu0 %1961
    %v1963 = vcvt.f32.s32 %v1962
    %v1964 = vcvt.f32.s32 %v1958
    %v1965 = vshll.u32 %v1964, 16
    %v1966 = vadd.s32 %v1965, %v1963
    %v1967 = vand.u32 %v1425, 65535
    %v1968 = vshra.s32 %v1425, 16
    %v1969 = vcvt.s32.f32 %v1967
    %v1970 = vcvt.s32.f32 %v1968
    %1971 = vmin.xlane.f32.xlu0 %v1970
    %v1972 = vpop.xlane.xlu0 %1971
    %vm1973 = vcmp.eq.f32.partialorder %v1970, %v1972
    %v1974 = vsel %vm1973, %v1969, inf
    %1975 = vmin.xlane.f32.xlu0 %v1974
    %v1976 = vpop.xlane.xlu0 %1975
    %v1977 = vcvt.f32.s32 %v1976
    %v1978 = vcvt.f32.s32 %v1972
    %v1979 = vshll.u32 %v1978, 16
    %v1980 = vadd.s32 %v1979, %v1977
    %v1981 = vand.u32 %v1426, 65535
    %v1982 = vshra.s32 %v1426, 16
    %v1983 = vcvt.s32.f32 %v1981
    %v1984 = vcvt.s32.f32 %v1982
    %1985 = vmin.xlane.f32.xlu0 %v1984
    %v1986 = vpop.xlane.xlu0 %1985
    %vm1987 = vcmp.eq.f32.partialorder %v1984, %v1986
    %v1988 = vsel %vm1987, %v1983, inf
    %1989 = vmin.xlane.f32.xlu0 %v1988
    %v1990 = vpop.xlane.xlu0 %1989
    %v1991 = vcvt.f32.s32 %v1990
    %v1992 = vcvt.f32.s32 %v1986
    %v1993 = vshll.u32 %v1992, 16
    %v1994 = vadd.s32 %v1993, %v1991
    %v1995 = vand.u32 %v1427, 65535
    %v1996 = vshra.s32 %v1427, 16
    %v1997 = vcvt.s32.f32 %v1995
    %v1998 = vcvt.s32.f32 %v1996
    %1999 = vmin.xlane.f32.xlu0 %v1998
    %v2000 = vpop.xlane.xlu0 %1999
    %vm2001 = vcmp.eq.f32.partialorder %v1998, %v2000
    %v2002 = vsel %vm2001, %v1997, inf
    %2003 = vmin.xlane.f32.xlu0 %v2002
    %v2004 = vpop.xlane.xlu0 %2003
    %v2005 = vcvt.f32.s32 %v2004
    %v2006 = vcvt.f32.s32 %v2000
    %v2007 = vshll.u32 %v2006, 16
    %v2008 = vadd.s32 %v2007, %v2005
    %v2009 = vand.u32 %v1428, 65535
    %v2010 = vshra.s32 %v1428, 16
    %v2011 = vcvt.s32.f32 %v2009
    %v2012 = vcvt.s32.f32 %v2010
    %2013 = vmin.xlane.f32.xlu0 %v2012
    %v2014 = vpop.xlane.xlu0 %2013
    %vm2015 = vcmp.eq.f32.partialorder %v2012, %v2014
    %v2016 = vsel %vm2015, %v2011, inf
    %2017 = vmin.xlane.f32.xlu0 %v2016
    %v2018 = vpop.xlane.xlu0 %2017
    %v2019 = vcvt.f32.s32 %v2018
    %v2020 = vcvt.f32.s32 %v2014
    %v2021 = vshll.u32 %v2020, 16
    %v2022 = vadd.s32 %v2021, %v2019
    %v2023 = vand.u32 %v1429, 65535
    %v2024 = vshra.s32 %v1429, 16
    %v2025 = vcvt.s32.f32 %v2023
    %v2026 = vcvt.s32.f32 %v2024
    %2027 = vmin.xlane.f32.xlu0 %v2026
    %v2028 = vpop.xlane.xlu0 %2027
    %vm2029 = vcmp.eq.f32.partialorder %v2026, %v2028
    %v2030 = vsel %vm2029, %v2025, inf
    %2031 = vmin.xlane.f32.xlu0 %v2030
    %v2032 = vpop.xlane.xlu0 %2031
    %v2033 = vcvt.f32.s32 %v2032
    %v2034 = vcvt.f32.s32 %v2028
    %v2035 = vshll.u32 %v2034, 16
    %v2036 = vadd.s32 %v2035, %v2033
    %v2037 = vand.u32 %v1430, 65535
    %v2038 = vshra.s32 %v1430, 16
    %v2039 = vcvt.s32.f32 %v2037
    %v2040 = vcvt.s32.f32 %v2038
    %2041 = vmin.xlane.f32.xlu0 %v2040
    %v2042 = vpop.xlane.xlu0 %2041
    %vm2043 = vcmp.eq.f32.partialorder %v2040, %v2042
    %v2044 = vsel %vm2043, %v2039, inf
    %2045 = vmin.xlane.f32.xlu0 %v2044
    %v2046 = vpop.xlane.xlu0 %2045
    %v2047 = vcvt.f32.s32 %v2046
    %v2048 = vcvt.f32.s32 %v2042
    %v2049 = vshll.u32 %v2048, 16
    %v2050 = vadd.s32 %v2049, %v2047
    %v2051 = vand.u32 %v1431, 65535
    %v2052 = vshra.s32 %v1431, 16
    %v2053 = vcvt.s32.f32 %v2051
    %v2054 = vcvt.s32.f32 %v2052
    %2055 = vmin.xlane.f32.xlu0 %v2054
    %v2056 = vpop.xlane.xlu0 %2055
    %vm2057 = vcmp.eq.f32.partialorder %v2054, %v2056
    %v2058 = vsel %vm2057, %v2053, inf
    %2059 = vmin.xlane.f32.xlu0 %v2058
    %v2060 = vpop.xlane.xlu0 %2059
    %v2061 = vcvt.f32.s32 %v2060
    %v2062 = vcvt.f32.s32 %v2056
    %v2063 = vshll.u32 %v2062, 16
    %v2064 = vadd.s32 %v2063, %v2061
    %v2065 = vand.u32 %v1432, 65535
    %v2066 = vshra.s32 %v1432, 16
    %v2067 = vcvt.s32.f32 %v2065
    %v2068 = vcvt.s32.f32 %v2066
    %2069 = vmin.xlane.f32.xlu0 %v2068
    %v2070 = vpop.xlane.xlu0 %2069
    %vm2071 = vcmp.eq.f32.partialorder %v2068, %v2070
    %v2072 = vsel %vm2071, %v2067, inf
    %2073 = vmin.xlane.f32.xlu0 %v2072
    %v2074 = vpop.xlane.xlu0 %2073
    %v2075 = vcvt.f32.s32 %v2074
    %v2076 = vcvt.f32.s32 %v2070
    %v2077 = vshll.u32 %v2076, 16
    %v2078 = vadd.s32 %v2077, %v2075
    %v2079 = vand.u32 %v1433, 65535
    %v2080 = vshra.s32 %v1433, 16
    %v2081 = vcvt.s32.f32 %v2079
    %v2082 = vcvt.s32.f32 %v2080
    %2083 = vmin.xlane.f32.xlu0 %v2082
    %v2084 = vpop.xlane.xlu0 %2083
    %vm2085 = vcmp.eq.f32.partialorder %v2082, %v2084
    %v2086 = vsel %vm2085, %v2081, inf
    %2087 = vmin.xlane.f32.xlu0 %v2086
    %v2088 = vpop.xlane.xlu0 %2087
    %v2089 = vcvt.f32.s32 %v2088
    %v2090 = vcvt.f32.s32 %v2084
    %v2091 = vshll.u32 %v2090, 16
    %v2092 = vadd.s32 %v2091, %v2089
    %v2093 = vand.u32 %v1434, 65535
    %v2094 = vshra.s32 %v1434, 16
    %v2095 = vcvt.s32.f32 %v2093
    %v2096 = vcvt.s32.f32 %v2094
    %2097 = vmin.xlane.f32.xlu0 %v2096
    %v2098 = vpop.xlane.xlu0 %2097
    %vm2099 = vcmp.eq.f32.partialorder %v2096, %v2098
    %v2100 = vsel %vm2099, %v2095, inf
    %2101 = vmin.xlane.f32.xlu0 %v2100
    %v2102 = vpop.xlane.xlu0 %2101
    %v2103 = vcvt.f32.s32 %v2102
    %v2104 = vcvt.f32.s32 %v2098
    %v2105 = vshll.u32 %v2104, 16
    %v2106 = vadd.s32 %v2105, %v2103
    %v2107 = vlaneseq
    %v2108 = vshrl.u32 %v2107, 7
    %v2109 = vsub.s32 %v74, %v2108
    %v2110 = vrot.slane %v1448, %v2109
    %v2111 = vadd.s32 %v74, 4294967288
    %v2112 = vlaneseq
    %v2113 = vshrl.u32 %v2112, 7
    %v2114 = vsub.s32 %v2111, %v2113
    %v2115 = vrot.slane %v1462, %v2114
    %vm2116 = vcmask 130112
    %v2117 = vsel %vm2116, %v2115, %v2110
    %v2118 = vadd.s32 %v74, 4294967280
    %v2119 = vlaneseq
    %v2120 = vshrl.u32 %v2119, 7
    %v2121 = vsub.s32 %v2118, %v2120
    %v2122 = vrot.slane %v1476, %v2121
    %vm2123 = vcmask 195712
    %v2124 = vsel %vm2123, %v2122, %v2117
    %v2125 = vadd.s32 %v74, 4294967272
    %v2126 = vlaneseq
    %v2127 = vshrl.u32 %v2126, 7
    %v2128 = vsub.s32 %v2125, %v2127
    %v2129 = vrot.slane %v1490, %v2128
    %vm2130 = vcmask 261312
    %v2131 = vsel %vm2130, %v2129, %v2124
    %v2132 = vadd.s32 %v74, 4294967264
    %v2133 = vlaneseq
    %v2134 = vshrl.u32 %v2133, 7
    %v2135 = vsub.s32 %v2132, %v2134
    %v2136 = vrot.slane %v1504, %v2135
    %vm2137 = vcmask 326912
    %v2138 = vsel %vm2137, %v2136, %v2131
    %v2139 = vadd.s32 %v74, 4294967256
    %v2140 = vlaneseq
    %v2141 = vshrl.u32 %v2140, 7
    %v2142 = vsub.s32 %v2139, %v2141
    %v2143 = vrot.slane %v1518, %v2142
    %vm2144 = vcmask 392512
    %v2145 = vsel %vm2144, %v2143, %v2138
    %v2146 = vadd.s32 %v74, 4294967248
    %v2147 = vlaneseq
    %v2148 = vshrl.u32 %v2147, 7
    %v2149 = vsub.s32 %v2146, %v2148
    %v2150 = vrot.slane %v1532, %v2149
    %vm2151 = vcmask 458112
    %v2152 = vsel %vm2151, %v2150, %v2145
    %v2153 = vadd.s32 %v74, 4294967240
    %v2154 = vlaneseq
    %v2155 = vshrl.u32 %v2154, 7
    %v2156 = vsub.s32 %v2153, %v2155
    %v2157 = vrot.slane %v1546, %v2156
    %vm2158 = vcmask 523712
    %v2159 = vsel %vm2158, %v2157, %v2152
    %v2160 = vadd.s32 %v74, 4294967232
    %v2161 = vlaneseq
    %v2162 = vshrl.u32 %v2161, 7
    %v2163 = vsub.s32 %v2160, %v2162
    %v2164 = vrot.slane %v1560, %v2163
    %vm2165 = vcmask 589312
    %v2166 = vsel %vm2165, %v2164, %v2159
    %v2167 = vadd.s32 %v74, 4294967224
    %v2168 = vlaneseq
    %v2169 = vshrl.u32 %v2168, 7
    %v2170 = vsub.s32 %v2167, %v2169
    %v2171 = vrot.slane %v1574, %v2170
    %vm2172 = vcmask 654912
    %v2173 = vsel %vm2172, %v2171, %v2166
    %v2174 = vadd.s32 %v74, 4294967216
    %v2175 = vlaneseq
    %v2176 = vshrl.u32 %v2175, 7
    %v2177 = vsub.s32 %v2174, %v2176
    %v2178 = vrot.slane %v1588, %v2177
    %vm2179 = vcmask 720512
    %v2180 = vsel %vm2179, %v2178, %v2173
    %v2181 = vadd.s32 %v74, 4294967208
    %v2182 = vlaneseq
    %v2183 = vshrl.u32 %v2182, 7
    %v2184 = vsub.s32 %v2181, %v2183
    %v2185 = vrot.slane %v1602, %v2184
    %vm2186 = vcmask 786112
    %v2187 = vsel %vm2186, %v2185, %v2180
    %v2188 = vadd.s32 %v74, 4294967200
    %v2189 = vlaneseq
    %v2190 = vshrl.u32 %v2189, 7
    %v2191 = vsub.s32 %v2188, %v2190
    %v2192 = vrot.slane %v1616, %v2191
    %vm2193 = vcmask 851712
    %v2194 = vsel %vm2193, %v2192, %v2187
    %v2195 = vadd.s32 %v74, 4294967192
    %v2196 = vlaneseq
    %v2197 = vshrl.u32 %v2196, 7
    %v2198 = vsub.s32 %v2195, %v2197
    %v2199 = vrot.slane %v1630, %v2198
    %vm2200 = vcmask 917312
    %v2201 = vsel %vm2200, %v2199, %v2194
    %v2202 = vadd.s32 %v74, 4294967184
    %v2203 = vlaneseq
    %v2204 = vshrl.u32 %v2203, 7
    %v2205 = vsub.s32 %v2202, %v2204
    %v2206 = vrot.slane %v1644, %v2205
    %vm2207 = vcmask 982912
    %v2208 = vsel %vm2207, %v2206, %v2201
    %v2209 = vadd.s32 %v74, 4294967176
    %v2210 = vlaneseq
    %v2211 = vshrl.u32 %v2210, 7
    %v2212 = vsub.s32 %v2209, %v2211
    %v2213 = vrot.slane %v1658, %v2212
    %vm2214 = vcmask 1048512
    %v2215 = vsel %vm2214, %v2213, %v2208
    %v2216 = vlaneseq
    %v2217 = vshrl.u32 %v2216, 7
    %v2218 = vsub.s32 %v74, %v2217
    %v2219 = vrot.slane %v1672, %v2218
    %v2220 = vlaneseq
    %v2221 = vshrl.u32 %v2220, 7
    %v2222 = vsub.s32 %v2111, %v2221
    %v2223 = vrot.slane %v1686, %v2222
    %v2224 = vsel %vm2116, %v2223, %v2219
    %v2225 = vlaneseq
    %v2226 = vshrl.u32 %v2225, 7
    %v2227 = vsub.s32 %v2118, %v2226
    %v2228 = vrot.slane %v1700, %v2227
    %v2229 = vsel %vm2123, %v2228, %v2224
    %v2230 = vlaneseq
    %v2231 = vshrl.u32 %v2230, 7
    %v2232 = vsub.s32 %v2125, %v2231
    %v2233 = vrot.slane %v1714, %v2232
    %v2234 = vsel %vm2130, %v2233, %v2229
    %v2235 = vlaneseq
    %v2236 = vshrl.u32 %v2235, 7
    %v2237 = vsub.s32 %v2132, %v2236
    %v2238 = vrot.slane %v1728, %v2237
    %v2239 = vsel %vm2137, %v2238, %v2234
    %v2240 = vlaneseq
    %v2241 = vshrl.u32 %v2240, 7
    %v2242 = vsub.s32 %v2139, %v2241
    %v2243 = vrot.slane %v1742, %v2242
    %v2244 = vsel %vm2144, %v2243, %v2239
    %v2245 = vlaneseq
    %v2246 = vshrl.u32 %v2245, 7
    %v2247 = vsub.s32 %v2146, %v2246
    %v2248 = vrot.slane %v1756, %v2247
    %v2249 = vsel %vm2151, %v2248, %v2244
    %v2250 = vlaneseq
    %v2251 = vshrl.u32 %v2250, 7
    %v2252 = vsub.s32 %v2153, %v2251
    %v2253 = vrot.slane %v1770, %v2252
    %v2254 = vsel %vm2158, %v2253, %v2249
    %v2255 = vlaneseq
    %v2256 = vshrl.u32 %v2255, 7
    %v2257 = vsub.s32 %v2160, %v2256
    %v2258 = vrot.slane %v1784, %v2257
    %v2259 = vsel %vm2165, %v2258, %v2254
    %v2260 = vlaneseq
    %v2261 = vshrl.u32 %v2260, 7
    %v2262 = vsub.s32 %v2167, %v2261
    %v2263 = vrot.slane %v1798, %v2262
    %v2264 = vsel %vm2172, %v2263, %v2259
    %v2265 = vlaneseq
    %v2266 = vshrl.u32 %v2265, 7
    %v2267 = vsub.s32 %v2174, %v2266
    %v2268 = vrot.slane %v1812, %v2267
    %v2269 = vsel %vm2179, %v2268, %v2264
    %v2270 = vlaneseq
    %v2271 = vshrl.u32 %v2270, 7
    %v2272 = vsub.s32 %v2181, %v2271
    %v2273 = vrot.slane %v1826, %v2272
    %v2274 = vsel %vm2186, %v2273, %v2269
    %v2275 = vlaneseq
    %v2276 = vshrl.u32 %v2275, 7
    %v2277 = vsub.s32 %v2188, %v2276
    %v2278 = vrot.slane %v1840, %v2277
    %v2279 = vsel %vm2193, %v2278, %v2274
    %v2280 = vlaneseq
    %v2281 = vshrl.u32 %v2280, 7
    %v2282 = vsub.s32 %v2195, %v2281
    %v2283 = vrot.slane %v1854, %v2282
    %v2284 = vsel %vm2200, %v2283, %v2279
    %v2285 = vlaneseq
    %v2286 = vshrl.u32 %v2285, 7
    %v2287 = vsub.s32 %v2202, %v2286
    %v2288 = vrot.slane %v1868, %v2287
    %v2289 = vsel %vm2207, %v2288, %v2284
    %v2290 = vlaneseq
    %v2291 = vshrl.u32 %v2290, 7
    %v2292 = vsub.s32 %v2209, %v2291
    %v2293 = vrot.slane %v1882, %v2292
    %v2294 = vsel %vm2214, %v2293, %v2289
    %v2295 = vlaneseq
    %v2296 = vshrl.u32 %v2295, 7
    %v2297 = vsub.s32 %v74, %v2296
    %v2298 = vrot.slane %v1896, %v2297
    %v2299 = vlaneseq
    %v2300 = vshrl.u32 %v2299, 7
    %v2301 = vsub.s32 %v2111, %v2300
    %v2302 = vrot.slane %v1910, %v2301
    %v2303 = vsel %vm2116, %v2302, %v2298
    %v2304 = vlaneseq
    %v2305 = vshrl.u32 %v2304, 7
    %v2306 = vsub.s32 %v2118, %v2305
    %v2307 = vrot.slane %v1924, %v2306
    %v2308 = vsel %vm2123, %v2307, %v2303
    %v2309 = vlaneseq
    %v2310 = vshrl.u32 %v2309, 7
    %v2311 = vsub.s32 %v2125, %v2310
    %v2312 = vrot.slane %v1938, %v2311
    %v2313 = vsel %vm2130, %v2312, %v2308
    %v2314 = vlaneseq
    %v2315 = vshrl.u32 %v2314, 7
    %v2316 = vsub.s32 %v2132, %v2315
    %v2317 = vrot.slane %v1952, %v2316
    %v2318 = vsel %vm2137, %v2317, %v2313
    %v2319 = vlaneseq
    %v2320 = vshrl.u32 %v2319, 7
    %v2321 = vsub.s32 %v2139, %v2320
    %v2322 = vrot.slane %v1966, %v2321
    %v2323 = vsel %vm2144, %v2322, %v2318
    %v2324 = vlaneseq
    %v2325 = vshrl.u32 %v2324, 7
    %v2326 = vsub.s32 %v2146, %v2325
    %v2327 = vrot.slane %v1980, %v2326
    %v2328 = vsel %vm2151, %v2327, %v2323
    %v2329 = vlaneseq
    %v2330 = vshrl.u32 %v2329, 7
    %v2331 = vsub.s32 %v2153, %v2330
    %v2332 = vrot.slane %v1994, %v2331
    %v2333 = vsel %vm2158, %v2332, %v2328
    %v2334 = vlaneseq
    %v2335 = vshrl.u32 %v2334, 7
    %v2336 = vsub.s32 %v2160, %v2335
    %v2337 = vrot.slane %v2008, %v2336
    %v2338 = vsel %vm2165, %v2337, %v2333
    %v2339 = vlaneseq
    %v2340 = vshrl.u32 %v2339, 7
    %v2341 = vsub.s32 %v2167, %v2340
    %v2342 = vrot.slane %v2022, %v2341
    %v2343 = vsel %vm2172, %v2342, %v2338
    %v2344 = vlaneseq
    %v2345 = vshrl.u32 %v2344, 7
    %v2346 = vsub.s32 %v2174, %v2345
    %v2347 = vrot.slane %v2036, %v2346
    %v2348 = vsel %vm2179, %v2347, %v2343
    %v2349 = vlaneseq
    %v2350 = vshrl.u32 %v2349, 7
    %v2351 = vsub.s32 %v2181, %v2350
    %v2352 = vrot.slane %v2050, %v2351
    %v2353 = vsel %vm2186, %v2352, %v2348
    %v2354 = vlaneseq
    %v2355 = vshrl.u32 %v2354, 7
    %v2356 = vsub.s32 %v2188, %v2355
    %v2357 = vrot.slane %v2064, %v2356
    %v2358 = vsel %vm2193, %v2357, %v2353
    %v2359 = vlaneseq
    %v2360 = vshrl.u32 %v2359, 7
    %v2361 = vsub.s32 %v2195, %v2360
    %v2362 = vrot.slane %v2078, %v2361
    %v2363 = vsel %vm2200, %v2362, %v2358
    %v2364 = vlaneseq
    %v2365 = vshrl.u32 %v2364, 7
    %v2366 = vsub.s32 %v2202, %v2365
    %v2367 = vrot.slane %v2092, %v2366
    %v2368 = vsel %vm2207, %v2367, %v2363
    %v2369 = vlaneseq
    %v2370 = vshrl.u32 %v2369, 7
    %v2371 = vsub.s32 %v2209, %v2370
    %v2372 = vrot.slane %v2106, %v2371
    %v2373 = vsel %vm2214, %v2372, %v2368
    %vm2374 = vcmask 1041409
    %v2375 = vsel %vm2374, %v2294, %v2215
    %vm2376 = vcmask 1042434
    %v2377 = vsel %vm2376, %v2373, %v2375
    %2378 = vst [vmem:[#allocation2] sm:$0x7] %v2377
    %vm2379 = vcmp.eq.s32.totalorder %v1448, 53
    %vm2380 = vcmp.eq.s32.totalorder %v1462, 53
    %vm2381 = vcmp.eq.s32.totalorder %v1476, 53
    %vm2382 = vcmp.eq.s32.totalorder %v1490, 53
    %vm2383 = vcmp.eq.s32.totalorder %v1504, 53
    %vm2384 = vcmp.eq.s32.totalorder %v1518, 53
    %vm2385 = vcmp.eq.s32.totalorder %v1532, 53
    %vm2386 = vcmp.eq.s32.totalorder %v1546, 53
    %vm2387 = vcmp.eq.s32.totalorder %v1560, 53
    %vm2388 = vcmp.eq.s32.totalorder %v1574, 53
    %vm2389 = vcmp.eq.s32.totalorder %v1588, 53
    %vm2390 = vcmp.eq.s32.totalorder %v1602, 53
    %vm2391 = vcmp.eq.s32.totalorder %v1616, 53
    %vm2392 = vcmp.eq.s32.totalorder %v1630, 53
    %vm2393 = vcmp.eq.s32.totalorder %v1644, 53
    %vm2394 = vcmp.eq.s32.totalorder %v1658, 53
    %vm2395 = vcmp.eq.s32.totalorder %v1672, 53
    %vm2396 = vcmp.eq.s32.totalorder %v1686, 53
    %vm2397 = vcmp.eq.s32.totalorder %v1700, 53
    %vm2398 = vcmp.eq.s32.totalorder %v1714, 53
    %vm2399 = vcmp.eq.s32.totalorder %v1728, 53
    %vm2400 = vcmp.eq.s32.totalorder %v1742, 53
    %vm2401 = vcmp.eq.s32.totalorder %v1756, 53
    %vm2402 = vcmp.eq.s32.totalorder %v1770, 53
    %vm2403 = vcmp.eq.s32.totalorder %v1784, 53
    %vm2404 = vcmp.eq.s32.totalorder %v1798, 53
    %vm2405 = vcmp.eq.s32.totalorder %v1812, 53
    %vm2406 = vcmp.eq.s32.totalorder %v1826, 53
    %vm2407 = vcmp.eq.s32.totalorder %v1840, 53
    %vm2408 = vcmp.eq.s32.totalorder %v1854, 53
    %vm2409 = vcmp.eq.s32.totalorder %v1868, 53
    %vm2410 = vcmp.eq.s32.totalorder %v1882, 53
    %vm2411 = vcmp.eq.s32.totalorder %v1896, 53
    %vm2412 = vcmp.eq.s32.totalorder %v1910, 53
    %vm2413 = vcmp.eq.s32.totalorder %v1924, 53
    %vm2414 = vcmp.eq.s32.totalorder %v1938, 53
    %vm2415 = vcmp.eq.s32.totalorder %v1952, 53
    %vm2416 = vcmp.eq.s32.totalorder %v1966, 53
    %vm2417 = vcmp.eq.s32.totalorder %v1980, 53
    %vm2418 = vcmp.eq.s32.totalorder %v1994, 53
    %vm2419 = vcmp.eq.s32.totalorder %v2008, 53
    %vm2420 = vcmp.eq.s32.totalorder %v2022, 53
    %vm2421 = vcmp.eq.s32.totalorder %v2036, 53
    %vm2422 = vcmp.eq.s32.totalorder %v2050, 53
    %vm2423 = vcmp.eq.s32.totalorder %v2064, 53
    %vm2424 = vcmp.eq.s32.totalorder %v2078, 53
    %vm2425 = vcmp.eq.s32.totalorder %v2092, 53
    %vm2426 = vcmp.eq.s32.totalorder %v2106, 53
    %2428 = vbcast.lane.b32.xlu0 %v74, 256
    %v2429 = vpop.permute.xlu0 %2428
    %s2431 = sor.u32 256, 8
    %2432 = vbcast.lane.b32.xlu0 %v74, %s2431
    %v2433 = vpop.permute.xlu0 %2432
    %s2435 = sor.u32 256, 16
    %2436 = vbcast.lane.b32.xlu0 %v74, %s2435
    %v2437 = vpop.permute.xlu0 %2436
    %s2439 = sor.u32 256, 24
    %2440 = vbcast.lane.b32.xlu0 %v74, %s2439
    %v2441 = vpop.permute.xlu0 %2440
    %s2443 = sor.u32 256, 32
    %2444 = vbcast.lane.b32.xlu0 %v74, %s2443
    %v2445 = vpop.permute.xlu0 %2444
    %s2447 = sor.u32 256, 40
    %2448 = vbcast.lane.b32.xlu0 %v74, %s2447
    %v2449 = vpop.permute.xlu0 %2448
    %s2451 = sor.u32 256, 48
    %2452 = vbcast.lane.b32.xlu0 %v74, %s2451
    %v2453 = vpop.permute.xlu0 %2452
    %s2455 = sor.u32 256, 56
    %2456 = vbcast.lane.b32.xlu0 %v74, %s2455
    %v2457 = vpop.permute.xlu0 %2456
    %s2459 = sor.u32 256, 64
    %2460 = vbcast.lane.b32.xlu0 %v74, %s2459
    %v2461 = vpop.permute.xlu0 %2460
    %s2463 = sor.u32 256, 72
    %2464 = vbcast.lane.b32.xlu0 %v74, %s2463
    %v2465 = vpop.permute.xlu0 %2464
    %s2467 = sor.u32 256, 80
    %2468 = vbcast.lane.b32.xlu0 %v74, %s2467
    %v2469 = vpop.permute.xlu0 %2468
    %s2471 = sor.u32 256, 88
    %2472 = vbcast.lane.b32.xlu0 %v74, %s2471
    %v2473 = vpop.permute.xlu0 %2472
    %s2475 = sor.u32 256, 96
    %2476 = vbcast.lane.b32.xlu0 %v74, %s2475
    %v2477 = vpop.permute.xlu0 %2476
    %s2479 = sor.u32 256, 104
    %2480 = vbcast.lane.b32.xlu0 %v74, %s2479
    %v2481 = vpop.permute.xlu0 %2480
    %s2483 = sor.u32 256, 112
    %2484 = vbcast.lane.b32.xlu0 %v74, %s2483
    %v2485 = vpop.permute.xlu0 %2484
    %s2487 = sor.u32 256, 120
    %2488 = vbcast.lane.b32.xlu0 %v74, %s2487
    %v2489 = vpop.permute.xlu0 %2488
    %v2490 = vsel %vm2379, %v2429, 128
    %v2491 = vsel %vm2380, %v2433, 128
    %v2492 = vsel %vm2381, %v2437, 128
    %v2493 = vsel %vm2382, %v2441, 128
    %v2494 = vsel %vm2383, %v2445, 128
    %v2495 = vsel %vm2384, %v2449, 128
    %v2496 = vsel %vm2385, %v2453, 128
    %v2497 = vsel %vm2386, %v2457, 128
    %v2498 = vsel %vm2387, %v2461, 128
    %v2499 = vsel %vm2388, %v2465, 128
    %v2500 = vsel %vm2389, %v2469, 128
    %v2501 = vsel %vm2390, %v2473, 128
    %v2502 = vsel %vm2391, %v2477, 128
    %v2503 = vsel %vm2392, %v2481, 128
    %v2504 = vsel %vm2393, %v2485, 128
    %v2505 = vsel %vm2394, %v2489, 128
    %v2506 = vsel %vm2395, %v2429, 128
    %v2507 = vsel %vm2396, %v2433, 128
    %v2508 = vsel %vm2397, %v2437, 128
    %v2509 = vsel %vm2398, %v2441, 128
    %v2510 = vsel %vm2399, %v2445, 128
    %v2511 = vsel %vm2400, %v2449, 128
    %v2512 = vsel %vm2401, %v2453, 128
    %v2513 = vsel %vm2402, %v2457, 128
    %v2514 = vsel %vm2403, %v2461, 128
    %v2515 = vsel %vm2404, %v2465, 128
    %v2516 = vsel %vm2405, %v2469, 128
    %v2517 = vsel %vm2406, %v2473, 128
    %v2518 = vsel %vm2407, %v2477, 128
    %v2519 = vsel %vm2408, %v2481, 128
    %v2520 = vsel %vm2409, %v2485, 128
    %v2521 = vsel %vm2410, %v2489, 128
    %v2522 = vsel %vm2411, %v2429, 128
    %v2523 = vsel %vm2412, %v2433, 128
    %v2524 = vsel %vm2413, %v2437, 128
    %v2525 = vsel %vm2414, %v2441, 128
    %v2526 = vsel %vm2415, %v2445, 128
    %v2527 = vsel %vm2416, %v2449, 128
    %v2528 = vsel %vm2417, %v2453, 128
    %v2529 = vsel %vm2418, %v2457, 128
    %v2530 = vsel %vm2419, %v2461, 128
    %v2531 = vsel %vm2420, %v2465, 128
    %v2532 = vsel %vm2421, %v2469, 128
    %v2533 = vsel %vm2422, %v2473, 128
    %v2534 = vsel %vm2423, %v2477, 128
    %v2535 = vsel %vm2424, %v2481, 128
    %v2536 = vsel %vm2425, %v2485, 128
    %v2537 = vsel %vm2426, %v2489, 128
    %2538 = vset.pattern.permute.xlu0 0
    %2539 = vperm.xlu0 %2538, %v2490
    %v2540 = vpop.permute.xlu0 %2539
    %2541 = vset.pattern.permute.xlu0 0
    %2542 = vperm.xlu0 %2541, %v2491
    %v2543 = vpop.permute.xlu0 %2542
    %2544 = vset.pattern.permute.xlu0 0
    %2545 = vperm.xlu0 %2544, %v2492
    %v2546 = vpop.permute.xlu0 %2545
    %2547 = vset.pattern.permute.xlu0 0
    %2548 = vperm.xlu0 %2547, %v2493
    %v2549 = vpop.permute.xlu0 %2548
    %2550 = vset.pattern.permute.xlu0 0
    %2551 = vperm.xlu0 %2550, %v2494
    %v2552 = vpop.permute.xlu0 %2551
    %2553 = vset.pattern.permute.xlu0 0
    %2554 = vperm.xlu0 %2553, %v2495
    %v2555 = vpop.permute.xlu0 %2554
    %2556 = vset.pattern.permute.xlu0 0
    %2557 = vperm.xlu0 %2556, %v2496
    %v2558 = vpop.permute.xlu0 %2557
    %2559 = vset.pattern.permute.xlu0 0
    %2560 = vperm.xlu0 %2559, %v2497
    %v2561 = vpop.permute.xlu0 %2560
    %2562 = vset.pattern.permute.xlu0 0
    %2563 = vperm.xlu0 %2562, %v2498
    %v2564 = vpop.permute.xlu0 %2563
    %2565 = vset.pattern.permute.xlu0 0
    %2566 = vperm.xlu0 %2565, %v2499
    %v2567 = vpop.permute.xlu0 %2566
    %2568 = vset.pattern.permute.xlu0 0
    %2569 = vperm.xlu0 %2568, %v2500
    %v2570 = vpop.permute.xlu0 %2569
    %2571 = vset.pattern.permute.xlu0 0
    %2572 = vperm.xlu0 %2571, %v2501
    %v2573 = vpop.permute.xlu0 %2572
    %2574 = vset.pattern.permute.xlu0 0
    %2575 = vperm.xlu0 %2574, %v2502
    %v2576 = vpop.permute.xlu0 %2575
    %2577 = vset.pattern.permute.xlu0 0
    %2578 = vperm.xlu0 %2577, %v2503
    %v2579 = vpop.permute.xlu0 %2578
    %2580 = vset.pattern.permute.xlu0 0
    %2581 = vperm.xlu0 %2580, %v2504
    %v2582 = vpop.permute.xlu0 %2581
    %2583 = vset.pattern.permute.xlu0 0
    %2584 = vperm.xlu0 %2583, %v2505
    %v2585 = vpop.permute.xlu0 %2584
    %2586 = vset.pattern.permute.xlu0 0
    %2587 = vperm.xlu0 %2586, %v2506
    %v2588 = vpop.permute.xlu0 %2587
    %2589 = vset.pattern.permute.xlu0 0
    %2590 = vperm.xlu0 %2589, %v2507
    %v2591 = vpop.permute.xlu0 %2590
    %2592 = vset.pattern.permute.xlu0 0
    %2593 = vperm.xlu0 %2592, %v2508
    %v2594 = vpop.permute.xlu0 %2593
    %2595 = vset.pattern.permute.xlu0 0
    %2596 = vperm.xlu0 %2595, %v2509
    %v2597 = vpop.permute.xlu0 %2596
    %2598 = vset.pattern.permute.xlu0 0
    %2599 = vperm.xlu0 %2598, %v2510
    %v2600 = vpop.permute.xlu0 %2599
    %2601 = vset.pattern.permute.xlu0 0
    %2602 = vperm.xlu0 %2601, %v2511
    %v2603 = vpop.permute.xlu0 %2602
    %2604 = vset.pattern.permute.xlu0 0
    %2605 = vperm.xlu0 %2604, %v2512
    %v2606 = vpop.permute.xlu0 %2605
    %2607 = vset.pattern.permute.xlu0 0
    %2608 = vperm.xlu0 %2607, %v2513
    %v2609 = vpop.permute.xlu0 %2608
    %2610 = vset.pattern.permute.xlu0 0
    %2611 = vperm.xlu0 %2610, %v2514
    %v2612 = vpop.permute.xlu0 %2611
    %2613 = vset.pattern.permute.xlu0 0
    %2614 = vperm.xlu0 %2613, %v2515
    %v2615 = vpop.permute.xlu0 %2614
    %2616 = vset.pattern.permute.xlu0 0
    %2617 = vperm.xlu0 %2616, %v2516
    %v2618 = vpop.permute.xlu0 %2617
    %2619 = vset.pattern.permute.xlu0 0
    %2620 = vperm.xlu0 %2619, %v2517
    %v2621 = vpop.permute.xlu0 %2620
    %2622 = vset.pattern.permute.xlu0 0
    %2623 = vperm.xlu0 %2622, %v2518
    %v2624 = vpop.permute.xlu0 %2623
    %2625 = vset.pattern.permute.xlu0 0
    %2626 = vperm.xlu0 %2625, %v2519
    %v2627 = vpop.permute.xlu0 %2626
    %2628 = vset.pattern.permute.xlu0 0
    %2629 = vperm.xlu0 %2628, %v2520
    %v2630 = vpop.permute.xlu0 %2629
    %2631 = vset.pattern.permute.xlu0 0
    %2632 = vperm.xlu0 %2631, %v2521
    %v2633 = vpop.permute.xlu0 %2632
    %2634 = vset.pattern.permute.xlu0 0
    %2635 = vperm.xlu0 %2634, %v2522
    %v2636 = vpop.permute.xlu0 %2635
    %2637 = vset.pattern.permute.xlu0 0
    %2638 = vperm.xlu0 %2637, %v2523
    %v2639 = vpop.permute.xlu0 %2638
    %2640 = vset.pattern.permute.xlu0 0
    %2641 = vperm.xlu0 %2640, %v2524
    %v2642 = vpop.permute.xlu0 %2641
    %2643 = vset.pattern.permute.xlu0 0
    %2644 = vperm.xlu0 %2643, %v2525
    %v2645 = vpop.permute.xlu0 %2644
    %2646 = vset.pattern.permute.xlu0 0
    %2647 = vperm.xlu0 %2646, %v2526
    %v2648 = vpop.permute.xlu0 %2647
    %2649 = vset.pattern.permute.xlu0 0
    %2650 = vperm.xlu0 %2649, %v2527
    %v2651 = vpop.permute.xlu0 %2650
    %2652 = vset.pattern.permute.xlu0 0
    %2653 = vperm.xlu0 %2652, %v2528
    %v2654 = vpop.permute.xlu0 %2653
    %2655 = vset.pattern.permute.xlu0 0
    %2656 = vperm.xlu0 %2655, %v2529
    %v2657 = vpop.permute.xlu0 %2656
    %2658 = vset.pattern.permute.xlu0 0
    %2659 = vperm.xlu0 %2658, %v2530
    %v2660 = vpop.permute.xlu0 %2659
    %2661 = vset.pattern.permute.xlu0 0
    %2662 = vperm.xlu0 %2661, %v2531
    %v2663 = vpop.permute.xlu0 %2662
    %2664 = vset.pattern.permute.xlu0 0
    %2665 = vperm.xlu0 %2664, %v2532
    %v2666 = vpop.permute.xlu0 %2665
    %2667 = vset.pattern.permute.xlu0 0
    %2668 = vperm.xlu0 %2667, %v2533
    %v2669 = vpop.permute.xlu0 %2668
    %2670 = vset.pattern.permute.xlu0 0
    %2671 = vperm.xlu0 %2670, %v2534
    %v2672 = vpop.permute.xlu0 %2671
    %2673 = vset.pattern.permute.xlu0 0
    %2674 = vperm.xlu0 %2673, %v2535
    %v2675 = vpop.permute.xlu0 %2674
    %2676 = vset.pattern.permute.xlu0 0
    %2677 = vperm.xlu0 %2676, %v2536
    %v2678 = vpop.permute.xlu0 %2677
    %2679 = vset.pattern.permute.xlu0 0
    %2680 = vperm.xlu0 %2679, %v2537
    %v2681 = vpop.permute.xlu0 %2680
    %v2682 = vlaneseq
    %v2683 = vshrl.u32 %v2682, 7
    %v2684 = vsub.s32 %v74, %v2683
    %v2685 = vrot.slane %v2540, %v2684
    %v2686 = vlaneseq
    %v2687 = vshrl.u32 %v2686, 7
    %v2688 = vsub.s32 %v2111, %v2687
    %v2689 = vrot.slane %v2543, %v2688
    %v2690 = vsel %vm2116, %v2689, %v2685
    %v2691 = vlaneseq
    %v2692 = vshrl.u32 %v2691, 7
    %v2693 = vsub.s32 %v2118, %v2692
    %v2694 = vrot.slane %v2546, %v2693
    %v2695 = vsel %vm2123, %v2694, %v2690
    %v2696 = vlaneseq
    %v2697 = vshrl.u32 %v2696, 7
    %v2698 = vsub.s32 %v2125, %v2697
    %v2699 = vrot.slane %v2549, %v2698
    %v2700 = vsel %vm2130, %v2699, %v2695
    %v2701 = vlaneseq
    %v2702 = vshrl.u32 %v2701, 7
    %v2703 = vsub.s32 %v2132, %v2702
    %v2704 = vrot.slane %v2552, %v2703
    %v2705 = vsel %vm2137, %v2704, %v2700
    %v2706 = vlaneseq
    %v2707 = vshrl.u32 %v2706, 7
    %v2708 = vsub.s32 %v2139, %v2707
    %v2709 = vrot.slane %v2555, %v2708
    %v2710 = vsel %vm2144, %v2709, %v2705
    %v2711 = vlaneseq
    %v2712 = vshrl.u32 %v2711, 7
    %v2713 = vsub.s32 %v2146, %v2712
    %v2714 = vrot.slane %v2558, %v2713
    %v2715 = vsel %vm2151, %v2714, %v2710
    %v2716 = vlaneseq
    %v2717 = vshrl.u32 %v2716, 7
    %v2718 = vsub.s32 %v2153, %v2717
    %v2719 = vrot.slane %v2561, %v2718
    %v2720 = vsel %vm2158, %v2719, %v2715
    %v2721 = vlaneseq
    %v2722 = vshrl.u32 %v2721, 7
    %v2723 = vsub.s32 %v2160, %v2722
    %v2724 = vrot.slane %v2564, %v2723
    %v2725 = vsel %vm2165, %v2724, %v2720
    %v2726 = vlaneseq
    %v2727 = vshrl.u32 %v2726, 7
    %v2728 = vsub.s32 %v2167, %v2727
    %v2729 = vrot.slane %v2567, %v2728
    %v2730 = vsel %vm2172, %v2729, %v2725
    %v2731 = vlaneseq
    %v2732 = vshrl.u32 %v2731, 7
    %v2733 = vsub.s32 %v2174, %v2732
    %v2734 = vrot.slane %v2570, %v2733
    %v2735 = vsel %vm2179, %v2734, %v2730
    %v2736 = vlaneseq
    %v2737 = vshrl.u32 %v2736, 7
    %v2738 = vsub.s32 %v2181, %v2737
    %v2739 = vrot.slane %v2573, %v2738
    %v2740 = vsel %vm2186, %v2739, %v2735
    %v2741 = vlaneseq
    %v2742 = vshrl.u32 %v2741, 7
    %v2743 = vsub.s32 %v2188, %v2742
    %v2744 = vrot.slane %v2576, %v2743
    %v2745 = vsel %vm2193, %v2744, %v2740
    %v2746 = vlaneseq
    %v2747 = vshrl.u32 %v2746, 7
    %v2748 = vsub.s32 %v2195, %v2747
    %v2749 = vrot.slane %v2579, %v2748
    %v2750 = vsel %vm2200, %v2749, %v2745
    %v2751 = vlaneseq
    %v2752 = vshrl.u32 %v2751, 7
    %v2753 = vsub.s32 %v2202, %v2752
    %v2754 = vrot.slane %v2582, %v2753
    %v2755 = vsel %vm2207, %v2754, %v2750
    %v2756 = vlaneseq
    %v2757 = vshrl.u32 %v2756, 7
    %v2758 = vsub.s32 %v2209, %v2757
    %v2759 = vrot.slane %v2585, %v2758
    %v2760 = vsel %vm2214, %v2759, %v2755
    %v2761 = vlaneseq
    %v2762 = vshrl.u32 %v2761, 7
    %v2763 = vsub.s32 %v74, %v2762
    %v2764 = vrot.slane %v2588, %v2763
    %v2765 = vlaneseq
    %v2766 = vshrl.u32 %v2765, 7
    %v2767 = vsub.s32 %v2111, %v2766
    %v2768 = vrot.slane %v2591, %v2767
    %v2769 = vsel %vm2116, %v2768, %v2764
    %v2770 = vlaneseq
    %v2771 = vshrl.u32 %v2770, 7
    %v2772 = vsub.s32 %v2118, %v2771
    %v2773 = vrot.slane %v2594, %v2772
    %v2774 = vsel %vm2123, %v2773, %v2769
    %v2775 = vlaneseq
    %v2776 = vshrl.u32 %v2775, 7
    %v2777 = vsub.s32 %v2125, %v2776
    %v2778 = vrot.slane %v2597, %v2777
    %v2779 = vsel %vm2130, %v2778, %v2774
    %v2780 = vlaneseq
    %v2781 = vshrl.u32 %v2780, 7
    %v2782 = vsub.s32 %v2132, %v2781
    %v2783 = vrot.slane %v2600, %v2782
    %v2784 = vsel %vm2137, %v2783, %v2779
    %v2785 = vlaneseq
    %v2786 = vshrl.u32 %v2785, 7
    %v2787 = vsub.s32 %v2139, %v2786
    %v2788 = vrot.slane %v2603, %v2787
    %v2789 = vsel %vm2144, %v2788, %v2784
    %v2790 = vlaneseq
    %v2791 = vshrl.u32 %v2790, 7
    %v2792 = vsub.s32 %v2146, %v2791
    %v2793 = vrot.slane %v2606, %v2792
    %v2794 = vsel %vm2151, %v2793, %v2789
    %v2795 = vlaneseq
    %v2796 = vshrl.u32 %v2795, 7
    %v2797 = vsub.s32 %v2153, %v2796
    %v2798 = vrot.slane %v2609, %v2797
    %v2799 = vsel %vm2158, %v2798, %v2794
    %v2800 = vlaneseq
    %v2801 = vshrl.u32 %v2800, 7
    %v2802 = vsub.s32 %v2160, %v2801
    %v2803 = vrot.slane %v2612, %v2802
    %v2804 = vsel %vm2165, %v2803, %v2799
    %v2805 = vlaneseq
    %v2806 = vshrl.u32 %v2805, 7
    %v2807 = vsub.s32 %v2167, %v2806
    %v2808 = vrot.slane %v2615, %v2807
    %v2809 = vsel %vm2172, %v2808, %v2804
    %v2810 = vlaneseq
    %v2811 = vshrl.u32 %v2810, 7
    %v2812 = vsub.s32 %v2174, %v2811
    %v2813 = vrot.slane %v2618, %v2812
    %v2814 = vsel %vm2179, %v2813, %v2809
    %v2815 = vlaneseq
    %v2816 = vshrl.u32 %v2815, 7
    %v2817 = vsub.s32 %v2181, %v2816
    %v2818 = vrot.slane %v2621, %v2817
    %v2819 = vsel %vm2186, %v2818, %v2814
    %v2820 = vlaneseq
    %v2821 = vshrl.u32 %v2820, 7
    %v2822 = vsub.s32 %v2188, %v2821
    %v2823 = vrot.slane %v2624, %v2822
    %v2824 = vsel %vm2193, %v2823, %v2819
    %v2825 = vlaneseq
    %v2826 = vshrl.u32 %v2825, 7
    %v2827 = vsub.s32 %v2195, %v2826
    %v2828 = vrot.slane %v2627, %v2827
    %v2829 = vsel %vm2200, %v2828, %v2824
    %v2830 = vlaneseq
    %v2831 = vshrl.u32 %v2830, 7
    %v2832 = vsub.s32 %v2202, %v2831
    %v2833 = vrot.slane %v2630, %v2832
    %v2834 = vsel %vm2207, %v2833, %v2829
    %v2835 = vlaneseq
    %v2836 = vshrl.u32 %v2835, 7
    %v2837 = vsub.s32 %v2209, %v2836
    %v2838 = vrot.slane %v2633, %v2837
    %v2839 = vsel %vm2214, %v2838, %v2834
    %v2840 = vlaneseq
    %v2841 = vshrl.u32 %v2840, 7
    %v2842 = vsub.s32 %v74, %v2841
    %v2843 = vrot.slane %v2636, %v2842
    %v2844 = vlaneseq
    %v2845 = vshrl.u32 %v2844, 7
    %v2846 = vsub.s32 %v2111, %v2845
    %v2847 = vrot.slane %v2639, %v2846
    %v2848 = vsel %vm2116, %v2847, %v2843
    %v2849 = vlaneseq
    %v2850 = vshrl.u32 %v2849, 7
    %v2851 = vsub.s32 %v2118, %v2850
    %v2852 = vrot.slane %v2642, %v2851
    %v2853 = vsel %vm2123, %v2852, %v2848
    %v2854 = vlaneseq
    %v2855 = vshrl.u32 %v2854, 7
    %v2856 = vsub.s32 %v2125, %v2855
    %v2857 = vrot.slane %v2645, %v2856
    %v2858 = vsel %vm2130, %v2857, %v2853
    %v2859 = vlaneseq
    %v2860 = vshrl.u32 %v2859, 7
    %v2861 = vsub.s32 %v2132, %v2860
    %v2862 = vrot.slane %v2648, %v2861
    %v2863 = vsel %vm2137, %v2862, %v2858
    %v2864 = vlaneseq
    %v2865 = vshrl.u32 %v2864, 7
    %v2866 = vsub.s32 %v2139, %v2865
    %v2867 = vrot.slane %v2651, %v2866
    %v2868 = vsel %vm2144, %v2867, %v2863
    %v2869 = vlaneseq
    %v2870 = vshrl.u32 %v2869, 7
    %v2871 = vsub.s32 %v2146, %v2870
    %v2872 = vrot.slane %v2654, %v2871
    %v2873 = vsel %vm2151, %v2872, %v2868
    %v2874 = vlaneseq
    %v2875 = vshrl.u32 %v2874, 7
    %v2876 = vsub.s32 %v2153, %v2875
    %v2877 = vrot.slane %v2657, %v2876
    %v2878 = vsel %vm2158, %v2877, %v2873
    %v2879 = vlaneseq
    %v2880 = vshrl.u32 %v2879, 7
    %v2881 = vsub.s32 %v2160, %v2880
    %v2882 = vrot.slane %v2660, %v2881
    %v2883 = vsel %vm2165, %v2882, %v2878
    %v2884 = vlaneseq
    %v2885 = vshrl.u32 %v2884, 7
    %v2886 = vsub.s32 %v2167, %v2885
    %v2887 = vrot.slane %v2663, %v2886
    %v2888 = vsel %vm2172, %v2887, %v2883
    %v2889 = vlaneseq
    %v2890 = vshrl.u32 %v2889, 7
    %v2891 = vsub.s32 %v2174, %v2890
    %v2892 = vrot.slane %v2666, %v2891
    %v2893 = vsel %vm2179, %v2892, %v2888
    %v2894 = vlaneseq
    %v2895 = vshrl.u32 %v2894, 7
    %v2896 = vsub.s32 %v2181, %v2895
    %v2897 = vrot.slane %v2669, %v2896
    %v2898 = vsel %vm2186, %v2897, %v2893
    %v2899 = vlaneseq
    %v2900 = vshrl.u32 %v2899, 7
    %v2901 = vsub.s32 %v2188, %v2900
    %v2902 = vrot.slane %v2672, %v2901
    %v2903 = vsel %vm2193, %v2902, %v2898
    %v2904 = vlaneseq
    %v2905 = vshrl.u32 %v2904, 7
    %v2906 = vsub.s32 %v2195, %v2905
    %v2907 = vrot.slane %v2675, %v2906
    %v2908 = vsel %vm2200, %v2907, %v2903
    %v2909 = vlaneseq
    %v2910 = vshrl.u32 %v2909, 7
    %v2911 = vsub.s32 %v2202, %v2910
    %v2912 = vrot.slane %v2678, %v2911
    %v2913 = vsel %vm2207, %v2912, %v2908
    %v2914 = vlaneseq
    %v2915 = vshrl.u32 %v2914, 7
    %v2916 = vsub.s32 %v2209, %v2915
    %v2917 = vrot.slane %v2681, %v2916
    %v2918 = vsel %vm2214, %v2917, %v2913
    %v2919 = vsel %vm2374, %v2839, %v2760
    %v2920 = vsel %vm2376, %v2918, %v2919
    %vm2921 = vcmask 1042432
    %v2922 = vsel %vm2921, %v2920, 2147483647
    %v2923 = vand.u32 %v2922, 65535
    %v2924 = vshra.s32 %v2922, 16
    %v2925 = vcvt.s32.f32 %v2923
    %v2926 = vcvt.s32.f32 %v2924
    %2927 = vmin.xlane.f32.xlu0 %v2926
    %v2928 = vpop.xlane.xlu0 %2927
    %vm2929 = vcmp.eq.f32.partialorder %v2926, %v2928
    %v2930 = vsel %vm2929, %v2925, inf
    %2931 = vmin.xlane.f32.xlu0 %v2930
    %v2932 = vpop.xlane.xlu0 %2931
    %v2933 = vcvt.f32.s32 %v2932
    %v2934 = vcvt.f32.s32 %v2928
    %v2935 = vshll.u32 %v2934, 16
    %v2936 = vadd.s32 %v2935, %v2933
    %vm2937 = vcmp.le.s32.totalorder %v74, %v2936
    %vm2938 = vcmp.lt.s32.totalorder %v74, 55
    %vm2939 = vmand %vm2937, %vm2938
    %v2940 = vlog2.pop %v1244
    %v2941 = vmul.f32 %v2940, 0.6931472
    %v2942 = vlog2.pop %v1246
    %v2943 = vmul.f32 %v2942, 0.6931472
    %v2944 = vlog2.pop %v1248
    %v2945 = vmul.f32 %v2944, 0.6931472
    %v2946 = vlog2.pop %v1250
    %v2947 = vmul.f32 %v2946, 0.6931472
    %v2948 = vlog2.pop %v1252
    %v2949 = vmul.f32 %v2948, 0.6931472
    %v2950 = vlog2.pop %v1254
    %v2951 = vmul.f32 %v2950, 0.6931472
    %v2952 = vlog2.pop %v1256
    %v2953 = vmul.f32 %v2952, 0.6931472
    %v2954 = vlog2.pop %v1258
    %v2955 = vmul.f32 %v2954, 0.6931472
    %v2956 = vlog2.pop %v1260
    %v2957 = vmul.f32 %v2956, 0.6931472
    %v2958 = vlog2.pop %v1262
    %v2959 = vmul.f32 %v2958, 0.6931472
    %v2960 = vlog2.pop %v1264
    %v2961 = vmul.f32 %v2960, 0.6931472
    %v2962 = vlog2.pop %v1266
    %v2963 = vmul.f32 %v2962, 0.6931472
    %v2964 = vlog2.pop %v1268
    %v2965 = vmul.f32 %v2964, 0.6931472
    %v2966 = vlog2.pop %v1270
    %v2967 = vmul.f32 %v2966, 0.6931472
    %v2968 = vlog2.pop %v1272
    %v2969 = vmul.f32 %v2968, 0.6931472
    %v2970 = vlog2.pop %v1274
    %v2971 = vmul.f32 %v2970, 0.6931472
    %v2972 = vlog2.pop %v1276
    %v2973 = vmul.f32 %v2972, 0.6931472
    %v2974 = vlog2.pop %v1278
    %v2975 = vmul.f32 %v2974, 0.6931472
    %v2976 = vlog2.pop %v1280
    %v2977 = vmul.f32 %v2976, 0.6931472
    %v2978 = vlog2.pop %v1282
    %v2979 = vmul.f32 %v2978, 0.6931472
    %v2980 = vlog2.pop %v1284
    %v2981 = vmul.f32 %v2980, 0.6931472
    %v2982 = vlog2.pop %v1286
    %v2983 = vmul.f32 %v2982, 0.6931472
    %v2984 = vlog2.pop %v1288
    %v2985 = vmul.f32 %v2984, 0.6931472
    %v2986 = vlog2.pop %v1290
    %v2987 = vmul.f32 %v2986, 0.6931472
    %v2988 = vlog2.pop %v1292
    %v2989 = vmul.f32 %v2988, 0.6931472
    %v2990 = vlog2.pop %v1294
    %v2991 = vmul.f32 %v2990, 0.6931472
    %v2992 = vlog2.pop %v1296
    %v2993 = vmul.f32 %v2992, 0.6931472
    %v2994 = vlog2.pop %v1298
    %v2995 = vmul.f32 %v2994, 0.6931472
    %v2996 = vlog2.pop %v1300
    %v2997 = vmul.f32 %v2996, 0.6931472
    %v2998 = vlog2.pop %v1302
    %v2999 = vmul.f32 %v2998, 0.6931472
    %v3000 = vlog2.pop %v1304
    %v3001 = vmul.f32 %v3000, 0.6931472
    %v3002 = vlog2.pop %v1306
    %v3003 = vmul.f32 %v3002, 0.6931472
    %v3004 = vlog2.pop %v1308
    %v3005 = vmul.f32 %v3004, 0.6931472
    %v3006 = vlog2.pop %v1310
    %v3007 = vmul.f32 %v3006, 0.6931472
    %v3008 = vlog2.pop %v1312
    %v3009 = vmul.f32 %v3008, 0.6931472
    %v3010 = vlog2.pop %v1314
    %v3011 = vmul.f32 %v3010, 0.6931472
    %v3012 = vlog2.pop %v1316
    %v3013 = vmul.f32 %v3012, 0.6931472
    %v3014 = vlog2.pop %v1318
    %v3015 = vmul.f32 %v3014, 0.6931472
    %v3016 = vlog2.pop %v1320
    %v3017 = vmul.f32 %v3016, 0.6931472
    %v3018 = vlog2.pop %v1322
    %v3019 = vmul.f32 %v3018, 0.6931472
    %v3020 = vlog2.pop %v1324
    %v3021 = vmul.f32 %v3020, 0.6931472
    %v3022 = vlog2.pop %v1326
    %v3023 = vmul.f32 %v3022, 0.6931472
    %v3024 = vlog2.pop %v1328
    %v3025 = vmul.f32 %v3024, 0.6931472
    %v3026 = vlog2.pop %v1330
    %v3027 = vmul.f32 %v3026, 0.6931472
    %v3028 = vlog2.pop %v1332
    %v3029 = vmul.f32 %v3028, 0.6931472
    %v3030 = vlog2.pop %v1334
    %v3031 = vmul.f32 %v3030, 0.6931472
    %v3032 = vlog2.pop %v1336
    %v3033 = vmul.f32 %v3032, 0.6931472
    %v3034 = vlog2.pop %v1338
    %v3035 = vmul.f32 %v3034, 0.6931472
    %v3036 = vsub.f32 0.0, %v2941
    %v3037 = vsub.f32 0.0, %v2943
    %v3038 = vsub.f32 0.0, %v2945
    %v3039 = vsub.f32 0.0, %v2947
    %v3040 = vsub.f32 0.0, %v2949
    %v3041 = vsub.f32 0.0, %v2951
    %v3042 = vsub.f32 0.0, %v2953
    %v3043 = vsub.f32 0.0, %v2955
    %v3044 = vsub.f32 0.0, %v2957
    %v3045 = vsub.f32 0.0, %v2959
    %v3046 = vsub.f32 0.0, %v2961
    %v3047 = vsub.f32 0.0, %v2963
    %v3048 = vsub.f32 0.0, %v2965
    %v3049 = vsub.f32 0.0, %v2967
    %v3050 = vsub.f32 0.0, %v2969
    %v3051 = vsub.f32 0.0, %v2971
    %v3052 = vsub.f32 0.0, %v2973
    %v3053 = vsub.f32 0.0, %v2975
    %v3054 = vsub.f32 0.0, %v2977
    %v3055 = vsub.f32 0.0, %v2979
    %v3056 = vsub.f32 0.0, %v2981
    %v3057 = vsub.f32 0.0, %v2983
    %v3058 = vsub.f32 0.0, %v2985
    %v3059 = vsub.f32 0.0, %v2987
    %v3060 = vsub.f32 0.0, %v2989
    %v3061 = vsub.f32 0.0, %v2991
    %v3062 = vsub.f32 0.0, %v2993
    %v3063 = vsub.f32 0.0, %v2995
    %v3064 = vsub.f32 0.0, %v2997
    %v3065 = vsub.f32 0.0, %v2999
    %v3066 = vsub.f32 0.0, %v3001
    %v3067 = vsub.f32 0.0, %v3003
    %v3068 = vsub.f32 0.0, %v3005
    %v3069 = vsub.f32 0.0, %v3007
    %v3070 = vsub.f32 0.0, %v3009
    %v3071 = vsub.f32 0.0, %v3011
    %v3072 = vsub.f32 0.0, %v3013
    %v3073 = vsub.f32 0.0, %v3015
    %v3074 = vsub.f32 0.0, %v3017
    %v3075 = vsub.f32 0.0, %v3019
    %v3076 = vsub.f32 0.0, %v3021
    %v3077 = vsub.f32 0.0, %v3023
    %v3078 = vsub.f32 0.0, %v3025
    %v3079 = vsub.f32 0.0, %v3027
    %v3080 = vsub.f32 0.0, %v3029
    %v3081 = vsub.f32 0.0, %v3031
    %v3082 = vsub.f32 0.0, %v3033
    %v3083 = vsub.f32 0.0, %v3035
    %v3132 = vlaneseq
    %v3133 = vshrl.u32 %v3132, 7
    %v3134 = vsub.s32 %v74, %v3133
    %v3135 = vrot.slane %v3036, %v3134
    %v3136 = vlaneseq
    %v3137 = vshrl.u32 %v3136, 7
    %v3138 = vsub.s32 %v2111, %v3137
    %v3139 = vrot.slane %v3037, %v3138
    %v3140 = vsel %vm2116, %v3139, %v3135
    %v3141 = vlaneseq
    %v3142 = vshrl.u32 %v3141, 7
    %v3143 = vsub.s32 %v2118, %v3142
    %v3144 = vrot.slane %v3038, %v3143
    %v3145 = vsel %vm2123, %v3144, %v3140
    %v3146 = vlaneseq
    %v3147 = vshrl.u32 %v3146, 7
    %v3148 = vsub.s32 %v2125, %v3147
    %v3149 = vrot.slane %v3039, %v3148
    %v3150 = vsel %vm2130, %v3149, %v3145
    %v3151 = vlaneseq
    %v3152 = vshrl.u32 %v3151, 7
    %v3153 = vsub.s32 %v2132, %v3152
    %v3154 = vrot.slane %v3040, %v3153
    %v3155 = vsel %vm2137, %v3154, %v3150
    %v3156 = vlaneseq
    %v3157 = vshrl.u32 %v3156, 7
    %v3158 = vsub.s32 %v2139, %v3157
    %v3159 = vrot.slane %v3041, %v3158
    %v3160 = vsel %vm2144, %v3159, %v3155
    %v3161 = vlaneseq
    %v3162 = vshrl.u32 %v3161, 7
    %v3163 = vsub.s32 %v2146, %v3162
    %v3164 = vrot.slane %v3042, %v3163
    %v3165 = vsel %vm2151, %v3164, %v3160
    %v3166 = vlaneseq
    %v3167 = vshrl.u32 %v3166, 7
    %v3168 = vsub.s32 %v2153, %v3167
    %v3169 = vrot.slane %v3043, %v3168
    %v3170 = vsel %vm2158, %v3169, %v3165
    %v3171 = vlaneseq
    %v3172 = vshrl.u32 %v3171, 7
    %v3173 = vsub.s32 %v2160, %v3172
    %v3174 = vrot.slane %v3044, %v3173
    %v3175 = vsel %vm2165, %v3174, %v3170
    %v3176 = vlaneseq
    %v3177 = vshrl.u32 %v3176, 7
    %v3178 = vsub.s32 %v2167, %v3177
    %v3179 = vrot.slane %v3045, %v3178
    %v3180 = vsel %vm2172, %v3179, %v3175
    %v3181 = vlaneseq
    %v3182 = vshrl.u32 %v3181, 7
    %v3183 = vsub.s32 %v2174, %v3182
    %v3184 = vrot.slane %v3046, %v3183
    %v3185 = vsel %vm2179, %v3184, %v3180
    %v3186 = vlaneseq
    %v3187 = vshrl.u32 %v3186, 7
    %v3188 = vsub.s32 %v2181, %v3187
    %v3189 = vrot.slane %v3047, %v3188
    %v3190 = vsel %vm2186, %v3189, %v3185
    %v3191 = vlaneseq
    %v3192 = vshrl.u32 %v3191, 7
    %v3193 = vsub.s32 %v2188, %v3192
    %v3194 = vrot.slane %v3048, %v3193
    %v3195 = vsel %vm2193, %v3194, %v3190
    %v3196 = vlaneseq
    %v3197 = vshrl.u32 %v3196, 7
    %v3198 = vsub.s32 %v2195, %v3197
    %v3199 = vrot.slane %v3049, %v3198
    %v3200 = vsel %vm2200, %v3199, %v3195
    %v3201 = vlaneseq
    %v3202 = vshrl.u32 %v3201, 7
    %v3203 = vsub.s32 %v2202, %v3202
    %v3204 = vrot.slane %v3050, %v3203
    %v3205 = vsel %vm2207, %v3204, %v3200
    %v3206 = vlaneseq
    %v3207 = vshrl.u32 %v3206, 7
    %v3208 = vsub.s32 %v2209, %v3207
    %v3209 = vrot.slane %v3051, %v3208
    %v3210 = vsel %vm2214, %v3209, %v3205
    %v3211 = vlaneseq
    %v3212 = vshrl.u32 %v3211, 7
    %v3213 = vsub.s32 %v74, %v3212
    %v3214 = vrot.slane %v3052, %v3213
    %v3215 = vlaneseq
    %v3216 = vshrl.u32 %v3215, 7
    %v3217 = vsub.s32 %v2111, %v3216
    %v3218 = vrot.slane %v3053, %v3217
    %v3219 = vsel %vm2116, %v3218, %v3214
    %v3220 = vlaneseq
    %v3221 = vshrl.u32 %v3220, 7
    %v3222 = vsub.s32 %v2118, %v3221
    %v3223 = vrot.slane %v3054, %v3222
    %v3224 = vsel %vm2123, %v3223, %v3219
    %v3225 = vlaneseq
    %v3226 = vshrl.u32 %v3225, 7
    %v3227 = vsub.s32 %v2125, %v3226
    %v3228 = vrot.slane %v3055, %v3227
    %v3229 = vsel %vm2130, %v3228, %v3224
    %v3230 = vlaneseq
    %v3231 = vshrl.u32 %v3230, 7
    %v3232 = vsub.s32 %v2132, %v3231
    %v3233 = vrot.slane %v3056, %v3232
    %v3234 = vsel %vm2137, %v3233, %v3229
    %v3235 = vlaneseq
    %v3236 = vshrl.u32 %v3235, 7
    %v3237 = vsub.s32 %v2139, %v3236
    %v3238 = vrot.slane %v3057, %v3237
    %v3239 = vsel %vm2144, %v3238, %v3234
    %v3240 = vlaneseq
    %v3241 = vshrl.u32 %v3240, 7
    %v3242 = vsub.s32 %v2146, %v3241
    %v3243 = vrot.slane %v3058, %v3242
    %v3244 = vsel %vm2151, %v3243, %v3239
    %v3245 = vlaneseq
    %v3246 = vshrl.u32 %v3245, 7
    %v3247 = vsub.s32 %v2153, %v3246
    %v3248 = vrot.slane %v3059, %v3247
    %v3249 = vsel %vm2158, %v3248, %v3244
    %v3250 = vlaneseq
    %v3251 = vshrl.u32 %v3250, 7
    %v3252 = vsub.s32 %v2160, %v3251
    %v3253 = vrot.slane %v3060, %v3252
    %v3254 = vsel %vm2165, %v3253, %v3249
    %v3255 = vlaneseq
    %v3256 = vshrl.u32 %v3255, 7
    %v3257 = vsub.s32 %v2167, %v3256
    %v3258 = vrot.slane %v3061, %v3257
    %v3259 = vsel %vm2172, %v3258, %v3254
    %v3260 = vlaneseq
    %v3261 = vshrl.u32 %v3260, 7
    %v3262 = vsub.s32 %v2174, %v3261
    %v3263 = vrot.slane %v3062, %v3262
    %v3264 = vsel %vm2179, %v3263, %v3259
    %v3265 = vlaneseq
    %v3266 = vshrl.u32 %v3265, 7
    %v3267 = vsub.s32 %v2181, %v3266
    %v3268 = vrot.slane %v3063, %v3267
    %v3269 = vsel %vm2186, %v3268, %v3264
    %v3270 = vlaneseq
    %v3271 = vshrl.u32 %v3270, 7
    %v3272 = vsub.s32 %v2188, %v3271
    %v3273 = vrot.slane %v3064, %v3272
    %v3274 = vsel %vm2193, %v3273, %v3269
    %v3275 = vlaneseq
    %v3276 = vshrl.u32 %v3275, 7
    %v3277 = vsub.s32 %v2195, %v3276
    %v3278 = vrot.slane %v3065, %v3277
    %v3279 = vsel %vm2200, %v3278, %v3274
    %v3280 = vlaneseq
    %v3281 = vshrl.u32 %v3280, 7
    %v3282 = vsub.s32 %v2202, %v3281
    %v3283 = vrot.slane %v3066, %v3282
    %v3284 = vsel %vm2207, %v3283, %v3279
    %v3285 = vlaneseq
    %v3286 = vshrl.u32 %v3285, 7
    %v3287 = vsub.s32 %v2209, %v3286
    %v3288 = vrot.slane %v3067, %v3287
    %v3289 = vsel %vm2214, %v3288, %v3284
    %v3290 = vlaneseq
    %v3291 = vshrl.u32 %v3290, 7
    %v3292 = vsub.s32 %v74, %v3291
    %v3293 = vrot.slane %v3068, %v3292
    %v3294 = vlaneseq
    %v3295 = vshrl.u32 %v3294, 7
    %v3296 = vsub.s32 %v2111, %v3295
    %v3297 = vrot.slane %v3069, %v3296
    %v3298 = vsel %vm2116, %v3297, %v3293
    %v3299 = vlaneseq
    %v3300 = vshrl.u32 %v3299, 7
    %v3301 = vsub.s32 %v2118, %v3300
    %v3302 = vrot.slane %v3070, %v3301
    %v3303 = vsel %vm2123, %v3302, %v3298
    %v3304 = vlaneseq
    %v3305 = vshrl.u32 %v3304, 7
    %v3306 = vsub.s32 %v2125, %v3305
    %v3307 = vrot.slane %v3071, %v3306
    %v3308 = vsel %vm2130, %v3307, %v3303
    %v3309 = vlaneseq
    %v3310 = vshrl.u32 %v3309, 7
    %v3311 = vsub.s32 %v2132, %v3310
    %v3312 = vrot.slane %v3072, %v3311
    %v3313 = vsel %vm2137, %v3312, %v3308
    %v3314 = vlaneseq
    %v3315 = vshrl.u32 %v3314, 7
    %v3316 = vsub.s32 %v2139, %v3315
    %v3317 = vrot.slane %v3073, %v3316
    %v3318 = vsel %vm2144, %v3317, %v3313
    %v3319 = vlaneseq
    %v3320 = vshrl.u32 %v3319, 7
    %v3321 = vsub.s32 %v2146, %v3320
    %v3322 = vrot.slane %v3074, %v3321
    %v3323 = vsel %vm2151, %v3322, %v3318
    %v3324 = vlaneseq
    %v3325 = vshrl.u32 %v3324, 7
    %v3326 = vsub.s32 %v2153, %v3325
    %v3327 = vrot.slane %v3075, %v3326
    %v3328 = vsel %vm2158, %v3327, %v3323
    %v3329 = vlaneseq
    %v3330 = vshrl.u32 %v3329, 7
    %v3331 = vsub.s32 %v2160, %v3330
    %v3332 = vrot.slane %v3076, %v3331
    %v3333 = vsel %vm2165, %v3332, %v3328
    %v3334 = vlaneseq
    %v3335 = vshrl.u32 %v3334, 7
    %v3336 = vsub.s32 %v2167, %v3335
    %v3337 = vrot.slane %v3077, %v3336
    %v3338 = vsel %vm2172, %v3337, %v3333
    %v3339 = vlaneseq
    %v3340 = vshrl.u32 %v3339, 7
    %v3341 = vsub.s32 %v2174, %v3340
    %v3342 = vrot.slane %v3078, %v3341
    %v3343 = vsel %vm2179, %v3342, %v3338
    %v3344 = vlaneseq
    %v3345 = vshrl.u32 %v3344, 7
    %v3346 = vsub.s32 %v2181, %v3345
    %v3347 = vrot.slane %v3079, %v3346
    %v3348 = vsel %vm2186, %v3347, %v3343
    %v3349 = vlaneseq
    %v3350 = vshrl.u32 %v3349, 7
    %v3351 = vsub.s32 %v2188, %v3350
    %v3352 = vrot.slane %v3080, %v3351
    %v3353 = vsel %vm2193, %v3352, %v3348
    %v3354 = vlaneseq
    %v3355 = vshrl.u32 %v3354, 7
    %v3356 = vsub.s32 %v2195, %v3355
    %v3357 = vrot.slane %v3081, %v3356
    %v3358 = vsel %vm2200, %v3357, %v3353
    %v3359 = vlaneseq
    %v3360 = vshrl.u32 %v3359, 7
    %v3361 = vsub.s32 %v2202, %v3360
    %v3362 = vrot.slane %v3082, %v3361
    %v3363 = vsel %vm2207, %v3362, %v3358
    %v3364 = vlaneseq
    %v3365 = vshrl.u32 %v3364, 7
    %v3366 = vsub.s32 %v2209, %v3365
    %v3367 = vrot.slane %v3083, %v3366
    %v3368 = vsel %vm2214, %v3367, %v3363
    %v3369 = vsel %vm2374, %v3289, %v3210
    %v3370 = vsel %vm2376, %v3368, %v3369
    %v3372 = vsel %vm2939, %v3370, 0.0
    %v3373 = vsel %vm2921, %v3372, 0.0
    %3374 = vadd.xlane.f32.xlu0 %v3373
    %v3375 = vpop.xlane.xlu0 %3374
    %v3376 = vmul.f32 %v3375, 1.442695
    %v3377 = vpow.pop %v3376
    %3378 = vst [vmem:[#allocation4] sm:$0x7] %v3377
    // Predicated region
    $region22: #{_device_forward.1} parent=1 // pred_check
      _
    $region23: #{_device_forward.1} parent=1 // pred_check_branch
      %3380 = sbr.rel (0) target = $region25
    $region24: #{_device_forward.1} parent=1 // pred_region
      %s3382 = ssub.s32 64, 64
      %3383 = vsyncadd [#allocation3], %s3382
      %s3385 = sshll.u32 [#allocation2], 4
      %s3386 = int_to_ptr.vmem [resolvable:$true] %s3385
      %3388 = dma.vmem_to_hbm [thread:$0]  %s3386, 64, %s5, [#allocation3]
    $region25: #{_device_forward.1} parent=1 // pred_fallthru
      _
    // Predicated region
    $region26: #{_device_forward.1} parent=1 // pred_check
      _
    $region27: #{_device_forward.1} parent=1 // pred_check_branch
      %3390 = sbr.rel (0) target = $region29
    $region28: #{_device_forward.1} parent=1 // pred_region
      %s3392 = ssub.s32 64, 64
      %3393 = vsyncadd [#allocation5], %s3392
      %s3395 = sshll.u32 [#allocation4], 4
      %s3396 = int_to_ptr.vmem [resolvable:$true] %s3395
      %3398 = dma.vmem_to_hbm [thread:$0]  %s3396, 64, %s6, [#allocation5]
    $region29: #{_device_forward.1} parent=1 // pred_fallthru
      _
    // Predicated region
    $region30: #{_device_forward.1} parent=1 // pred_check
      _
    $region31: #{_device_forward.1} parent=1 // pred_check_branch
      %3400 = sbr.rel (0) target = $region33
    $region32: #{_device_forward.1} parent=1 // pred_region
      %3401 = dma.done [#allocation3], 64
    $region33: #{_device_forward.1} parent=1 // pred_fallthru
      _
    // Predicated region
    $region34: #{_device_forward.1} parent=1 // pred_check
      _
    $region35: #{_device_forward.1} parent=1 // pred_check_branch
      %3403 = sbr.rel (0) target = $region37
    $region36: #{_device_forward.1} parent=1 // pred_region
      %3404 = dma.done [#allocation5], 64
    $region37: #{_device_forward.1} parent=1 // pred_fallthru
      _
    %3405 = vsyncpa [#allocation3], 1
    %3406 = vsyncpa [#allocation5], 1

</llo_original>
